<compile_context>
chip_gen: v7x
topology: tpu7x:2x2x1
jax: 0.10.0
libtpu: 0.0.40
codegen_flags: <defaults>
</compile_context>

<pallas_src>
import numpy as np
import jax
import jax.numpy as jnp
from jax.experimental import pallas as pl
from jax.experimental.pallas import tpu as pltpu


def _round_up(v, m):
    return (v + m - 1) // m * m


def _pick_batch_block(n, cap=8):
    nb = 1
    for d in range(1, min(n, cap) + 1):
        if n % d == 0:
            nb = d
    return nb


# ----------------------------------------------------------------------------------------------
# Stage 2: fused Conv1d(224->128,5,'same') + MaxPool1d(2,2) + ReLU + Conv1d(128->128,5,'same')
#          + ReLU, batched over samples by flattening (sample, position) into the matmul rows.
# ----------------------------------------------------------------------------------------------
def conv_stack_kernel(x_ref, w2a_ref, b2a_ref, w2b_ref, b2b_ref, o_ref, mid_ref):
    # x_ref  : (Nb*Wp, 224) f32  channel-last, per-sample zero padded (2 left, >=2 right)
    # w2a_ref: (5, 224, 128) bf16   b2a_ref: (1, 128) f32
    # w2b_ref: (5, 128, 128) bf16   b2b_ref: (1, 128) f32
    # o_ref  : (Nb, T, 128) f32
    # mid_ref: (Nb*T4, 128) f32 scratch -> pooled activations, zero padded per sample
    Nb, T, Cout = o_ref.shape
    Wp = x_ref.shape[0] // Nb
    T4 = mid_ref.shape[0] // Nb
    K = w2a_ref.shape[0]

    # conv2a: K shifted MXU matmuls over the flattened rows (M = Nb*Wp - K + 1, bf16 operands,
    # f32 accumulation).  Rows that straddle sample boundaries are computed but never used.
    M1 = Nb * Wp - (K - 1)
    acc = jnp.zeros((M1, Cout), jnp.float32) + b2a_ref[...]
    for k in range(K):
        acc = acc + jnp.dot(x_ref[k:k + M1, :].astype(jnp.bfloat16), w2a_ref[k],
                            preferred_element_type=jnp.float32)

    # MaxPool1d(2,2) + ReLU per sample, written into the zero-initialised conv2b input scratch
    # at per-sample offset n*T4 + 2 (left 'same' padding for k=5).
    mid_ref[...] = jnp.zeros_like(mid_ref)
    for n in range(Nb):
        seg = acc[n * Wp:n * Wp + 2 * T, :]                   # valid conv outputs of sample n
        pooled = jnp.max(seg.reshape(T, 2, Cout), axis=1)
        mid_ref[n * T4 + 2:n * T4 + 2 + T, :] = jnp.maximum(pooled, 0.0)

    # conv2b over the flattened pooled rows, then ReLU.
    M2 = Nb * T4 - (K - 1)
    acc2 = jnp.zeros((M2, Cout), jnp.float32) + b2b_ref[...]
    for k in range(K):
        acc2 = acc2 + jnp.dot(mid_ref[k:k + M2, :].astype(jnp.bfloat16), w2b_ref[k],
                              preferred_element_type=jnp.float32)
    acc2 = jnp.maximum(acc2, 0.0)
    for n in range(Nb):
        o_ref[n, :, :] = acc2[n * T4:n * T4 + T, :]


def conv_stack(xflat, n_batch, seq_len, w2a, b2a, w2b, b2b):
    rows, cin = xflat.shape
    wp = rows // n_batch
    t = seq_len
    t4 = _round_up(t + 4, 8)
    k = w2a.shape[0]
    cout = w2a.shape[2]
    nb = _pick_batch_block(n_batch)
    return pl.pallas_call(
        conv_stack_kernel,
        out_shape=jax.ShapeDtypeStruct((n_batch, t, cout), jnp.float32),
        grid=(n_batch // nb,),
        in_specs=[
            pl.BlockSpec((nb * wp, cin), lambda i: (i, 0)),
            pl.BlockSpec((k, cin, cout), lambda i: (0, 0, 0)),
            pl.BlockSpec((1, cout), lambda i: (0, 0)),
            pl.BlockSpec((k, cout, cout), lambda i: (0, 0, 0)),
            pl.BlockSpec((1, cout), lambda i: (0, 0)),
        ],
        out_specs=pl.BlockSpec((nb, t, cout), lambda i: (i, 0, 0)),
        scratch_shapes=[pltpu.VMEM((nb * t4, cout), jnp.float32)],
        compiler_params=pltpu.CompilerParams(dimension_semantics=("parallel",)),
    )(xflat, w2a, b2a, w2b, b2b)


# ----------------------------------------------------------------------------------------------
# Stage 3: batched bidirectional LSTM; only out[:, -1, :] is required.
# ----------------------------------------------------------------------------------------------
def bilstm_last_kernel(x_ref, wihf_ref, whhf_ref, bf_ref, wihb_ref, bb_ref, o_ref, gx_ref):
    # x_ref : (T*Np, 128) f32, time-major (row t*Np + n  ==  sample n at time t)
    # wih/whh: (128, 512) bf16, PyTorch gate order [i, f, g, o];   b*: (1, 512) f32
    # o_ref : (Np, 256) f32        gx_ref: (T*Np, 512) f32 scratch
    Np, twoH = o_ref.shape
    H = twoH // 2
    T = x_ref.shape[0] // Np

    # Hoisted input projection: one large MXU matmul covering every (t, n).
    gx_ref[...] = (jnp.dot(x_ref[...].astype(jnp.bfloat16), wihf_ref[...],
                           preferred_element_type=jnp.float32) + bf_ref[...])
    whh = whhf_ref[...]

    def step(t, carry):
        h, c = carry
        row = pl.multiple_of(t * Np, 8)
        g = gx_ref[pl.ds(row, Np), :] + jnp.dot(h.astype(jnp.bfloat16), whh,
                                                preferred_element_type=jnp.float32)
        i = jax.nn.sigmoid(g[:, 0:H])
        f = jax.nn.sigmoid(g[:, H:2 * H])
        gg = jnp.tanh(g[:, 2 * H:3 * H])
        o = jax.nn.sigmoid(g[:, 3 * H:4 * H])
        c_new = f * c + i * gg
        h_new = o * jnp.tanh(c_new)
        return h_new, c_new

    zero = jnp.zeros((Np, H), jnp.float32)
    h_fwd, _ = jax.lax.fori_loop(0, T, step, (zero, zero))

    # out[:, -1, H:] is the reverse direction's hidden state after its FIRST step (it reads the
    # sequence back-to-front from a zero state), so one cell on x[T-1] reproduces it; f*c == 0
    # and h @ W_hh_b == 0, so W_hh_b is not needed at all.
    gb = (jnp.dot(x_ref[(T - 1) * Np:T * Np, :].astype(jnp.bfloat16), wihb_ref[...],
                  preferred_element_type=jnp.float32) + bb_ref[...])
    ib = jax.nn.sigmoid(gb[:, 0:H])
    ggb = jnp.tanh(gb[:, 2 * H:3 * H])
    ob = jax.nn.sigmoid(gb[:, 3 * H:4 * H])
    h_bwd = ob * jnp.tanh(ib * ggb)

    o_ref[:, 0:H] = h_fwd
    o_ref[:, H:2 * H] = h_bwd


def bilstm_last(x_tm, n_pad, seq_len, wihf, whhf, bf, wihb, bb):
    H = wihf.shape[0]
    return pl.pallas_call(
        bilstm_last_kernel,
        out_shape=jax.ShapeDtypeStruct((n_pad, 2 * H), jnp.float32),
        grid=(1,),
        in_specs=[
            pl.BlockSpec((seq_len * n_pad, H), lambda i: (0, 0)),
            pl.BlockSpec((H, 4 * H), lambda i: (0, 0)),
            pl.BlockSpec((H, 4 * H), lambda i: (0, 0)),
            pl.BlockSpec((1, 4 * H), lambda i: (0, 0)),
            pl.BlockSpec((H, 4 * H), lambda i: (0, 0)),
            pl.BlockSpec((1, 4 * H), lambda i: (0, 0)),
        ],
        out_specs=pl.BlockSpec((n_pad, 2 * H), lambda i: (0, 0)),
        scratch_shapes=[pltpu.VMEM((seq_len * n_pad, 4 * H), jnp.float32)],
        compiler_params=pltpu.CompilerParams(dimension_semantics=("arbitrary",)),
    )(x_tm, wihf, whhf, bf, wihb, bb)


# ------------------------------------------ Forward ------------------------------------------
def conv1dlstm_forward(x, p):
    # x: (N, 3, 224, W) NCHW float32
    N, C, Hc, W = x.shape
    T = W // 2                      # MaxPool1d(2,2) floors, matching PyTorch for odd W too.

    # ---- Stage 1 (XLA glue): Conv2d(3,1,1)+ReLU, squeeze(1), channel-last, per-sample pad ----
    # TODO(synk): fold this into the conv-stack kernel's input read to remove this HBM pre-pass.
    w1 = p["conv1_w"][:, 0, 0]
    y = jnp.maximum(jnp.einsum("nchw,c->nwh", x, w1) + p["conv1_b"][0, 0], 0.0)   # (N, W, 224)
    Wp = _round_up(W + 4, 8)        # 2 left zeros + >=2 right zeros, rounded for tile alignment
    xflat = jnp.pad(y, ((0, 0), (2, Wp - W - 2), (0, 0))).reshape(N * Wp, Hc)

    bf16 = jnp.bfloat16
    # ---- Stage 2 (Pallas): conv1d + maxpool + relu + conv1d + relu, batched over samples ----
    h2 = conv_stack(xflat, N, T, p["conv2a_w"].astype(bf16), p["conv2a_b"],
                    p["conv2b_w"].astype(bf16), p["conv2b_b"])                    # (N, T, 128)

    # ---- Stage 3 (Pallas): batch-wide bidirectional LSTM, only out[:, -1, :] ----
    Np = _round_up(N, 8)            # pad batch so every time-slice is sublane aligned
    x_tm = jnp.transpose(h2, (1, 0, 2))                                           # (T, N, 128)
    x_tm = jnp.pad(x_tm, ((0, 0), (0, Np - N), (0, 0))).reshape(T * Np, 128)
    out = bilstm_last(x_tm, Np, T, p["w_ih_f"].astype(bf16), p["w_hh_f"].astype(bf16),
                      p["b_f"], p["w_ih_b"].astype(bf16), p["b_b"])
    return out[:N]                                                                 # (N, 256)


# ---------------------- Deterministic synthetic parameters (no checkpoint) ----------------------
# Mapping to PyTorch parameters:
#   conv1_w[c,0,0]    = conv1[0].weight[0,c,0,0]      conv1_b[0,0] = conv1[0].bias[0]
#   conv2a_w[k,ci,co] = conv2[0].weight[co,ci,k]      conv2a_b     = conv2[0].bias
#   conv2b_w[k,ci,co] = conv2[3].weight[co,ci,k]      conv2b_b     = conv2[3].bias
#   w_ih_f = weight_ih_l0.T   w_hh_f = weight_hh_l0.T   b_f = bias_ih_l0 + bias_hh_l0
#   w_ih_b / w_hh_b / b_b : same for the reverse direction (w_hh_b unused for out[:, -1, :]).
def init_params(key):
    ks = jax.random.split(key, 12)

    def nrm(k, shape, scale):
        return (jax.random.normal(k, shape, jnp.float32) * scale).astype(jnp.float32)

    H = 128
    return {
        "conv1_w": nrm(ks[0], (3, 1, 1), 0.5),
        "conv1_b": nrm(ks[1], (1, 1), 0.1),
        "conv2a_w": nrm(ks[2], (5, 224, 128), 1.0 / np.sqrt(224 * 5)),
        "conv2a_b": nrm(ks[3], (1, 128), 0.1),
        "conv2b_w": nrm(ks[4], (5, 128, 128), 1.0 / np.sqrt(128 * 5)),
        "conv2b_b": nrm(ks[5], (1, 128), 0.1),
        "w_ih_f": nrm(ks[6], (H, 4 * H), 1.0 / np.sqrt(H)),
        "w_hh_f": nrm(ks[7], (H, 4 * H), 1.0 / np.sqrt(H)),
        "b_f": nrm(ks[8], (1, 4 * H), 0.1),
        "w_ih_b": nrm(ks[9], (H, 4 * H), 1.0 / np.sqrt(H)),
        "w_hh_b": nrm(ks[10], (H, 4 * H), 1.0 / np.sqrt(H)),
        "b_b": nrm(ks[11], (1, 4 * H), 0.1),
    }


# ---------------------------- Pure-JAX reference (semantics check) ----------------------------
# Mirrors the kernels' numerics: bf16 matmul operands, f32 accumulation / elementwise math.
def reference_forward(x, p):
    f32, bf16 = jnp.float32, jnp.bfloat16
    w1 = p["conv1_w"][:, 0, 0]
    y = jnp.maximum(jnp.einsum("nchw,c->nhw", x, w1) + p["conv1_b"][0, 0], 0.0)
    xc = jnp.transpose(y, (0, 2, 1))  # (N, W, 224)

    def conv1d_same(xin, w, b):
        K, _, Cout = w.shape
        L = xin.shape[1]
        xp = jnp.pad(xin, ((0, 0), (2, 2), (0, 0)))
        out = jnp.zeros((xin.shape[0], L, Cout), f32) + b[None]
        for k in range(K):
            out = out + jnp.einsum("nlc,cd->nld",
                                   xp[:, k:k + L, :].astype(bf16), w[k].astype(bf16),
                                   preferred_element_type=f32)
        return out

    h1 = conv1d_same(xc, p["conv2a_w"], p["conv2a_b"])
    N, L, Cout = h1.shape
    T = L // 2
    h1 = jnp.maximum(jnp.max(h1[:, :2 * T].reshape(N, T, 2, Cout), axis=2), 0.0)
    h2 = jnp.maximum(conv1d_same(h1, p["conv2b_w"], p["conv2b_b"]), 0.0)

    H = 128
    wihf, whhf = p["w_ih_f"].astype(bf16), p["w_hh_f"].astype(bf16)
    wihb, whhb = p["w_ih_b"].astype(bf16), p["w_hh_b"].astype(bf16)

    def cell(x_t, h, c, wih, whh, b):
        g = (jnp.dot(x_t.astype(bf16), wih, preferred_element_type=f32)
             + jnp.dot(h.astype(bf16), whh, preferred_element_type=f32) + b)
        i = jax.nn.sigmoid(g[:, :H])
        f = jax.nn.sigmoid(g[:, H:2 * H])
        gg = jnp.tanh(g[:, 2 * H:3 * H])
        o = jax.nn.sigmoid(g[:, 3 * H:])
        c = f * c + i * gg
        return o * jnp.tanh(c), c

    Tn = h2.shape[1]
    h = jnp.zeros((N, H), f32)
    c = jnp.zeros((N, H), f32)
    for t in range(Tn):
        h, c = cell(h2[:, t, :], h, c, wihf, whhf, p["b_f"])
    hb, _ = cell(h2[:, Tn - 1, :], jnp.zeros((N, H), f32), jnp.zeros((N, H), f32),
                 wihb, whhb, p["b_b"])
    return jnp.concatenate([h, hb], axis=1)


if __name__ == "__main__":
    key = jax.random.PRNGKey(0)
    kx, kp = jax.random.split(key)

    # H=224 is fixed by Conv1d(224, ...); W=16 keeps the sequence small (seq = 8).
    N, C, Hc, W = 2, 3, 224, 16
    x = jax.random.normal(kx, (N, C, Hc, W), jnp.float32)
    params = init_params(kp)

    out = jax.jit(conv1dlstm_forward)(x, params)
    out = jax.block_until_ready(out)
    assert out.shape == (N, 256), out.shape

    ref = jax.block_until_ready(reference_forward(x, params))
    if not np.allclose(np.asarray(out), np.asarray(ref), rtol=2e-2, atol=2e-2):
        err = np.max(np.abs(np.asarray(out) - np.asarray(ref)))
        raise AssertionError(f"Pallas output does not match JAX reference (max abs err {err})")

    print("KERNEL_OK")
</pallas_src>

<mosaic_0001>
module attributes {stable_mosaic.version = 11 : i64} {
  func.func @bilstm_last_kernel(%arg0: i32, %arg1: memref<64x128xf32, #tpu.memory_space<vmem>>, %arg2: memref<128x512xbf16, #tpu.memory_space<vmem>>, %arg3: memref<128x512xbf16, #tpu.memory_space<vmem>>, %arg4: memref<1x512xf32, #tpu.memory_space<vmem>>, %arg5: memref<128x512xbf16, #tpu.memory_space<vmem>>, %arg6: memref<1x512xf32, #tpu.memory_space<vmem>>, %arg7: memref<8x256xf32, #tpu.memory_space<vmem>>, %arg8: memref<64x512xf32, #tpu.memory_space<vmem>>) attributes {dimension_semantics = [#tpu.dimension_semantics<arbitrary>], iteration_bounds = array<i64: 1>, scalar_prefetch = 0 : i64, scratch_operands = 1 : i64, tpu.core_type = #tpu.core_type<tc>, window_params = [{pipeline_mode = #tpu.pipeline_mode<synchronous>, transform_indices = @transform_0, window_bounds = array<i64: 64, 128>}, {pipeline_mode = #tpu.pipeline_mode<synchronous>, transform_indices = @transform_1, window_bounds = array<i64: 128, 512>}, {pipeline_mode = #tpu.pipeline_mode<synchronous>, transform_indices = @transform_2, window_bounds = array<i64: 128, 512>}, {pipeline_mode = #tpu.pipeline_mode<synchronous>, transform_indices = @transform_3, window_bounds = array<i64: 1, 512>}, {pipeline_mode = #tpu.pipeline_mode<synchronous>, transform_indices = @transform_4, window_bounds = array<i64: 128, 512>}, {pipeline_mode = #tpu.pipeline_mode<synchronous>, transform_indices = @transform_5, window_bounds = array<i64: 1, 512>}, {pipeline_mode = #tpu.pipeline_mode<synchronous>, transform_indices = @transform_6, window_bounds = array<i64: 8, 256>}]} {
    %c0 = arith.constant 0 : index
    %c0_0 = arith.constant 0 : index
    %0 = vector.load %arg1[%c0, %c0_0] : memref<64x128xf32, #tpu.memory_space<vmem>>, vector<64x128xf32>
    %1 = arith.truncf %0 : vector<64x128xf32> to vector<64x128xbf16>
    %c0_1 = arith.constant 0 : index
    %c0_2 = arith.constant 0 : index
    %2 = vector.load %arg2[%c0_1, %c0_2] : memref<128x512xbf16, #tpu.memory_space<vmem>>, vector<128x512xbf16>
    %cst = arith.constant dense<0.000000e+00> : vector<64x512xf32>
    %3 = tpu.matmul %1, %2, %cst {dimension_numbers = #tpu.dot_dimension_numbers<[1], [0], [0], [1], [0, 0, 1, 1], [], []>} : vector<64x128xbf16>, vector<128x512xbf16>, vector<64x512xf32> -> vector<64x512xf32>
    %c0_3 = arith.constant 0 : index
    %c0_4 = arith.constant 0 : index
    %4 = vector.load %arg4[%c0_3, %c0_4] : memref<1x512xf32, #tpu.memory_space<vmem>>, vector<1x512xf32>
    %5 = vector.broadcast %4 : vector<1x512xf32> to vector<64x512xf32>
    %6 = arith.addf %3, %5 : vector<64x512xf32>
    %c0_5 = arith.constant 0 : index
    %c0_6 = arith.constant 0 : index
    %7 = vector.load %arg8[%c0_5, %c0_6] : memref<64x512xf32, #tpu.memory_space<vmem>>, vector<64x512xf32>
    tpu.vector_store %arg8[%c0_5, %c0_6], %6 {strides = array<i32>} : memref<64x512xf32, #tpu.memory_space<vmem>>, vector<64x512xf32>,
    %c0_7 = arith.constant 0 : index
    %c0_8 = arith.constant 0 : index
    %8 = vector.load %arg3[%c0_7, %c0_8] : memref<128x512xbf16, #tpu.memory_space<vmem>>, vector<128x512xbf16>
    %cst_9 = arith.constant 0.000000e+00 : f32
    %9 = vector.broadcast %cst_9 : f32 to vector<8x128xf32>
    %c0_i32 = arith.constant 0 : i32
    %c8_i32 = arith.constant 8 : i32
    %10 = arith.addi %c0_i32, %c8_i32 : i32
    %c1_i32 = arith.constant 1 : i32
    %11:2 = scf.for %arg9 = %c0_i32 to %10 step %c1_i32 iter_args(%arg10 = %9, %arg11 = %9) -> (vector<8x128xf32>, vector<8x128xf32>)  : i32 {
      %c8_i32_22 = arith.constant 8 : i32
      %38 = arith.muli %arg9, %c8_i32_22 : i32
      %39 = tpu.assume_multiple %38, 8 : i32
      %40 = arith.index_cast %39 : i32 to index
      %c0_23 = arith.constant 0 : index
      %41 = vector.load %arg8[%40, %c0_23] : memref<64x512xf32, #tpu.memory_space<vmem>>, vector<8x512xf32>
      %42 = arith.truncf %arg10 : vector<8x128xf32> to vector<8x128xbf16>
      %cst_24 = arith.constant dense<0.000000e+00> : vector<8x512xf32>
      %43 = tpu.matmul %42, %8, %cst_24 {dimension_numbers = #tpu.dot_dimension_numbers<[1], [0], [0], [1], [0, 0, 1, 1], [], []>} : vector<8x128xbf16>, vector<128x512xbf16>, vector<8x512xf32> -> vector<8x512xf32>
      %44 = arith.addf %41, %43 : vector<8x512xf32>
      %45 = vector.extract_strided_slice %44 {offsets = [0, 0], sizes = [8, 128], strides = [1, 1]} : vector<8x512xf32> to vector<8x128xf32>
      %46 = arith.negf %45 : vector<8x128xf32>
      %47 = math.exp %46 : vector<8x128xf32>
      %cst_25 = arith.constant 1.000000e+00 : f32
      %48 = vector.broadcast %cst_25 : f32 to vector<8x128xf32>
      %49 = arith.addf %48, %47 : vector<8x128xf32>
      %50 = arith.divf %48, %49 : vector<8x128xf32>
      %51 = vector.extract_strided_slice %44 {offsets = [0, 128], sizes = [8, 128], strides = [1, 1]} : vector<8x512xf32> to vector<8x128xf32>
      %52 = arith.negf %51 : vector<8x128xf32>
      %53 = math.exp %52 : vector<8x128xf32>
      %cst_26 = arith.constant 1.000000e+00 : f32
      %54 = vector.broadcast %cst_26 : f32 to vector<8x128xf32>
      %55 = arith.addf %54, %53 : vector<8x128xf32>
      %56 = arith.divf %54, %55 : vector<8x128xf32>
      %57 = vector.extract_strided_slice %44 {offsets = [0, 256], sizes = [8, 128], strides = [1, 1]} : vector<8x512xf32> to vector<8x128xf32>
      %58 = math.tanh %57 : vector<8x128xf32>
      %59 = vector.extract_strided_slice %44 {offsets = [0, 384], sizes = [8, 128], strides = [1, 1]} : vector<8x512xf32> to vector<8x128xf32>
      %60 = arith.negf %59 : vector<8x128xf32>
      %61 = math.exp %60 : vector<8x128xf32>
      %cst_27 = arith.constant 1.000000e+00 : f32
      %62 = vector.broadcast %cst_27 : f32 to vector<8x128xf32>
      %63 = arith.addf %62, %61 : vector<8x128xf32>
      %64 = arith.divf %62, %63 : vector<8x128xf32>
      %65 = arith.mulf %56, %arg11 : vector<8x128xf32>
      %66 = arith.mulf %50, %58 : vector<8x128xf32>
      %67 = arith.addf %65, %66 : vector<8x128xf32>
      %68 = math.tanh %67 : vector<8x128xf32>
      %69 = arith.mulf %64, %68 : vector<8x128xf32>
      scf.yield %69, %67 : vector<8x128xf32>, vector<8x128xf32>
    }
    %c8_i32_10 = arith.constant 8 : i32
    %c56 = arith.constant 56 : index
    %c0_11 = arith.constant 0 : index
    %12 = vector.load %arg1[%c56, %c0_11] : memref<64x128xf32, #tpu.memory_space<vmem>>, vector<8x128xf32>
    %13 = arith.truncf %12 : vector<8x128xf32> to vector<8x128xbf16>
    %c0_12 = arith.constant 0 : index
    %c0_13 = arith.constant 0 : index
    %14 = vector.load %arg5[%c0_12, %c0_13] : memref<128x512xbf16, #tpu.memory_space<vmem>>, vector<128x512xbf16>
    %cst_14 = arith.constant dense<0.000000e+00> : vector<8x512xf32>
    %15 = tpu.matmul %13, %14, %cst_14 {dimension_numbers = #tpu.dot_dimension_numbers<[1], [0], [0], [1], [0, 0, 1, 1], [], []>} : vector<8x128xbf16>, vector<128x512xbf16>, vector<8x512xf32> -> vector<8x512xf32>
    %c0_15 = arith.constant 0 : index
    %c0_16 = arith.constant 0 : index
    %16 = vector.load %arg6[%c0_15, %c0_16] : memref<1x512xf32, #tpu.memory_space<vmem>>, vector<1x512xf32>
    %17 = vector.broadcast %16 : vector<1x512xf32> to vector<8x512xf32>
    %18 = arith.addf %15, %17 : vector<8x512xf32>
    %19 = vector.extract_strided_slice %18 {offsets = [0, 0], sizes = [8, 128], strides = [1, 1]} : vector<8x512xf32> to vector<8x128xf32>
    %20 = arith.negf %19 : vector<8x128xf32>
    %21 = math.exp %20 : vector<8x128xf32>
    %cst_17 = arith.constant 1.000000e+00 : f32
    %22 = vector.broadcast %cst_17 : f32 to vector<8x128xf32>
    %23 = arith.addf %22, %21 : vector<8x128xf32>
    %24 = arith.divf %22, %23 : vector<8x128xf32>
    %25 = vector.extract_strided_slice %18 {offsets = [0, 256], sizes = [8, 128], strides = [1, 1]} : vector<8x512xf32> to vector<8x128xf32>
    %26 = math.tanh %25 : vector<8x128xf32>
    %27 = vector.extract_strided_slice %18 {offsets = [0, 384], sizes = [8, 128], strides = [1, 1]} : vector<8x512xf32> to vector<8x128xf32>
    %28 = arith.negf %27 : vector<8x128xf32>
    %29 = math.exp %28 : vector<8x128xf32>
    %cst_18 = arith.constant 1.000000e+00 : f32
    %30 = vector.broadcast %cst_18 : f32 to vector<8x128xf32>
    %31 = arith.addf %30, %29 : vector<8x128xf32>
    %32 = arith.divf %30, %31 : vector<8x128xf32>
    %33 = arith.mulf %24, %26 : vector<8x128xf32>
    %34 = math.tanh %33 : vector<8x128xf32>
    %35 = arith.mulf %32, %34 : vector<8x128xf32>
    %c0_19 = arith.constant 0 : index
    %c0_20 = arith.constant 0 : index
    %36 = vector.load %arg7[%c0_19, %c0_20] : memref<8x256xf32, #tpu.memory_space<vmem>>, vector<8x128xf32>
    tpu.vector_store %arg7[%c0_19, %c0_20], %11#0 {strides = array<i32>} : memref<8x256xf32, #tpu.memory_space<vmem>>, vector<8x128xf32>,
    %c0_21 = arith.constant 0 : index
    %c128 = arith.constant 128 : index
    %37 = vector.load %arg7[%c0_21, %c128] : memref<8x256xf32, #tpu.memory_space<vmem>>, vector<8x128xf32>
    tpu.vector_store %arg7[%c0_21, %c128], %35 {strides = array<i32>} : memref<8x256xf32, #tpu.memory_space<vmem>>, vector<8x128xf32>,
    return
  }
  func.func @transform_0(%arg0: i32) -> (i32, i32) {
    %c0_i32 = arith.constant 0 : i32
    %c0_i32_0 = arith.constant 0 : i32
    %c0_i32_1 = arith.constant 0 : i32
    return %c0_i32, %c0_i32_0 : i32, i32
  }
  func.func @transform_1(%arg0: i32) -> (i32, i32) {
    %c0_i32 = arith.constant 0 : i32
    %c0_i32_0 = arith.constant 0 : i32
    %c0_i32_1 = arith.constant 0 : i32
    return %c0_i32, %c0_i32_0 : i32, i32
  }
  func.func @transform_2(%arg0: i32) -> (i32, i32) {
    %c0_i32 = arith.constant 0 : i32
    %c0_i32_0 = arith.constant 0 : i32
    %c0_i32_1 = arith.constant 0 : i32
    return %c0_i32, %c0_i32_0 : i32, i32
  }
  func.func @transform_3(%arg0: i32) -> (i32, i32) {
    %c0_i32 = arith.constant 0 : i32
    %c0_i32_0 = arith.constant 0 : i32
    %c0_i32_1 = arith.constant 0 : i32
    return %c0_i32, %c0_i32_0 : i32, i32
  }
  func.func @transform_4(%arg0: i32) -> (i32, i32) {
    %c0_i32 = arith.constant 0 : i32
    %c0_i32_0 = arith.constant 0 : i32
    %c0_i32_1 = arith.constant 0 : i32
    return %c0_i32, %c0_i32_0 : i32, i32
  }
  func.func @transform_5(%arg0: i32) -> (i32, i32) {
    %c0_i32 = arith.constant 0 : i32
    %c0_i32_0 = arith.constant 0 : i32
    %c0_i32_1 = arith.constant 0 : i32
    return %c0_i32, %c0_i32_0 : i32, i32
  }
  func.func @transform_6(%arg0: i32) -> (i32, i32) {
    %c0_i32 = arith.constant 0 : i32
    %c0_i32_0 = arith.constant 0 : i32
    %c0_i32_1 = arith.constant 0 : i32
    return %c0_i32, %c0_i32_0 : i32, i32
  }
}

module attributes {stable_mosaic.version = 11 : i64} {
  func.func @conv_stack_kernel(%arg0: i32, %arg1: memref<48x224xf32, #tpu.memory_space<vmem>>, %arg2: memref<5x224x128xbf16, #tpu.memory_space<vmem>>, %arg3: memref<1x128xf32, #tpu.memory_space<vmem>>, %arg4: memref<5x128x128xbf16, #tpu.memory_space<vmem>>, %arg5: memref<1x128xf32, #tpu.memory_space<vmem>>, %arg6: memref<2x8x128xf32, #tpu.memory_space<vmem>>, %arg7: memref<32x128xf32, #tpu.memory_space<vmem>>) attributes {dimension_semantics = [#tpu.dimension_semantics<parallel>], iteration_bounds = array<i64: 1>, scalar_prefetch = 0 : i64, scratch_operands = 1 : i64, tpu.core_type = #tpu.core_type<tc>, window_params = [{transform_indices = @transform_0, window_bounds = array<i64: 48, 224>}, {pipeline_mode = #tpu.pipeline_mode<synchronous>, transform_indices = @transform_1, window_bounds = array<i64: 5, 224, 128>}, {pipeline_mode = #tpu.pipeline_mode<synchronous>, transform_indices = @transform_2, window_bounds = array<i64: 1, 128>}, {pipeline_mode = #tpu.pipeline_mode<synchronous>, transform_indices = @transform_3, window_bounds = array<i64: 5, 128, 128>}, {pipeline_mode = #tpu.pipeline_mode<synchronous>, transform_indices = @transform_4, window_bounds = array<i64: 1, 128>}, {transform_indices = @transform_5, window_bounds = array<i64: 2, 8, 128>}]} {
    %cst = arith.constant 0.000000e+00 : f32
    %0 = vector.broadcast %cst : f32 to vector<44x128xf32>
    %c0 = arith.constant 0 : index
    %c0_0 = arith.constant 0 : index
    %1 = vector.load %arg3[%c0, %c0_0] : memref<1x128xf32, #tpu.memory_space<vmem>>, vector<1x128xf32>
    %2 = vector.broadcast %1 : vector<1x128xf32> to vector<44x128xf32>
    %3 = arith.addf %0, %2 : vector<44x128xf32>
    %c0_1 = arith.constant 0 : index
    %c0_2 = arith.constant 0 : index
    %4 = vector.load %arg1[%c0_1, %c0_2] : memref<48x224xf32, #tpu.memory_space<vmem>>, vector<44x224xf32>
    %5 = arith.truncf %4 : vector<44x224xf32> to vector<44x224xbf16>
    %c0_3 = arith.constant 0 : index
    %c0_4 = arith.constant 0 : index
    %c0_5 = arith.constant 0 : index
    %6 = vector.load %arg2[%c0_3, %c0_4, %c0_5] : memref<5x224x128xbf16, #tpu.memory_space<vmem>>, vector<1x224x128xbf16>
    %7 = vector.shape_cast %6 : vector<1x224x128xbf16> to vector<224x128xbf16>
    %cst_6 = arith.constant dense<0.000000e+00> : vector<44x128xf32>
    %8 = tpu.matmul %5, %7, %cst_6 {dimension_numbers = #tpu.dot_dimension_numbers<[1], [0], [0], [1], [0, 0, 1, 1], [], []>} : vector<44x224xbf16>, vector<224x128xbf16>, vector<44x128xf32> -> vector<44x128xf32>
    %9 = arith.addf %3, %8 : vector<44x128xf32>
    %c1 = arith.constant 1 : index
    %c0_7 = arith.constant 0 : index
    %10 = vector.load %arg1[%c1, %c0_7] : memref<48x224xf32, #tpu.memory_space<vmem>>, vector<44x224xf32>
    %11 = arith.truncf %10 : vector<44x224xf32> to vector<44x224xbf16>
    %c1_8 = arith.constant 1 : index
    %c0_9 = arith.constant 0 : index
    %c0_10 = arith.constant 0 : index
    %12 = vector.load %arg2[%c1_8, %c0_9, %c0_10] : memref<5x224x128xbf16, #tpu.memory_space<vmem>>, vector<1x224x128xbf16>
    %13 = vector.shape_cast %12 : vector<1x224x128xbf16> to vector<224x128xbf16>
    %cst_11 = arith.constant dense<0.000000e+00> : vector<44x128xf32>
    %14 = tpu.matmul %11, %13, %cst_11 {dimension_numbers = #tpu.dot_dimension_numbers<[1], [0], [0], [1], [0, 0, 1, 1], [], []>} : vector<44x224xbf16>, vector<224x128xbf16>, vector<44x128xf32> -> vector<44x128xf32>
    %15 = arith.addf %9, %14 : vector<44x128xf32>
    %c2 = arith.constant 2 : index
    %c0_12 = arith.constant 0 : index
    %16 = vector.load %arg1[%c2, %c0_12] : memref<48x224xf32, #tpu.memory_space<vmem>>, vector<44x224xf32>
    %17 = arith.truncf %16 : vector<44x224xf32> to vector<44x224xbf16>
    %c2_13 = arith.constant 2 : index
    %c0_14 = arith.constant 0 : index
    %c0_15 = arith.constant 0 : index
    %18 = vector.load %arg2[%c2_13, %c0_14, %c0_15] : memref<5x224x128xbf16, #tpu.memory_space<vmem>>, vector<1x224x128xbf16>
    %19 = vector.shape_cast %18 : vector<1x224x128xbf16> to vector<224x128xbf16>
    %cst_16 = arith.constant dense<0.000000e+00> : vector<44x128xf32>
    %20 = tpu.matmul %17, %19, %cst_16 {dimension_numbers = #tpu.dot_dimension_numbers<[1], [0], [0], [1], [0, 0, 1, 1], [], []>} : vector<44x224xbf16>, vector<224x128xbf16>, vector<44x128xf32> -> vector<44x128xf32>
    %21 = arith.addf %15, %20 : vector<44x128xf32>
    %c3 = arith.constant 3 : index
    %c0_17 = arith.constant 0 : index
    %22 = vector.load %arg1[%c3, %c0_17] : memref<48x224xf32, #tpu.memory_space<vmem>>, vector<44x224xf32>
    %23 = arith.truncf %22 : vector<44x224xf32> to vector<44x224xbf16>
    %c3_18 = arith.constant 3 : index
    %c0_19 = arith.constant 0 : index
    %c0_20 = arith.constant 0 : index
    %24 = vector.load %arg2[%c3_18, %c0_19, %c0_20] : memref<5x224x128xbf16, #tpu.memory_space<vmem>>, vector<1x224x128xbf16>
    %25 = vector.shape_cast %24 : vector<1x224x128xbf16> to vector<224x128xbf16>
    %cst_21 = arith.constant dense<0.000000e+00> : vector<44x128xf32>
    %26 = tpu.matmul %23, %25, %cst_21 {dimension_numbers = #tpu.dot_dimension_numbers<[1], [0], [0], [1], [0, 0, 1, 1], [], []>} : vector<44x224xbf16>, vector<224x128xbf16>, vector<44x128xf32> -> vector<44x128xf32>
    %27 = arith.addf %21, %26 : vector<44x128xf32>
    %c4 = arith.constant 4 : index
    %c0_22 = arith.constant 0 : index
    %28 = vector.load %arg1[%c4, %c0_22] : memref<48x224xf32, #tpu.memory_space<vmem>>, vector<44x224xf32>
    %29 = arith.truncf %28 : vector<44x224xf32> to vector<44x224xbf16>
    %c4_23 = arith.constant 4 : index
    %c0_24 = arith.constant 0 : index
    %c0_25 = arith.constant 0 : index
    %30 = vector.load %arg2[%c4_23, %c0_24, %c0_25] : memref<5x224x128xbf16, #tpu.memory_space<vmem>>, vector<1x224x128xbf16>
    %31 = vector.shape_cast %30 : vector<1x224x128xbf16> to vector<224x128xbf16>
    %cst_26 = arith.constant dense<0.000000e+00> : vector<44x128xf32>
    %32 = tpu.matmul %29, %31, %cst_26 {dimension_numbers = #tpu.dot_dimension_numbers<[1], [0], [0], [1], [0, 0, 1, 1], [], []>} : vector<44x224xbf16>, vector<224x128xbf16>, vector<44x128xf32> -> vector<44x128xf32>
    %33 = arith.addf %27, %32 : vector<44x128xf32>
    %cst_27 = arith.constant 0.000000e+00 : f32
    %34 = vector.broadcast %cst_27 : f32 to vector<32x128xf32>
    %c0_28 = arith.constant 0 : index
    %c0_29 = arith.constant 0 : index
    %35 = vector.load %arg7[%c0_28, %c0_29] : memref<32x128xf32, #tpu.memory_space<vmem>>, vector<32x128xf32>
    tpu.vector_store %arg7[%c0_28, %c0_29], %34 {strides = array<i32>} : memref<32x128xf32, #tpu.memory_space<vmem>>, vector<32x128xf32>,
    %36 = vector.extract_strided_slice %33 {offsets = [0, 0], sizes = [16, 128], strides = [1, 1]} : vector<44x128xf32> to vector<16x128xf32>
    %37 = vector.shape_cast %36 : vector<16x128xf32> to vector<8x2x128xf32>
    %cst_30 = arith.constant dense<0xFF800000> : vector<8x128xf32>
    %38 = vector.multi_reduction <maximumf>, %37, %cst_30 [1] : vector<8x2x128xf32> to vector<8x128xf32>
    %cst_31 = arith.constant 0.000000e+00 : f32
    %39 = vector.broadcast %cst_31 : f32 to vector<8x128xf32>
    %40 = arith.maximumf %38, %39 : vector<8x128xf32>
    %c2_32 = arith.constant 2 : index
    %c0_33 = arith.constant 0 : index
    %41 = vector.load %arg7[%c2_32, %c0_33] : memref<32x128xf32, #tpu.memory_space<vmem>>, vector<8x128xf32>
    tpu.vector_store %arg7[%c2_32, %c0_33], %40 {strides = array<i32>} : memref<32x128xf32, #tpu.memory_space<vmem>>, vector<8x128xf32>,
    %42 = vector.extract_strided_slice %33 {offsets = [24, 0], sizes = [16, 128], strides = [1, 1]} : vector<44x128xf32> to vector<16x128xf32>
    %43 = vector.shape_cast %42 : vector<16x128xf32> to vector<8x2x128xf32>
    %cst_34 = arith.constant dense<0xFF800000> : vector<8x128xf32>
    %44 = vector.multi_reduction <maximumf>, %43, %cst_34 [1] : vector<8x2x128xf32> to vector<8x128xf32>
    %cst_35 = arith.constant 0.000000e+00 : f32
    %45 = vector.broadcast %cst_35 : f32 to vector<8x128xf32>
    %46 = arith.maximumf %44, %45 : vector<8x128xf32>
    %c18 = arith.constant 18 : index
    %c0_36 = arith.constant 0 : index
    %47 = vector.load %arg7[%c18, %c0_36] : memref<32x128xf32, #tpu.memory_space<vmem>>, vector<8x128xf32>
    tpu.vector_store %arg7[%c18, %c0_36], %46 {strides = array<i32>} : memref<32x128xf32, #tpu.memory_space<vmem>>, vector<8x128xf32>,
    %cst_37 = arith.constant 0.000000e+00 : f32
    %48 = vector.broadcast %cst_37 : f32 to vector<28x128xf32>
    %c0_38 = arith.constant 0 : index
    %c0_39 = arith.constant 0 : index
    %49 = vector.load %arg5[%c0_38, %c0_39] : memref<1x128xf32, #tpu.memory_space<vmem>>, vector<1x128xf32>
    %50 = vector.broadcast %49 : vector<1x128xf32> to vector<28x128xf32>
    %51 = arith.addf %48, %50 : vector<28x128xf32>
    %c0_40 = arith.constant 0 : index
    %c0_41 = arith.constant 0 : index
    %52 = vector.load %arg7[%c0_40, %c0_41] : memref<32x128xf32, #tpu.memory_space<vmem>>, vector<28x128xf32>
    %53 = arith.truncf %52 : vector<28x128xf32> to vector<28x128xbf16>
    %c0_42 = arith.constant 0 : index
    %c0_43 = arith.constant 0 : index
    %c0_44 = arith.constant 0 : index
    %54 = vector.load %arg4[%c0_42, %c0_43, %c0_44] : memref<5x128x128xbf16, #tpu.memory_space<vmem>>, vector<1x128x128xbf16>
    %55 = vector.shape_cast %54 : vector<1x128x128xbf16> to vector<128x128xbf16>
    %cst_45 = arith.constant dense<0.000000e+00> : vector<28x128xf32>
    %56 = tpu.matmul %53, %55, %cst_45 {dimension_numbers = #tpu.dot_dimension_numbers<[1], [0], [0], [1], [0, 0, 1, 1], [], []>} : vector<28x128xbf16>, vector<128x128xbf16>, vector<28x128xf32> -> vector<28x128xf32>
    %57 = arith.addf %51, %56 : vector<28x128xf32>
    %c1_46 = arith.constant 1 : index
    %c0_47 = arith.constant 0 : index
    %58 = vector.load %arg7[%c1_46, %c0_47] : memref<32x128xf32, #tpu.memory_space<vmem>>, vector<28x128xf32>
    %59 = arith.truncf %58 : vector<28x128xf32> to vector<28x128xbf16>
    %c1_48 = arith.constant 1 : index
    %c0_49 = arith.constant 0 : index
    %c0_50 = arith.constant 0 : index
    %60 = vector.load %arg4[%c1_48, %c0_49, %c0_50] : memref<5x128x128xbf16, #tpu.memory_space<vmem>>, vector<1x128x128xbf16>
    %61 = vector.shape_cast %60 : vector<1x128x128xbf16> to vector<128x128xbf16>
    %cst_51 = arith.constant dense<0.000000e+00> : vector<28x128xf32>
    %62 = tpu.matmul %59, %61, %cst_51 {dimension_numbers = #tpu.dot_dimension_numbers<[1], [0], [0], [1], [0, 0, 1, 1], [], []>} : vector<28x128xbf16>, vector<128x128xbf16>, vector<28x128xf32> -> vector<28x128xf32>
    %63 = arith.addf %57, %62 : vector<28x128xf32>
    %c2_52 = arith.constant 2 : index
    %c0_53 = arith.constant 0 : index
    %64 = vector.load %arg7[%c2_52, %c0_53] : memref<32x128xf32, #tpu.memory_space<vmem>>, vector<28x128xf32>
    %65 = arith.truncf %64 : vector<28x128xf32> to vector<28x128xbf16>
    %c2_54 = arith.constant 2 : index
    %c0_55 = arith.constant 0 : index
    %c0_56 = arith.constant 0 : index
    %66 = vector.load %arg4[%c2_54, %c0_55, %c0_56] : memref<5x128x128xbf16, #tpu.memory_space<vmem>>, vector<1x128x128xbf16>
    %67 = vector.shape_cast %66 : vector<1x128x128xbf16> to vector<128x128xbf16>
    %cst_57 = arith.constant dense<0.000000e+00> : vector<28x128xf32>
    %68 = tpu.matmul %65, %67, %cst_57 {dimension_numbers = #tpu.dot_dimension_numbers<[1], [0], [0], [1], [0, 0, 1, 1], [], []>} : vector<28x128xbf16>, vector<128x128xbf16>, vector<28x128xf32> -> vector<28x128xf32>
    %69 = arith.addf %63, %68 : vector<28x128xf32>
    %c3_58 = arith.constant 3 : index
    %c0_59 = arith.constant 0 : index
    %70 = vector.load %arg7[%c3_58, %c0_59] : memref<32x128xf32, #tpu.memory_space<vmem>>, vector<28x128xf32>
    %71 = arith.truncf %70 : vector<28x128xf32> to vector<28x128xbf16>
    %c3_60 = arith.constant 3 : index
    %c0_61 = arith.constant 0 : index
    %c0_62 = arith.constant 0 : index
    %72 = vector.load %arg4[%c3_60, %c0_61, %c0_62] : memref<5x128x128xbf16, #tpu.memory_space<vmem>>, vector<1x128x128xbf16>
    %73 = vector.shape_cast %72 : vector<1x128x128xbf16> to vector<128x128xbf16>
    %cst_63 = arith.constant dense<0.000000e+00> : vector<28x128xf32>
    %74 = tpu.matmul %71, %73, %cst_63 {dimension_numbers = #tpu.dot_dimension_numbers<[1], [0], [0], [1], [0, 0, 1, 1], [], []>} : vector<28x128xbf16>, vector<128x128xbf16>, vector<28x128xf32> -> vector<28x128xf32>
    %75 = arith.addf %69, %74 : vector<28x128xf32>
    %c4_64 = arith.constant 4 : index
    %c0_65 = arith.constant 0 : index
    %76 = vector.load %arg7[%c4_64, %c0_65] : memref<32x128xf32, #tpu.memory_space<vmem>>, vector<28x128xf32>
    %77 = arith.truncf %76 : vector<28x128xf32> to vector<28x128xbf16>
    %c4_66 = arith.constant 4 : index
    %c0_67 = arith.constant 0 : index
    %c0_68 = arith.constant 0 : index
    %78 = vector.load %arg4[%c4_66, %c0_67, %c0_68] : memref<5x128x128xbf16, #tpu.memory_space<vmem>>, vector<1x128x128xbf16>
    %79 = vector.shape_cast %78 : vector<1x128x128xbf16> to vector<128x128xbf16>
    %cst_69 = arith.constant dense<0.000000e+00> : vector<28x128xf32>
    %80 = tpu.matmul %77, %79, %cst_69 {dimension_numbers = #tpu.dot_dimension_numbers<[1], [0], [0], [1], [0, 0, 1, 1], [], []>} : vector<28x128xbf16>, vector<128x128xbf16>, vector<28x128xf32> -> vector<28x128xf32>
    %81 = arith.addf %75, %80 : vector<28x128xf32>
    %cst_70 = arith.constant 0.000000e+00 : f32
    %82 = vector.broadcast %cst_70 : f32 to vector<28x128xf32>
    %83 = arith.maximumf %81, %82 : vector<28x128xf32>
    %84 = vector.extract_strided_slice %83 {offsets = [0, 0], sizes = [8, 128], strides = [1, 1]} : vector<28x128xf32> to vector<8x128xf32>
    %c0_71 = arith.constant 0 : index
    %c0_72 = arith.constant 0 : index
    %c0_73 = arith.constant 0 : index
    %85 = vector.load %arg6[%c0_71, %c0_72, %c0_73] : memref<2x8x128xf32, #tpu.memory_space<vmem>>, vector<1x8x128xf32>
    %86 = vector.shape_cast %85 : vector<1x8x128xf32> to vector<8x128xf32>
    %87 = vector.shape_cast %84 : vector<8x128xf32> to vector<1x8x128xf32>
    tpu.vector_store %arg6[%c0_71, %c0_72, %c0_73], %87 {strides = array<i32>} : memref<2x8x128xf32, #tpu.memory_space<vmem>>, vector<1x8x128xf32>,
    %88 = vector.extract_strided_slice %83 {offsets = [16, 0], sizes = [8, 128], strides = [1, 1]} : vector<28x128xf32> to vector<8x128xf32>
    %c1_74 = arith.constant 1 : index
    %c0_75 = arith.constant 0 : index
    %c0_76 = arith.constant 0 : index
    %89 = vector.load %arg6[%c1_74, %c0_75, %c0_76] : memref<2x8x128xf32, #tpu.memory_space<vmem>>, vector<1x8x128xf32>
    %90 = vector.shape_cast %89 : vector<1x8x128xf32> to vector<8x128xf32>
    %91 = vector.shape_cast %88 : vector<8x128xf32> to vector<1x8x128xf32>
    tpu.vector_store %arg6[%c1_74, %c0_75, %c0_76], %91 {strides = array<i32>} : memref<2x8x128xf32, #tpu.memory_space<vmem>>, vector<1x8x128xf32>,
    return
  }
  func.func @transform_0(%arg0: i32) -> (i32, i32) {
    %c0_i32 = arith.constant 0 : i32
    %c0_i32_0 = arith.constant 0 : i32
    return %arg0, %c0_i32 : i32, i32
  }
  func.func @transform_1(%arg0: i32) -> (i32, i32, i32) {
    %c0_i32 = arith.constant 0 : i32
    %c0_i32_0 = arith.constant 0 : i32
    %c0_i32_1 = arith.constant 0 : i32
    %c0_i32_2 = arith.constant 0 : i32
    return %c0_i32, %c0_i32_0, %c0_i32_1 : i32, i32, i32
  }
  func.func @transform_2(%arg0: i32) -> (i32, i32) {
    %c0_i32 = arith.constant 0 : i32
    %c0_i32_0 = arith.constant 0 : i32
    %c0_i32_1 = arith.constant 0 : i32
    return %c0_i32, %c0_i32_0 : i32, i32
  }
  func.func @transform_3(%arg0: i32) -> (i32, i32, i32) {
    %c0_i32 = arith.constant 0 : i32
    %c0_i32_0 = arith.constant 0 : i32
    %c0_i32_1 = arith.constant 0 : i32
    %c0_i32_2 = arith.constant 0 : i32
    return %c0_i32, %c0_i32_0, %c0_i32_1 : i32, i32, i32
  }
  func.func @transform_4(%arg0: i32) -> (i32, i32) {
    %c0_i32 = arith.constant 0 : i32
    %c0_i32_0 = arith.constant 0 : i32
    %c0_i32_1 = arith.constant 0 : i32
    return %c0_i32, %c0_i32_0 : i32, i32
  }
  func.func @transform_5(%arg0: i32) -> (i32, i32, i32) {
    %c0_i32 = arith.constant 0 : i32
    %c0_i32_0 = arith.constant 0 : i32
    %c0_i32_1 = arith.constant 0 : i32
    return %arg0, %c0_i32, %c0_i32_0 : i32, i32, i32
  }
}

</mosaic_0001>

<llo_original>
// kernel: conv1dlstm_forward.3
$region0: #{conv1dlstm_forward.3}
  #allocation0 [shape = 'u32[]', space=smem, size = 0x4, offset = 0x4, fixed_abs, tag = 'smem constant byte address 0x4 - core index']
  #allocation1 [shape = 'u32[144,128]{1,0:T(1,128)}', space=vmem, size = 0x12000, scoped, tag = 'internal scratch']
  #allocation2 [shape = 'f32[64,512]{1,0:T(8,128)}', space=vmem, size = 0x20000, scoped, tag = 'scratch operand']
  %s0 = inlined_call_operand.vmem [shape: f32[64,128], index: 0, kind: input, shape index: {}]
  %s1 = inlined_call_operand.vmem [shape: bf16[128,512], index: 1, kind: input, shape index: {}]
  %s2 = inlined_call_operand.vmem [shape: bf16[128,512], index: 2, kind: input, shape index: {}]
  %s3 = inlined_call_operand.vmem [shape: f32[1,512], index: 3, kind: input, shape index: {}]
  %s4 = inlined_call_operand.vmem [shape: bf16[128,512], index: 4, kind: input, shape index: {}]
  %s5 = inlined_call_operand.vmem [shape: f32[1,512], index: 5, kind: input, shape index: {}]
  %s6 = inlined_call_operand.vmem [shape: f32[8,256], index: 6, kind: output, shape index: {}]
  %s7 = sld [smem:[#allocation0]]
  $region41: #{conv1dlstm_forward.3} parent=0
    _
  %s9 = ssub.s32 1, %s7
  %s10 = scalar_select 0, %s9, %s7
  // Predicated region
  $region2: #{conv1dlstm_forward.3} parent=0 // pred_check
    _
  $region3: #{conv1dlstm_forward.3} parent=0 // pred_check_branch
    %12 = sbr.rel (0) target = $region5
  $region4: #{conv1dlstm_forward.3} parent=0 // pred_region
    _
  $region5: #{conv1dlstm_forward.3} parent=0 // pred_fallthru
    _
  // Predicated region
  $region6: #{conv1dlstm_forward.3} parent=0 // pred_check
    _
  $region7: #{conv1dlstm_forward.3} parent=0 // pred_check_branch
    %14 = sbr.rel (0) target = $region9
  $region8: #{conv1dlstm_forward.3} parent=0 // pred_region
    _
  $region9: #{conv1dlstm_forward.3} parent=0 // pred_fallthru
    _
  // Predicated region
  $region10: #{conv1dlstm_forward.3} parent=0 // pred_check
    _
  $region11: #{conv1dlstm_forward.3} parent=0 // pred_check_branch
    %16 = sbr.rel (0) target = $region13
  $region12: #{conv1dlstm_forward.3} parent=0 // pred_region
    _
  $region13: #{conv1dlstm_forward.3} parent=0 // pred_fallthru
    _
  // Predicated region
  $region14: #{conv1dlstm_forward.3} parent=0 // pred_check
    _
  $region15: #{conv1dlstm_forward.3} parent=0 // pred_check_branch
    %18 = sbr.rel (0) target = $region17
  $region16: #{conv1dlstm_forward.3} parent=0 // pred_region
    _
  $region17: #{conv1dlstm_forward.3} parent=0 // pred_fallthru
    _
  // Predicated region
  $region18: #{conv1dlstm_forward.3} parent=0 // pred_check
    _
  $region19: #{conv1dlstm_forward.3} parent=0 // pred_check_branch
    %20 = sbr.rel (0) target = $region21
  $region20: #{conv1dlstm_forward.3} parent=0 // pred_region
    _
  $region21: #{conv1dlstm_forward.3} parent=0 // pred_fallthru
    _
  // Predicated region
  $region22: #{conv1dlstm_forward.3} parent=0 // pred_check
    _
  $region23: #{conv1dlstm_forward.3} parent=0 // pred_check_branch
    %22 = sbr.rel (0) target = $region25
  $region24: #{conv1dlstm_forward.3} parent=0 // pred_region
    _
  $region25: #{conv1dlstm_forward.3} parent=0 // pred_fallthru
    _
  %v24 = vld [vmem:[%s0] sm:$0xff]
  %v25 = vld [vmem:[%s0 + $0x8] sm:$0xff]
  %v26 = vld [vmem:[%s0 + $0x10] sm:$0xff]
  %v27 = vld [vmem:[%s0 + $0x18] sm:$0xff]
  %v28 = vld [vmem:[%s0 + $0x20] sm:$0xff]
  %v29 = vld [vmem:[%s0 + $0x28] sm:$0xff]
  %v30 = vld [vmem:[%s0 + $0x30] sm:$0xff]
  %v31 = vld [vmem:[%s0 + $0x38] sm:$0xff]
  %v32 = vpack.c.bf16 %v25, %v24
  %v33 = vpack.c.bf16 %v27, %v26
  %v34 = vpack.c.bf16 %v29, %v28
  %v35 = vpack.c.bf16 %v31, %v30
  %v36 = vld [vmem:[%s1] sm:$0xff]
  %v37 = vld [vmem:[%s1 + $0x8] sm:$0xff]
  %v38 = vld [vmem:[%s1 + $0x10] sm:$0xff]
  %v39 = vld [vmem:[%s1 + $0x18] sm:$0xff]
  %v40 = vld [vmem:[%s1 + $0x20] sm:$0xff]
  %v41 = vld [vmem:[%s1 + $0x28] sm:$0xff]
  %v42 = vld [vmem:[%s1 + $0x30] sm:$0xff]
  %v43 = vld [vmem:[%s1 + $0x38] sm:$0xff]
  %v44 = vld [vmem:[%s1 + $0x40] sm:$0xff]
  %v45 = vld [vmem:[%s1 + $0x48] sm:$0xff]
  %v46 = vld [vmem:[%s1 + $0x50] sm:$0xff]
  %v47 = vld [vmem:[%s1 + $0x58] sm:$0xff]
  %v48 = vld [vmem:[%s1 + $0x60] sm:$0xff]
  %v49 = vld [vmem:[%s1 + $0x68] sm:$0xff]
  %v50 = vld [vmem:[%s1 + $0x70] sm:$0xff]
  %v51 = vld [vmem:[%s1 + $0x78] sm:$0xff]
  %v52 = vld [vmem:[%s1 + $0x80] sm:$0xff]
  %v53 = vld [vmem:[%s1 + $0x88] sm:$0xff]
  %v54 = vld [vmem:[%s1 + $0x90] sm:$0xff]
  %v55 = vld [vmem:[%s1 + $0x98] sm:$0xff]
  %v56 = vld [vmem:[%s1 + $0xa0] sm:$0xff]
  %v57 = vld [vmem:[%s1 + $0xa8] sm:$0xff]
  %v58 = vld [vmem:[%s1 + $0xb0] sm:$0xff]
  %v59 = vld [vmem:[%s1 + $0xb8] sm:$0xff]
  %v60 = vld [vmem:[%s1 + $0xc0] sm:$0xff]
  %v61 = vld [vmem:[%s1 + $0xc8] sm:$0xff]
  %v62 = vld [vmem:[%s1 + $0xd0] sm:$0xff]
  %v63 = vld [vmem:[%s1 + $0xd8] sm:$0xff]
  %v64 = vld [vmem:[%s1 + $0xe0] sm:$0xff]
  %v65 = vld [vmem:[%s1 + $0xe8] sm:$0xff]
  %v66 = vld [vmem:[%s1 + $0xf0] sm:$0xff]
  %v67 = vld [vmem:[%s1 + $0xf8] sm:$0xff]
  %v68 = vld [vmem:[%s3] sm:$0xf]
  %v70 = vlaneseq
  %v71 = vshrl.u32 %v70, 7
  %v72 = vsub.s32 0, %v71
  %v73 = vrot.slane %v68, %v72
  %v74 = vlaneseq
  %v75 = vshrl.u32 %v74, 7
  %v76 = vsub.s32 1, %v75
  %v77 = vrot.slane %v68, %v76
  %v78 = vlaneseq
  %v79 = vshrl.u32 %v78, 7
  %v80 = vsub.s32 2, %v79
  %v81 = vrot.slane %v68, %v80
  %v82 = vlaneseq
  %v83 = vshrl.u32 %v82, 7
  %v84 = vsub.s32 3, %v83
  %v85 = vrot.slane %v68, %v84
  %v122 = vunpack.c.l.b16 %v36
  %v123 = vunpack.c.h.b16 %v36
  %v124 = vunpack.c.l.b16 %v37
  %v125 = vunpack.c.h.b16 %v37
  %v126 = vunpack.c.l.b16 %v38
  %v127 = vunpack.c.h.b16 %v38
  %v128 = vunpack.c.l.b16 %v39
  %v129 = vunpack.c.h.b16 %v39
  %v130 = vunpack.c.l.b16 %v40
  %v131 = vunpack.c.h.b16 %v40
  %v132 = vunpack.c.l.b16 %v41
  %v133 = vunpack.c.h.b16 %v41
  %v134 = vunpack.c.l.b16 %v42
  %v135 = vunpack.c.h.b16 %v42
  %v136 = vunpack.c.l.b16 %v43
  %v137 = vunpack.c.h.b16 %v43
  %v138 = vunpack.c.l.b16 %v44
  %v139 = vunpack.c.h.b16 %v44
  %v140 = vunpack.c.l.b16 %v45
  %v141 = vunpack.c.h.b16 %v45
  %v142 = vunpack.c.l.b16 %v46
  %v143 = vunpack.c.h.b16 %v46
  %v144 = vunpack.c.l.b16 %v47
  %v145 = vunpack.c.h.b16 %v47
  %v146 = vunpack.c.l.b16 %v48
  %v147 = vunpack.c.h.b16 %v48
  %v148 = vunpack.c.l.b16 %v49
  %v149 = vunpack.c.h.b16 %v49
  %v150 = vunpack.c.l.b16 %v50
  %v151 = vunpack.c.h.b16 %v50
  %v152 = vunpack.c.l.b16 %v51
  %v153 = vunpack.c.h.b16 %v51
  %v154 = vunpack.c.l.b16 %v52
  %v155 = vunpack.c.h.b16 %v52
  %v156 = vunpack.c.l.b16 %v53
  %v157 = vunpack.c.h.b16 %v53
  %v158 = vunpack.c.l.b16 %v54
  %v159 = vunpack.c.h.b16 %v54
  %v160 = vunpack.c.l.b16 %v55
  %v161 = vunpack.c.h.b16 %v55
  %v162 = vunpack.c.l.b16 %v56
  %v163 = vunpack.c.h.b16 %v56
  %v164 = vunpack.c.l.b16 %v57
  %v165 = vunpack.c.h.b16 %v57
  %v166 = vunpack.c.l.b16 %v58
  %v167 = vunpack.c.h.b16 %v58
  %v168 = vunpack.c.l.b16 %v59
  %v169 = vunpack.c.h.b16 %v59
  %v170 = vunpack.c.l.b16 %v60
  %v171 = vunpack.c.h.b16 %v60
  %v172 = vunpack.c.l.b16 %v61
  %v173 = vunpack.c.h.b16 %v61
  %v174 = vunpack.c.l.b16 %v62
  %v175 = vunpack.c.h.b16 %v62
  %v176 = vunpack.c.l.b16 %v63
  %v177 = vunpack.c.h.b16 %v63
  %v178 = vunpack.c.l.b16 %v64
  %v179 = vunpack.c.h.b16 %v64
  %v180 = vunpack.c.l.b16 %v65
  %v181 = vunpack.c.h.b16 %v65
  %v182 = vunpack.c.l.b16 %v66
  %v183 = vunpack.c.h.b16 %v66
  %v184 = vunpack.c.l.b16 %v67
  %v185 = vunpack.c.h.b16 %v67
  %v186 = vpack.c.b16 %v126, %v122
  %v187 = vpack.c.b16 %v127, %v123
  %v188 = vpack.c.b16 %v128, %v124
  %v189 = vpack.c.b16 %v129, %v125
  %v190 = vpack.c.b16 %v134, %v130
  %v191 = vpack.c.b16 %v135, %v131
  %v192 = vpack.c.b16 %v136, %v132
  %v193 = vpack.c.b16 %v137, %v133
  %v194 = vpack.c.b16 %v142, %v138
  %v195 = vpack.c.b16 %v143, %v139
  %v196 = vpack.c.b16 %v144, %v140
  %v197 = vpack.c.b16 %v145, %v141
  %v198 = vpack.c.b16 %v150, %v146
  %v199 = vpack.c.b16 %v151, %v147
  %v200 = vpack.c.b16 %v152, %v148
  %v201 = vpack.c.b16 %v153, %v149
  %v202 = vpack.c.b16 %v158, %v154
  %v203 = vpack.c.b16 %v159, %v155
  %v204 = vpack.c.b16 %v160, %v156
  %v205 = vpack.c.b16 %v161, %v157
  %v206 = vpack.c.b16 %v166, %v162
  %v207 = vpack.c.b16 %v167, %v163
  %v208 = vpack.c.b16 %v168, %v164
  %v209 = vpack.c.b16 %v169, %v165
  %v210 = vpack.c.b16 %v174, %v170
  %v211 = vpack.c.b16 %v175, %v171
  %v212 = vpack.c.b16 %v176, %v172
  %v213 = vpack.c.b16 %v177, %v173
  %v214 = vpack.c.b16 %v182, %v178
  %v215 = vpack.c.b16 %v183, %v179
  %v216 = vpack.c.b16 %v184, %v180
  %v217 = vpack.c.b16 %v185, %v181
  %250 = vmatprep.subr.bf16.mxu0 %v187
  %251 = vmatpush1.bf16.msra.mxu0 %v186
  %252 = vmatprep.subr.bf16.mxu0 %v191
  %253 = vmatpush1.bf16.msra.mxu0 %v190
  %254 = vmatprep.subr.bf16.mxu0 %v195
  %255 = vmatpush1.bf16.msra.mxu0 %v194
  %256 = vmatprep.subr.bf16.mxu0 %v199
  %257 = vmatpush1.bf16.msra.mxu0 %v198
  %258 = vmatprep.subr.bf16.mxu0 %v203
  %259 = vmatpush1.bf16.msra.mxu0 %v202
  %260 = vmatprep.subr.bf16.mxu0 %v207
  %261 = vmatpush1.bf16.msra.mxu0 %v206
  %262 = vmatprep.subr.bf16.mxu0 %v211
  %263 = vmatpush1.bf16.msra.mxu0 %v210
  %264 = vmatprep.subr.bf16.mxu0 %v215
  %265 = vmatpush1.bf16.msra.mxu0 %v214
  %266 = vmatprep.subr.bf16.mxu0 0
  %267 = vmatpush1.bf16.msra.mxu0 0
  %268 = vmatprep.subr.bf16.mxu0 0
  %269 = vmatpush1.bf16.msra.mxu0 0
  %270 = vmatprep.subr.bf16.mxu0 0
  %271 = vmatpush1.bf16.msra.mxu0 0
  %272 = vmatprep.subr.bf16.mxu0 0
  %273 = vmatpush1.bf16.msra.mxu0 0
  %274 = vmatprep.subr.bf16.mxu0 0
  %275 = vmatpush1.bf16.msra.mxu0 0
  %276 = vmatprep.subr.bf16.mxu0 0
  %277 = vmatpush1.bf16.msra.mxu0 0
  %278 = vmatprep.subr.bf16.mxu0 0
  %279 = vmatpush1.bf16.msra.mxu0 0
  %280 = vmatprep.subr.bf16.mxu0 0
  %281 = vmatpush1.bf16.msra.mxu0 0
  %282 = vmatprep.mubr.bf16.mxu0 0
  %283 = vmatmul.mubr.bf16.gmra.mrb[0].mxu0 %v32
  %v284 = vpop.f32.mrb[0].mxu0
  %v285 = vadd.f32 %v73, %v284
  %v286 = vpop.f32.mrb[0].mxu0
  %v287 = vadd.f32 %v77, %v286
  %v288 = vpop.f32.mrb[0].mxu0
  %v289 = vadd.f32 %v73, %v288
  %v290 = vpop.f32.mrb[0].mxu0
  %v291 = vadd.f32 %v77, %v290
  %292 = vmatprep.mubr.bf16.mxu0 0
  %293 = vmatmul.mubr.bf16.gmra.mrb[0].mxu0 %v33
  %v294 = vpop.f32.mrb[0].mxu0
  %v295 = vadd.f32 %v73, %v294
  %v296 = vpop.f32.mrb[0].mxu0
  %v297 = vadd.f32 %v77, %v296
  %v298 = vpop.f32.mrb[0].mxu0
  %v299 = vadd.f32 %v73, %v298
  %v300 = vpop.f32.mrb[0].mxu0
  %v301 = vadd.f32 %v77, %v300
  %302 = vmatprep.mubr.bf16.mxu0 0
  %303 = vmatmul.mubr.bf16.gmra.mrb[0].mxu0 %v34
  %v304 = vpop.f32.mrb[0].mxu0
  %v305 = vadd.f32 %v73, %v304
  %v306 = vpop.f32.mrb[0].mxu0
  %v307 = vadd.f32 %v77, %v306
  %v308 = vpop.f32.mrb[0].mxu0
  %v309 = vadd.f32 %v73, %v308
  %v310 = vpop.f32.mrb[0].mxu0
  %v311 = vadd.f32 %v77, %v310
  %312 = vmatprep.mubr.bf16.mxu0 0
  %313 = vmatmul.mubr.bf16.gmra.mrb[0].mxu0 %v35
  %v314 = vpop.f32.mrb[0].mxu0
  %v315 = vadd.f32 %v73, %v314
  %v316 = vpop.f32.mrb[0].mxu0
  %v317 = vadd.f32 %v77, %v316
  %v318 = vpop.f32.mrb[0].mxu0
  %v319 = vadd.f32 %v73, %v318
  %v320 = vpop.f32.mrb[0].mxu0
  %v321 = vadd.f32 %v77, %v320
  %322 = vdwg.mxu0
  %323 = vmatprep.subr.bf16.mxu0 %v189
  %324 = vmatpush1.bf16.msra.mxu0 %v188
  %325 = vmatprep.subr.bf16.mxu0 %v193
  %326 = vmatpush1.bf16.msra.mxu0 %v192
  %327 = vmatprep.subr.bf16.mxu0 %v197
  %328 = vmatpush1.bf16.msra.mxu0 %v196
  %329 = vmatprep.subr.bf16.mxu0 %v201
  %330 = vmatpush1.bf16.msra.mxu0 %v200
  %331 = vmatprep.subr.bf16.mxu0 %v205
  %332 = vmatpush1.bf16.msra.mxu0 %v204
  %333 = vmatprep.subr.bf16.mxu0 %v209
  %334 = vmatpush1.bf16.msra.mxu0 %v208
  %335 = vmatprep.subr.bf16.mxu0 %v213
  %336 = vmatpush1.bf16.msra.mxu0 %v212
  %337 = vmatprep.subr.bf16.mxu0 %v217
  %338 = vmatpush1.bf16.msra.mxu0 %v216
  %339 = vmatprep.subr.bf16.mxu0 0
  %340 = vmatpush1.bf16.msra.mxu0 0
  %341 = vmatprep.subr.bf16.mxu0 0
  %342 = vmatpush1.bf16.msra.mxu0 0
  %343 = vmatprep.subr.bf16.mxu0 0
  %344 = vmatpush1.bf16.msra.mxu0 0
  %345 = vmatprep.subr.bf16.mxu0 0
  %346 = vmatpush1.bf16.msra.mxu0 0
  %347 = vmatprep.subr.bf16.mxu0 0
  %348 = vmatpush1.bf16.msra.mxu0 0
  %349 = vmatprep.subr.bf16.mxu0 0
  %350 = vmatpush1.bf16.msra.mxu0 0
  %351 = vmatprep.subr.bf16.mxu0 0
  %352 = vmatpush1.bf16.msra.mxu0 0
  %353 = vmatprep.subr.bf16.mxu0 0
  %354 = vmatpush1.bf16.msra.mxu0 0
  %355 = vmatprep.mubr.bf16.mxu0 0
  %356 = vmatmul.mubr.bf16.gmra.mrb[0].mxu0 %v32
  %v357 = vpop.f32.mrb[0].mxu0
  %v358 = vadd.f32 %v81, %v357
  %v359 = vpop.f32.mrb[0].mxu0
  %v360 = vadd.f32 %v85, %v359
  %v361 = vpop.f32.mrb[0].mxu0
  %v362 = vadd.f32 %v81, %v361
  %v363 = vpop.f32.mrb[0].mxu0
  %v364 = vadd.f32 %v85, %v363
  %365 = vmatprep.mubr.bf16.mxu0 0
  %366 = vmatmul.mubr.bf16.gmra.mrb[0].mxu0 %v33
  %v367 = vpop.f32.mrb[0].mxu0
  %v368 = vadd.f32 %v81, %v367
  %v369 = vpop.f32.mrb[0].mxu0
  %v370 = vadd.f32 %v85, %v369
  %v371 = vpop.f32.mrb[0].mxu0
  %v372 = vadd.f32 %v81, %v371
  %v373 = vpop.f32.mrb[0].mxu0
  %v374 = vadd.f32 %v85, %v373
  %375 = vmatprep.mubr.bf16.mxu0 0
  %376 = vmatmul.mubr.bf16.gmra.mrb[0].mxu0 %v34
  %v377 = vpop.f32.mrb[0].mxu0
  %v378 = vadd.f32 %v81, %v377
  %v379 = vpop.f32.mrb[0].mxu0
  %v380 = vadd.f32 %v85, %v379
  %v381 = vpop.f32.mrb[0].mxu0
  %v382 = vadd.f32 %v81, %v381
  %v383 = vpop.f32.mrb[0].mxu0
  %v384 = vadd.f32 %v85, %v383
  %385 = vmatprep.mubr.bf16.mxu0 0
  %386 = vmatmul.mubr.bf16.gmra.mrb[0].mxu0 %v35
  %v387 = vpop.f32.mrb[0].mxu0
  %v388 = vadd.f32 %v81, %v387
  %v389 = vpop.f32.mrb[0].mxu0
  %v390 = vadd.f32 %v85, %v389
  %v391 = vpop.f32.mrb[0].mxu0
  %v392 = vadd.f32 %v81, %v391
  %v393 = vpop.f32.mrb[0].mxu0
  %v394 = vadd.f32 %v85, %v393
  %395 = vdwg.mxu0
  %396 = vst [vmem:[#allocation2] sm:$0xff] %v285
  %397 = vst [vmem:[#allocation2 + $0x8] sm:$0xff] %v287
  %398 = vst [vmem:[#allocation2 + $0x10] sm:$0xff] %v358
  %399 = vst [vmem:[#allocation2 + $0x18] sm:$0xff] %v360
  %400 = vst [vmem:[#allocation2 + $0x20] sm:$0xff] %v289
  %401 = vst [vmem:[#allocation2 + $0x28] sm:$0xff] %v291
  %402 = vst [vmem:[#allocation2 + $0x30] sm:$0xff] %v362
  %403 = vst [vmem:[#allocation2 + $0x38] sm:$0xff] %v364
  %404 = vst [vmem:[#allocation2 + $0x40] sm:$0xff] %v295
  %405 = vst [vmem:[#allocation2 + $0x48] sm:$0xff] %v297
  %406 = vst [vmem:[#allocation2 + $0x50] sm:$0xff] %v368
  %407 = vst [vmem:[#allocation2 + $0x58] sm:$0xff] %v370
  %408 = vst [vmem:[#allocation2 + $0x60] sm:$0xff] %v299
  %409 = vst [vmem:[#allocation2 + $0x68] sm:$0xff] %v301
  %410 = vst [vmem:[#allocation2 + $0x70] sm:$0xff] %v372
  %411 = vst [vmem:[#allocation2 + $0x78] sm:$0xff] %v374
  %412 = vst [vmem:[#allocation2 + $0x80] sm:$0xff] %v305
  %413 = vst [vmem:[#allocation2 + $0x88] sm:$0xff] %v307
  %414 = vst [vmem:[#allocation2 + $0x90] sm:$0xff] %v378
  %415 = vst [vmem:[#allocation2 + $0x98] sm:$0xff] %v380
  %416 = vst [vmem:[#allocation2 + $0xa0] sm:$0xff] %v309
  %417 = vst [vmem:[#allocation2 + $0xa8] sm:$0xff] %v311
  %418 = vst [vmem:[#allocation2 + $0xb0] sm:$0xff] %v382
  %419 = vst [vmem:[#allocation2 + $0xb8] sm:$0xff] %v384
  %420 = vst [vmem:[#allocation2 + $0xc0] sm:$0xff] %v315
  %421 = vst [vmem:[#allocation2 + $0xc8] sm:$0xff] %v317
  %422 = vst [vmem:[#allocation2 + $0xd0] sm:$0xff] %v388
  %423 = vst [vmem:[#allocation2 + $0xd8] sm:$0xff] %v390
  %424 = vst [vmem:[#allocation2 + $0xe0] sm:$0xff] %v319
  %425 = vst [vmem:[#allocation2 + $0xe8] sm:$0xff] %v321
  %426 = vst [vmem:[#allocation2 + $0xf0] sm:$0xff] %v392
  %427 = vst [vmem:[#allocation2 + $0xf8] sm:$0xff] %v394
  %v428 = vld [vmem:[%s2] sm:$0xff]
  %v429 = vld [vmem:[%s2 + $0x8] sm:$0xff]
  %v430 = vld [vmem:[%s2 + $0x10] sm:$0xff]
  %v431 = vld [vmem:[%s2 + $0x18] sm:$0xff]
  %v432 = vld [vmem:[%s2 + $0x20] sm:$0xff]
  %v433 = vld [vmem:[%s2 + $0x28] sm:$0xff]
  %v434 = vld [vmem:[%s2 + $0x30] sm:$0xff]
  %v435 = vld [vmem:[%s2 + $0x38] sm:$0xff]
  %v436 = vld [vmem:[%s2 + $0x40] sm:$0xff]
  %v437 = vld [vmem:[%s2 + $0x48] sm:$0xff]
  %v438 = vld [vmem:[%s2 + $0x50] sm:$0xff]
  %v439 = vld [vmem:[%s2 + $0x58] sm:$0xff]
  %v440 = vld [vmem:[%s2 + $0x60] sm:$0xff]
  %v441 = vld [vmem:[%s2 + $0x68] sm:$0xff]
  %v442 = vld [vmem:[%s2 + $0x70] sm:$0xff]
  %v443 = vld [vmem:[%s2 + $0x78] sm:$0xff]
  %v444 = vld [vmem:[%s2 + $0x80] sm:$0xff]
  %v445 = vld [vmem:[%s2 + $0x88] sm:$0xff]
  %v446 = vld [vmem:[%s2 + $0x90] sm:$0xff]
  %v447 = vld [vmem:[%s2 + $0x98] sm:$0xff]
  %v448 = vld [vmem:[%s2 + $0xa0] sm:$0xff]
  %v449 = vld [vmem:[%s2 + $0xa8] sm:$0xff]
  %v450 = vld [vmem:[%s2 + $0xb0] sm:$0xff]
  %v451 = vld [vmem:[%s2 + $0xb8] sm:$0xff]
  %v452 = vld [vmem:[%s2 + $0xc0] sm:$0xff]
  %v453 = vld [vmem:[%s2 + $0xc8] sm:$0xff]
  %v454 = vld [vmem:[%s2 + $0xd0] sm:$0xff]
  %v455 = vld [vmem:[%s2 + $0xd8] sm:$0xff]
  %v456 = vld [vmem:[%s2 + $0xe0] sm:$0xff]
  %v457 = vld [vmem:[%s2 + $0xe8] sm:$0xff]
  %v458 = vld [vmem:[%s2 + $0xf0] sm:$0xff]
  %v459 = vld [vmem:[%s2 + $0xf8] sm:$0xff]
  loop: start=0, step=1, limit=8
  $region26: #{conv1dlstm_forward.3} parent=0 // loop_pre_header
    _
  $region27: #{conv1dlstm_forward.3} parent=0 // loop_header
    %s461 = sphi 0, %s465
    %p462 = scmp.ge.s32.totalorder %s461, 8
    %v466 = vphi 0.0, %v748
    %v467 = vphi 0.0, %v746
  $region28: #{conv1dlstm_forward.3} parent=0 // loop_header_branch
    %464 = sbr.rel (%p462) target = $region32
  $region29: #{conv1dlstm_forward.3} parent=0 // loop_body
    %s468 = smul.u32 %s461, 8
    %s469 = sshra.s32 %s468, 3
    %s470 = sand.u32 %s468, 7
    %s471 = smul.u32 %s469, 4
    %s472 = smul.addr %s471, 8
    %s473 = scalar_lea.vmem [#allocation2], %s472
    %v474 = vld [vmem:[%s473] sm:$0xff]
    %v475 = vld [vmem:[%s473 + $0x8] sm:$0xff]
    %v476 = vld [vmem:[%s473 + $0x10] sm:$0xff]
    %v477 = vld [vmem:[%s473 + $0x18] sm:$0xff]
    %v478 = vpack.c.bf16 %v466, %v466
    %v511 = vunpack.c.l.b16 %v428
    %v512 = vunpack.c.h.b16 %v428
    %v513 = vunpack.c.l.b16 %v429
    %v514 = vunpack.c.h.b16 %v429
    %v515 = vunpack.c.l.b16 %v430
    %v516 = vunpack.c.h.b16 %v430
    %v517 = vunpack.c.l.b16 %v431
    %v518 = vunpack.c.h.b16 %v431
    %v519 = vunpack.c.l.b16 %v432
    %v520 = vunpack.c.h.b16 %v432
    %v521 = vunpack.c.l.b16 %v433
    %v522 = vunpack.c.h.b16 %v433
    %v523 = vunpack.c.l.b16 %v434
    %v524 = vunpack.c.h.b16 %v434
    %v525 = vunpack.c.l.b16 %v435
    %v526 = vunpack.c.h.b16 %v435
    %v527 = vunpack.c.l.b16 %v436
    %v528 = vunpack.c.h.b16 %v436
    %v529 = vunpack.c.l.b16 %v437
    %v530 = vunpack.c.h.b16 %v437
    %v531 = vunpack.c.l.b16 %v438
    %v532 = vunpack.c.h.b16 %v438
    %v533 = vunpack.c.l.b16 %v439
    %v534 = vunpack.c.h.b16 %v439
    %v535 = vunpack.c.l.b16 %v440
    %v536 = vunpack.c.h.b16 %v440
    %v537 = vunpack.c.l.b16 %v441
    %v538 = vunpack.c.h.b16 %v441
    %v539 = vunpack.c.l.b16 %v442
    %v540 = vunpack.c.h.b16 %v442
    %v541 = vunpack.c.l.b16 %v443
    %v542 = vunpack.c.h.b16 %v443
    %v543 = vunpack.c.l.b16 %v444
    %v544 = vunpack.c.h.b16 %v444
    %v545 = vunpack.c.l.b16 %v445
    %v546 = vunpack.c.h.b16 %v445
    %v547 = vunpack.c.l.b16 %v446
    %v548 = vunpack.c.h.b16 %v446
    %v549 = vunpack.c.l.b16 %v447
    %v550 = vunpack.c.h.b16 %v447
    %v551 = vunpack.c.l.b16 %v448
    %v552 = vunpack.c.h.b16 %v448
    %v553 = vunpack.c.l.b16 %v449
    %v554 = vunpack.c.h.b16 %v449
    %v555 = vunpack.c.l.b16 %v450
    %v556 = vunpack.c.h.b16 %v450
    %v557 = vunpack.c.l.b16 %v451
    %v558 = vunpack.c.h.b16 %v451
    %v559 = vunpack.c.l.b16 %v452
    %v560 = vunpack.c.h.b16 %v452
    %v561 = vunpack.c.l.b16 %v453
    %v562 = vunpack.c.h.b16 %v453
    %v563 = vunpack.c.l.b16 %v454
    %v564 = vunpack.c.h.b16 %v454
    %v565 = vunpack.c.l.b16 %v455
    %v566 = vunpack.c.h.b16 %v455
    %v567 = vunpack.c.l.b16 %v456
    %v568 = vunpack.c.h.b16 %v456
    %v569 = vunpack.c.l.b16 %v457
    %v570 = vunpack.c.h.b16 %v457
    %v571 = vunpack.c.l.b16 %v458
    %v572 = vunpack.c.h.b16 %v458
    %v573 = vunpack.c.l.b16 %v459
    %v574 = vunpack.c.h.b16 %v459
    %v575 = vpack.c.b16 %v515, %v511
    %v576 = vpack.c.b16 %v516, %v512
    %v577 = vpack.c.b16 %v517, %v513
    %v578 = vpack.c.b16 %v518, %v514
    %v579 = vpack.c.b16 %v523, %v519
    %v580 = vpack.c.b16 %v524, %v520
    %v581 = vpack.c.b16 %v525, %v521
    %v582 = vpack.c.b16 %v526, %v522
    %v583 = vpack.c.b16 %v531, %v527
    %v584 = vpack.c.b16 %v532, %v528
    %v585 = vpack.c.b16 %v533, %v529
    %v586 = vpack.c.b16 %v534, %v530
    %v587 = vpack.c.b16 %v539, %v535
    %v588 = vpack.c.b16 %v540, %v536
    %v589 = vpack.c.b16 %v541, %v537
    %v590 = vpack.c.b16 %v542, %v538
    %v591 = vpack.c.b16 %v547, %v543
    %v592 = vpack.c.b16 %v548, %v544
    %v593 = vpack.c.b16 %v549, %v545
    %v594 = vpack.c.b16 %v550, %v546
    %v595 = vpack.c.b16 %v555, %v551
    %v596 = vpack.c.b16 %v556, %v552
    %v597 = vpack.c.b16 %v557, %v553
    %v598 = vpack.c.b16 %v558, %v554
    %v599 = vpack.c.b16 %v563, %v559
    %v600 = vpack.c.b16 %v564, %v560
    %v601 = vpack.c.b16 %v565, %v561
    %v602 = vpack.c.b16 %v566, %v562
    %v603 = vpack.c.b16 %v571, %v567
    %v604 = vpack.c.b16 %v572, %v568
    %v605 = vpack.c.b16 %v573, %v569
    %v606 = vpack.c.b16 %v574, %v570
    %639 = vmatprep.subr.bf16.mxu0 %v576
    %640 = vmatpush1.bf16.msra.mxu0 %v575
    %641 = vmatprep.subr.bf16.mxu0 %v580
    %642 = vmatpush1.bf16.msra.mxu0 %v579
    %643 = vmatprep.subr.bf16.mxu0 %v584
    %644 = vmatpush1.bf16.msra.mxu0 %v583
    %645 = vmatprep.subr.bf16.mxu0 %v588
    %646 = vmatpush1.bf16.msra.mxu0 %v587
    %647 = vmatprep.subr.bf16.mxu0 %v592
    %648 = vmatpush1.bf16.msra.mxu0 %v591
    %649 = vmatprep.subr.bf16.mxu0 %v596
    %650 = vmatpush1.bf16.msra.mxu0 %v595
    %651 = vmatprep.subr.bf16.mxu0 %v600
    %652 = vmatpush1.bf16.msra.mxu0 %v599
    %653 = vmatprep.subr.bf16.mxu0 %v604
    %654 = vmatpush1.bf16.msra.mxu0 %v603
    %655 = vmatprep.subr.bf16.mxu0 0
    %656 = vmatpush1.bf16.msra.mxu0 0
    %657 = vmatprep.subr.bf16.mxu0 0
    %658 = vmatpush1.bf16.msra.mxu0 0
    %659 = vmatprep.subr.bf16.mxu0 0
    %660 = vmatpush1.bf16.msra.mxu0 0
    %661 = vmatprep.subr.bf16.mxu0 0
    %662 = vmatpush1.bf16.msra.mxu0 0
    %663 = vmatprep.subr.bf16.mxu0 0
    %664 = vmatpush1.bf16.msra.mxu0 0
    %665 = vmatprep.subr.bf16.mxu0 0
    %666 = vmatpush1.bf16.msra.mxu0 0
    %667 = vmatprep.subr.bf16.mxu0 0
    %668 = vmatpush1.bf16.msra.mxu0 0
    %669 = vmatprep.subr.bf16.mxu0 0
    %670 = vmatpush1.bf16.msra.mxu0 0
    %671 = vmatprep.mubr.bf16.mxu0 0
    %672 = vmatmul.mubr.bf16.gmra.mrb[0].mxu0 %v478
    %v673 = vpop.f32.mrb[0].mxu0
    %v674 = vadd.f32 0.0, %v673
    %v675 = vpop.f32.mrb[0].mxu0
    %v676 = vadd.f32 0.0, %v675
    %v677 = vpop.f32.mrb[0].mxu0
    %v678 = vpop.f32.mrb[0].mxu0
    %679 = vdwg.mxu0
    %680 = vmatprep.subr.bf16.mxu0 %v578
    %681 = vmatpush1.bf16.msra.mxu0 %v577
    %682 = vmatprep.subr.bf16.mxu0 %v582
    %683 = vmatpush1.bf16.msra.mxu0 %v581
    %684 = vmatprep.subr.bf16.mxu0 %v586
    %685 = vmatpush1.bf16.msra.mxu0 %v585
    %686 = vmatprep.subr.bf16.mxu0 %v590
    %687 = vmatpush1.bf16.msra.mxu0 %v589
    %688 = vmatprep.subr.bf16.mxu0 %v594
    %689 = vmatpush1.bf16.msra.mxu0 %v593
    %690 = vmatprep.subr.bf16.mxu0 %v598
    %691 = vmatpush1.bf16.msra.mxu0 %v597
    %692 = vmatprep.subr.bf16.mxu0 %v602
    %693 = vmatpush1.bf16.msra.mxu0 %v601
    %694 = vmatprep.subr.bf16.mxu0 %v606
    %695 = vmatpush1.bf16.msra.mxu0 %v605
    %696 = vmatprep.subr.bf16.mxu0 0
    %697 = vmatpush1.bf16.msra.mxu0 0
    %698 = vmatprep.subr.bf16.mxu0 0
    %699 = vmatpush1.bf16.msra.mxu0 0
    %700 = vmatprep.subr.bf16.mxu0 0
    %701 = vmatpush1.bf16.msra.mxu0 0
    %702 = vmatprep.subr.bf16.mxu0 0
    %703 = vmatpush1.bf16.msra.mxu0 0
    %704 = vmatprep.subr.bf16.mxu0 0
    %705 = vmatpush1.bf16.msra.mxu0 0
    %706 = vmatprep.subr.bf16.mxu0 0
    %707 = vmatpush1.bf16.msra.mxu0 0
    %708 = vmatprep.subr.bf16.mxu0 0
    %709 = vmatpush1.bf16.msra.mxu0 0
    %710 = vmatprep.subr.bf16.mxu0 0
    %711 = vmatpush1.bf16.msra.mxu0 0
    %712 = vmatprep.mubr.bf16.mxu0 0
    %713 = vmatmul.mubr.bf16.gmra.mrb[0].mxu0 %v478
    %v714 = vpop.f32.mrb[0].mxu0
    %v715 = vadd.f32 0.0, %v714
    %v716 = vpop.f32.mrb[0].mxu0
    %v717 = vadd.f32 0.0, %v716
    %v718 = vpop.f32.mrb[0].mxu0
    %v719 = vpop.f32.mrb[0].mxu0
    %720 = vdwg.mxu0
    %v721 = vadd.f32 %v474, %v674
    %v722 = vadd.f32 %v475, %v676
    %v723 = vadd.f32 %v476, %v715
    %v724 = vadd.f32 %v477, %v717
    %v725 = vxor.u32 %v721, 2147483648
    %v726 = vmul.f32 %v725, 1.442695
    %v727 = vpow.pop %v726
    %v728 = vadd.f32 %v727, 1.0
    %v729 = vrcp.pop %v728
    %v730 = vmul.f32 1.0, %v729
    %v731 = vxor.u32 %v722, 2147483648
    %v732 = vmul.f32 %v731, 1.442695
    %v733 = vpow.pop %v732
    %v734 = vadd.f32 %v733, 1.0
    %v735 = vrcp.pop %v734
    %v736 = vmul.f32 1.0, %v735
    %v737 = vtanh.pop %v723
    %v738 = vxor.u32 %v724, 2147483648
    %v739 = vmul.f32 %v738, 1.442695
    %v740 = vpow.pop %v739
    %v741 = vadd.f32 %v740, 1.0
    %v742 = vrcp.pop %v741
    %v743 = vmul.f32 1.0, %v742
    %v744 = vmul.f32 %v736, %v467
    %v745 = vmul.f32 %v730, %v737
    %v746 = vadd.f32 %v744, %v745
    %v747 = vtanh.pop %v746
    %v748 = vmul.f32 %v743, %v747
  $region30: #{conv1dlstm_forward.3} parent=0 // loop_footer
    %s465 = sadd.s32 1, %s461
  $region31: #{conv1dlstm_forward.3} parent=0 // loop_footer_branch
    %460 = sbr.rel target = $region27
  $region32: #{conv1dlstm_forward.3} parent=0 // loop_exit
    _
  %v749 = vld [vmem:[%s0 + $0x38] sm:$0xff]
  %v750 = vpack.c.bf16 %v749, %v749
  %v751 = vld [vmem:[%s4] sm:$0xff]
  %v752 = vld [vmem:[%s4 + $0x8] sm:$0xff]
  %v753 = vld [vmem:[%s4 + $0x10] sm:$0xff]
  %v754 = vld [vmem:[%s4 + $0x18] sm:$0xff]
  %v755 = vld [vmem:[%s4 + $0x20] sm:$0xff]
  %v756 = vld [vmem:[%s4 + $0x28] sm:$0xff]
  %v757 = vld [vmem:[%s4 + $0x30] sm:$0xff]
  %v758 = vld [vmem:[%s4 + $0x38] sm:$0xff]
  %v759 = vld [vmem:[%s4 + $0x40] sm:$0xff]
  %v760 = vld [vmem:[%s4 + $0x48] sm:$0xff]
  %v761 = vld [vmem:[%s4 + $0x50] sm:$0xff]
  %v762 = vld [vmem:[%s4 + $0x58] sm:$0xff]
  %v763 = vld [vmem:[%s4 + $0x60] sm:$0xff]
  %v764 = vld [vmem:[%s4 + $0x68] sm:$0xff]
  %v765 = vld [vmem:[%s4 + $0x70] sm:$0xff]
  %v766 = vld [vmem:[%s4 + $0x78] sm:$0xff]
  %v767 = vld [vmem:[%s4 + $0x80] sm:$0xff]
  %v768 = vld [vmem:[%s4 + $0x88] sm:$0xff]
  %v769 = vld [vmem:[%s4 + $0x90] sm:$0xff]
  %v770 = vld [vmem:[%s4 + $0x98] sm:$0xff]
  %v771 = vld [vmem:[%s4 + $0xa0] sm:$0xff]
  %v772 = vld [vmem:[%s4 + $0xa8] sm:$0xff]
  %v773 = vld [vmem:[%s4 + $0xb0] sm:$0xff]
  %v774 = vld [vmem:[%s4 + $0xb8] sm:$0xff]
  %v775 = vld [vmem:[%s4 + $0xc0] sm:$0xff]
  %v776 = vld [vmem:[%s4 + $0xc8] sm:$0xff]
  %v777 = vld [vmem:[%s4 + $0xd0] sm:$0xff]
  %v778 = vld [vmem:[%s4 + $0xd8] sm:$0xff]
  %v779 = vld [vmem:[%s4 + $0xe0] sm:$0xff]
  %v780 = vld [vmem:[%s4 + $0xe8] sm:$0xff]
  %v781 = vld [vmem:[%s4 + $0xf0] sm:$0xff]
  %v782 = vld [vmem:[%s4 + $0xf8] sm:$0xff]
  %v783 = vld [vmem:[%s5] sm:$0xf]
  %v785 = vlaneseq
  %v786 = vshrl.u32 %v785, 7
  %v787 = vsub.s32 0, %v786
  %v788 = vrot.slane %v783, %v787
  %v789 = vlaneseq
  %v790 = vshrl.u32 %v789, 7
  %v791 = vsub.s32 2, %v790
  %v792 = vrot.slane %v783, %v791
  %v793 = vlaneseq
  %v794 = vshrl.u32 %v793, 7
  %v795 = vsub.s32 3, %v794
  %v796 = vrot.slane %v783, %v795
  %v832 = vunpack.c.l.b16 %v751
  %v833 = vunpack.c.h.b16 %v751
  %v834 = vunpack.c.l.b16 %v752
  %v835 = vunpack.c.h.b16 %v752
  %v836 = vunpack.c.l.b16 %v753
  %v837 = vunpack.c.h.b16 %v753
  %v838 = vunpack.c.l.b16 %v754
  %v839 = vunpack.c.h.b16 %v754
  %v840 = vunpack.c.l.b16 %v755
  %v841 = vunpack.c.h.b16 %v755
  %v842 = vunpack.c.l.b16 %v756
  %v843 = vunpack.c.h.b16 %v756
  %v844 = vunpack.c.l.b16 %v757
  %v845 = vunpack.c.h.b16 %v757
  %v846 = vunpack.c.l.b16 %v758
  %v847 = vunpack.c.h.b16 %v758
  %v848 = vunpack.c.l.b16 %v759
  %v849 = vunpack.c.h.b16 %v759
  %v850 = vunpack.c.l.b16 %v760
  %v851 = vunpack.c.h.b16 %v760
  %v852 = vunpack.c.l.b16 %v761
  %v853 = vunpack.c.h.b16 %v761
  %v854 = vunpack.c.l.b16 %v762
  %v855 = vunpack.c.h.b16 %v762
  %v856 = vunpack.c.l.b16 %v763
  %v857 = vunpack.c.h.b16 %v763
  %v858 = vunpack.c.l.b16 %v764
  %v859 = vunpack.c.h.b16 %v764
  %v860 = vunpack.c.l.b16 %v765
  %v861 = vunpack.c.h.b16 %v765
  %v862 = vunpack.c.l.b16 %v766
  %v863 = vunpack.c.h.b16 %v766
  %v864 = vunpack.c.l.b16 %v767
  %v865 = vunpack.c.h.b16 %v767
  %v866 = vunpack.c.l.b16 %v768
  %v867 = vunpack.c.h.b16 %v768
  %v868 = vunpack.c.l.b16 %v769
  %v869 = vunpack.c.h.b16 %v769
  %v870 = vunpack.c.l.b16 %v770
  %v871 = vunpack.c.h.b16 %v770
  %v872 = vunpack.c.l.b16 %v771
  %v873 = vunpack.c.h.b16 %v771
  %v874 = vunpack.c.l.b16 %v772
  %v875 = vunpack.c.h.b16 %v772
  %v876 = vunpack.c.l.b16 %v773
  %v877 = vunpack.c.h.b16 %v773
  %v878 = vunpack.c.l.b16 %v774
  %v879 = vunpack.c.h.b16 %v774
  %v880 = vunpack.c.l.b16 %v775
  %v881 = vunpack.c.h.b16 %v775
  %v882 = vunpack.c.l.b16 %v776
  %v883 = vunpack.c.h.b16 %v776
  %v884 = vunpack.c.l.b16 %v777
  %v885 = vunpack.c.h.b16 %v777
  %v886 = vunpack.c.l.b16 %v778
  %v887 = vunpack.c.h.b16 %v778
  %v888 = vunpack.c.l.b16 %v779
  %v889 = vunpack.c.h.b16 %v779
  %v890 = vunpack.c.l.b16 %v780
  %v891 = vunpack.c.h.b16 %v780
  %v892 = vunpack.c.l.b16 %v781
  %v893 = vunpack.c.h.b16 %v781
  %v894 = vunpack.c.l.b16 %v782
  %v895 = vunpack.c.h.b16 %v782
  %v896 = vpack.c.b16 %v836, %v832
  %v897 = vpack.c.b16 %v837, %v833
  %v898 = vpack.c.b16 %v838, %v834
  %v899 = vpack.c.b16 %v839, %v835
  %v900 = vpack.c.b16 %v844, %v840
  %v901 = vpack.c.b16 %v845, %v841
  %v902 = vpack.c.b16 %v846, %v842
  %v903 = vpack.c.b16 %v847, %v843
  %v904 = vpack.c.b16 %v852, %v848
  %v905 = vpack.c.b16 %v853, %v849
  %v906 = vpack.c.b16 %v854, %v850
  %v907 = vpack.c.b16 %v855, %v851
  %v908 = vpack.c.b16 %v860, %v856
  %v909 = vpack.c.b16 %v861, %v857
  %v910 = vpack.c.b16 %v862, %v858
  %v911 = vpack.c.b16 %v863, %v859
  %v912 = vpack.c.b16 %v868, %v864
  %v913 = vpack.c.b16 %v869, %v865
  %v914 = vpack.c.b16 %v870, %v866
  %v915 = vpack.c.b16 %v871, %v867
  %v916 = vpack.c.b16 %v876, %v872
  %v917 = vpack.c.b16 %v877, %v873
  %v918 = vpack.c.b16 %v878, %v874
  %v919 = vpack.c.b16 %v879, %v875
  %v920 = vpack.c.b16 %v884, %v880
  %v921 = vpack.c.b16 %v885, %v881
  %v922 = vpack.c.b16 %v886, %v882
  %v923 = vpack.c.b16 %v887, %v883
  %v924 = vpack.c.b16 %v892, %v888
  %v925 = vpack.c.b16 %v893, %v889
  %v926 = vpack.c.b16 %v894, %v890
  %v927 = vpack.c.b16 %v895, %v891
  %960 = vmatprep.subr.bf16.mxu0 %v897
  %961 = vmatpush1.bf16.msra.mxu0 %v896
  %962 = vmatprep.subr.bf16.mxu0 %v901
  %963 = vmatpush1.bf16.msra.mxu0 %v900
  %964 = vmatprep.subr.bf16.mxu0 %v905
  %965 = vmatpush1.bf16.msra.mxu0 %v904
  %966 = vmatprep.subr.bf16.mxu0 %v909
  %967 = vmatpush1.bf16.msra.mxu0 %v908
  %968 = vmatprep.subr.bf16.mxu0 %v913
  %969 = vmatpush1.bf16.msra.mxu0 %v912
  %970 = vmatprep.subr.bf16.mxu0 %v917
  %971 = vmatpush1.bf16.msra.mxu0 %v916
  %972 = vmatprep.subr.bf16.mxu0 %v921
  %973 = vmatpush1.bf16.msra.mxu0 %v920
  %974 = vmatprep.subr.bf16.mxu0 %v925
  %975 = vmatpush1.bf16.msra.mxu0 %v924
  %976 = vmatprep.subr.bf16.mxu0 0
  %977 = vmatpush1.bf16.msra.mxu0 0
  %978 = vmatprep.subr.bf16.mxu0 0
  %979 = vmatpush1.bf16.msra.mxu0 0
  %980 = vmatprep.subr.bf16.mxu0 0
  %981 = vmatpush1.bf16.msra.mxu0 0
  %982 = vmatprep.subr.bf16.mxu0 0
  %983 = vmatpush1.bf16.msra.mxu0 0
  %984 = vmatprep.subr.bf16.mxu0 0
  %985 = vmatpush1.bf16.msra.mxu0 0
  %986 = vmatprep.subr.bf16.mxu0 0
  %987 = vmatpush1.bf16.msra.mxu0 0
  %988 = vmatprep.subr.bf16.mxu0 0
  %989 = vmatpush1.bf16.msra.mxu0 0
  %990 = vmatprep.subr.bf16.mxu0 0
  %991 = vmatpush1.bf16.msra.mxu0 0
  %992 = vmatprep.mubr.bf16.mxu0 0
  %993 = vmatmul.mubr.bf16.gmra.mrb[0].mxu0 %v750
  %v994 = vpop.f32.mrb[0].mxu0
  %v995 = vadd.f32 %v788, %v994
  %v996 = vpop.f32.mrb[0].mxu0
  %v997 = vpop.f32.mrb[0].mxu0
  %v998 = vpop.f32.mrb[0].mxu0
  %999 = vdwg.mxu0
  %1000 = vmatprep.subr.bf16.mxu0 %v899
  %1001 = vmatpush1.bf16.msra.mxu0 %v898
  %1002 = vmatprep.subr.bf16.mxu0 %v903
  %1003 = vmatpush1.bf16.msra.mxu0 %v902
  %1004 = vmatprep.subr.bf16.mxu0 %v907
  %1005 = vmatpush1.bf16.msra.mxu0 %v906
  %1006 = vmatprep.subr.bf16.mxu0 %v911
  %1007 = vmatpush1.bf16.msra.mxu0 %v910
  %1008 = vmatprep.subr.bf16.mxu0 %v915
  %1009 = vmatpush1.bf16.msra.mxu0 %v914
  %1010 = vmatprep.subr.bf16.mxu0 %v919
  %1011 = vmatpush1.bf16.msra.mxu0 %v918
  %1012 = vmatprep.subr.bf16.mxu0 %v923
  %1013 = vmatpush1.bf16.msra.mxu0 %v922
  %1014 = vmatprep.subr.bf16.mxu0 %v927
  %1015 = vmatpush1.bf16.msra.mxu0 %v926
  %1016 = vmatprep.subr.bf16.mxu0 0
  %1017 = vmatpush1.bf16.msra.mxu0 0
  %1018 = vmatprep.subr.bf16.mxu0 0
  %1019 = vmatpush1.bf16.msra.mxu0 0
  %1020 = vmatprep.subr.bf16.mxu0 0
  %1021 = vmatpush1.bf16.msra.mxu0 0
  %1022 = vmatprep.subr.bf16.mxu0 0
  %1023 = vmatpush1.bf16.msra.mxu0 0
  %1024 = vmatprep.subr.bf16.mxu0 0
  %1025 = vmatpush1.bf16.msra.mxu0 0
  %1026 = vmatprep.subr.bf16.mxu0 0
  %1027 = vmatpush1.bf16.msra.mxu0 0
  %1028 = vmatprep.subr.bf16.mxu0 0
  %1029 = vmatpush1.bf16.msra.mxu0 0
  %1030 = vmatprep.subr.bf16.mxu0 0
  %1031 = vmatpush1.bf16.msra.mxu0 0
  %1032 = vmatprep.mubr.bf16.mxu0 0
  %1033 = vmatmul.mubr.bf16.gmra.mrb[0].mxu0 %v750
  %v1034 = vpop.f32.mrb[0].mxu0
  %v1035 = vadd.f32 %v792, %v1034
  %v1036 = vpop.f32.mrb[0].mxu0
  %v1037 = vadd.f32 %v796, %v1036
  %v1038 = vpop.f32.mrb[0].mxu0
  %v1039 = vpop.f32.mrb[0].mxu0
  %1040 = vdwg.mxu0
  %v1041 = vxor.u32 %v995, 2147483648
  %v1042 = vmul.f32 %v1041, 1.442695
  %v1043 = vpow.pop %v1042
  %v1044 = vadd.f32 %v1043, 1.0
  %v1045 = vrcp.pop %v1044
  %v1046 = vmul.f32 1.0, %v1045
  %v1047 = vtanh.pop %v1035
  %v1048 = vxor.u32 %v1037, 2147483648
  %v1049 = vmul.f32 %v1048, 1.442695
  %v1050 = vpow.pop %v1049
  %v1051 = vadd.f32 %v1050, 1.0
  %v1052 = vrcp.pop %v1051
  %v1053 = vmul.f32 1.0, %v1052
  %v1054 = vmul.f32 %v1046, %v1047
  %v1055 = vtanh.pop %v1054
  %v1056 = vmul.f32 %v1053, %v1055
  %1057 = vst [vmem:[%s6] sm:$0xff] %v466
  %1058 = vst [vmem:[%s6 + $0x8] sm:$0xff] %v1056
  // Predicated region
  $region33: #{conv1dlstm_forward.3} parent=0 // pred_check
    _
  $region34: #{conv1dlstm_forward.3} parent=0 // pred_check_branch
    %1060 = sbr.rel (0) target = $region36
  $region35: #{conv1dlstm_forward.3} parent=0 // pred_region
    _
  $region36: #{conv1dlstm_forward.3} parent=0 // pred_fallthru
    _
  // Predicated region
  $region37: #{conv1dlstm_forward.3} parent=0 // pred_check
    _
  $region38: #{conv1dlstm_forward.3} parent=0 // pred_check_branch
    %1062 = sbr.rel (0) target = $region40
  $region39: #{conv1dlstm_forward.3} parent=0 // pred_region
    _
  $region40: #{conv1dlstm_forward.3} parent=0 // pred_fallthru
    _

// kernel: conv1dlstm_forward.2
$region0: #{conv1dlstm_forward.2}
  #allocation0 [shape = 'u32[]', space=smem, size = 0x4, offset = 0x4, fixed_abs, tag = 'smem constant byte address 0x4 - core index']
  #allocation1 [shape = 'u32[144,128]{1,0:T(1,128)}', space=vmem, size = 0x12000, scoped, tag = 'internal scratch']
  #allocation2 [shape = 'f32[32,128]{1,0:T(8,128)}', space=vmem, size = 0x4000, scoped, tag = 'scratch operand']
  %s0 = inlined_call_operand.vmem [shape: f32[48,224], index: 0, kind: input, shape index: {}]
  %s1 = inlined_call_operand.vmem [shape: bf16[5,224,128], index: 1, kind: input, shape index: {}]
  %s2 = inlined_call_operand.vmem [shape: f32[1,128], index: 2, kind: input, shape index: {}]
  %s3 = inlined_call_operand.vmem [shape: bf16[5,128,128], index: 3, kind: input, shape index: {}]
  %s4 = inlined_call_operand.vmem [shape: f32[1,128], index: 4, kind: input, shape index: {}]
  %s5 = inlined_call_operand.vmem [shape: f32[2,8,128], index: 5, kind: output, shape index: {}]
  %s6 = sld [smem:[#allocation0]]
  $region30: #{conv1dlstm_forward.2} parent=0
    _
  %s8 = ssub.s32 1, %s6
  %s9 = scalar_select 0, %s8, %s6
  // Predicated region
  $region2: #{conv1dlstm_forward.2} parent=0 // pred_check
    _
  $region3: #{conv1dlstm_forward.2} parent=0 // pred_check_branch
    %11 = sbr.rel (0) target = $region5
  $region4: #{conv1dlstm_forward.2} parent=0 // pred_region
    _
  $region5: #{conv1dlstm_forward.2} parent=0 // pred_fallthru
    _
  // Predicated region
  $region6: #{conv1dlstm_forward.2} parent=0 // pred_check
    _
  $region7: #{conv1dlstm_forward.2} parent=0 // pred_check_branch
    %13 = sbr.rel (0) target = $region9
  $region8: #{conv1dlstm_forward.2} parent=0 // pred_region
    _
  $region9: #{conv1dlstm_forward.2} parent=0 // pred_fallthru
    _
  // Predicated region
  $region10: #{conv1dlstm_forward.2} parent=0 // pred_check
    _
  $region11: #{conv1dlstm_forward.2} parent=0 // pred_check_branch
    %15 = sbr.rel (0) target = $region13
  $region12: #{conv1dlstm_forward.2} parent=0 // pred_region
    _
  $region13: #{conv1dlstm_forward.2} parent=0 // pred_fallthru
    _
  // Predicated region
  $region14: #{conv1dlstm_forward.2} parent=0 // pred_check
    _
  $region15: #{conv1dlstm_forward.2} parent=0 // pred_check_branch
    %17 = sbr.rel (0) target = $region17
  $region16: #{conv1dlstm_forward.2} parent=0 // pred_region
    _
  $region17: #{conv1dlstm_forward.2} parent=0 // pred_fallthru
    _
  // Predicated region
  $region18: #{conv1dlstm_forward.2} parent=0 // pred_check
    _
  $region19: #{conv1dlstm_forward.2} parent=0 // pred_check_branch
    %19 = sbr.rel (0) target = $region21
  $region20: #{conv1dlstm_forward.2} parent=0 // pred_region
    _
  $region21: #{conv1dlstm_forward.2} parent=0 // pred_fallthru
    _
  %v21 = vld [vmem:[%s2] sm:$0x1]
  %v23 = vlaneseq
  %v24 = vshrl.u32 %v23, 7
  %v25 = vsub.s32 0, %v24
  %v26 = vrot.slane %v21, %v25
  %v28 = vadd.f32 %v26, 0.0
  %v29 = vld [vmem:[%s0] sm:$0xff]
  %v30 = vld [vmem:[%s0 + $0x8] sm:$0xff]
  %v31 = vld [vmem:[%s0 + $0x10] sm:$0xff]
  %v32 = vld [vmem:[%s0 + $0x18] sm:$0xff]
  %v33 = vld [vmem:[%s0 + $0x20] sm:$0xff]
  %v34 = vld [vmem:[%s0 + $0x28] sm:$0xff]
  %v35 = vld [vmem:[%s0 + $0x30] sm:$0xff]
  %v36 = vld [vmem:[%s0 + $0x38] sm:$0xff]
  %v37 = vld [vmem:[%s0 + $0x40] sm:$0xff]
  %v38 = vld [vmem:[%s0 + $0x48] sm:$0xff]
  %v39 = vld [vmem:[%s0 + $0x50] sm:$0xf]
  %v40 = vld [vmem:[%s0 + $0x58] sm:$0xf]
  %v41 = vpack.c.bf16 %v31, %v29
  %v42 = vpack.c.bf16 %v32, %v30
  %v43 = vpack.c.bf16 %v35, %v33
  %v44 = vpack.c.bf16 %v36, %v34
  %v45 = vpack.c.bf16 %v39, %v37
  %v46 = vpack.c.bf16 %v40, %v38
  %v47 = vld [vmem:[%s1] sm:$0xf]
  %v48 = vld [vmem:[%s1 + $0x4] sm:$0xf]
  %v49 = vld [vmem:[%s1 + $0x8] sm:$0xf]
  %v50 = vld [vmem:[%s1 + $0xc] sm:$0xf]
  %v51 = vld [vmem:[%s1 + $0x10] sm:$0xf]
  %v52 = vld [vmem:[%s1 + $0x14] sm:$0xf]
  %v53 = vld [vmem:[%s1 + $0x18] sm:$0xf]
  %v54 = vld [vmem:[%s1 + $0x1c] sm:$0xf]
  %v55 = vld [vmem:[%s1 + $0x20] sm:$0xf]
  %v56 = vld [vmem:[%s1 + $0x24] sm:$0xf]
  %v57 = vld [vmem:[%s1 + $0x28] sm:$0xf]
  %v58 = vld [vmem:[%s1 + $0x2c] sm:$0xf]
  %v59 = vld [vmem:[%s1 + $0x30] sm:$0xf]
  %v60 = vld [vmem:[%s1 + $0x34] sm:$0xf]
  %v61 = vld [vmem:[%s1 + $0x38] sm:$0xf]
  %v62 = vld [vmem:[%s1 + $0x3c] sm:$0xf]
  %v63 = vld [vmem:[%s1 + $0x40] sm:$0xf]
  %v64 = vld [vmem:[%s1 + $0x44] sm:$0xf]
  %v65 = vld [vmem:[%s1 + $0x48] sm:$0xf]
  %v66 = vld [vmem:[%s1 + $0x4c] sm:$0xf]
  %v67 = vld [vmem:[%s1 + $0x50] sm:$0xf]
  %v68 = vld [vmem:[%s1 + $0x54] sm:$0xf]
  %v69 = vld [vmem:[%s1 + $0x58] sm:$0xf]
  %v70 = vld [vmem:[%s1 + $0x5c] sm:$0xf]
  %v71 = vld [vmem:[%s1 + $0x60] sm:$0xf]
  %v72 = vld [vmem:[%s1 + $0x64] sm:$0xf]
  %v73 = vld [vmem:[%s1 + $0x68] sm:$0xf]
  %v74 = vld [vmem:[%s1 + $0x6c] sm:$0xf]
  %v103 = vunpack.c.l.b16 %v47
  %v104 = vunpack.c.l.b16 %v48
  %v105 = vunpack.c.l.b16 %v49
  %v106 = vunpack.c.l.b16 %v50
  %v107 = vunpack.c.l.b16 %v51
  %v108 = vunpack.c.l.b16 %v52
  %v109 = vunpack.c.l.b16 %v53
  %v110 = vunpack.c.l.b16 %v54
  %v111 = vunpack.c.l.b16 %v55
  %v112 = vunpack.c.l.b16 %v56
  %v113 = vunpack.c.l.b16 %v57
  %v114 = vunpack.c.l.b16 %v58
  %v115 = vunpack.c.l.b16 %v59
  %v116 = vunpack.c.l.b16 %v60
  %v117 = vunpack.c.l.b16 %v61
  %v118 = vunpack.c.l.b16 %v62
  %v119 = vunpack.c.l.b16 %v63
  %v120 = vunpack.c.l.b16 %v64
  %v121 = vunpack.c.l.b16 %v65
  %v122 = vunpack.c.l.b16 %v66
  %v123 = vunpack.c.l.b16 %v67
  %v124 = vunpack.c.l.b16 %v68
  %v125 = vunpack.c.l.b16 %v69
  %v126 = vunpack.c.l.b16 %v70
  %v127 = vunpack.c.l.b16 %v71
  %v128 = vunpack.c.l.b16 %v72
  %v129 = vunpack.c.l.b16 %v73
  %v130 = vunpack.c.l.b16 %v74
  %v131 = vpack.c.b16 %v104, %v103
  %v132 = vpack.c.b16 %v106, %v105
  %v133 = vpack.c.b16 %v108, %v107
  %v134 = vpack.c.b16 %v110, %v109
  %v135 = vpack.c.b16 %v112, %v111
  %v136 = vpack.c.b16 %v114, %v113
  %v137 = vpack.c.b16 %v116, %v115
  %v138 = vpack.c.b16 %v118, %v117
  %v139 = vpack.c.b16 %v120, %v119
  %v140 = vpack.c.b16 %v122, %v121
  %v141 = vpack.c.b16 %v124, %v123
  %v142 = vpack.c.b16 %v126, %v125
  %v143 = vpack.c.b16 %v128, %v127
  %v144 = vpack.c.b16 %v130, %v129
  %vm159 = vcmask 785408
  %v161 = vsel %vm159, %v42, 0
  %v164 = vsel %vm159, %v44, 0
  %v167 = vsel %vm159, %v46, 0
  %169 = vmatprep.subr.bf16.mxu0 0
  %170 = vmatpush1.bf16.msra.mxu0 %v131
  %171 = vmatprep.subr.bf16.mxu0 0
  %172 = vmatpush1.bf16.msra.mxu0 %v132
  %173 = vmatprep.subr.bf16.mxu0 0
  %174 = vmatpush1.bf16.msra.mxu0 %v133
  %175 = vmatprep.subr.bf16.mxu0 0
  %176 = vmatpush1.bf16.msra.mxu0 %v134
  %177 = vmatprep.subr.bf16.mxu0 0
  %178 = vmatpush1.bf16.msra.mxu0 %v135
  %179 = vmatprep.subr.bf16.mxu0 0
  %180 = vmatpush1.bf16.msra.mxu0 %v136
  %181 = vmatprep.subr.bf16.mxu0 0
  %182 = vmatpush1.bf16.msra.mxu0 %v137
  %183 = vmatprep.subr.bf16.mxu0 0
  %184 = vmatpush1.bf16.msra.mxu0 %v138
  %185 = vmatprep.subr.bf16.mxu0 0
  %186 = vmatpush1.bf16.msra.mxu0 %v139
  %187 = vmatprep.subr.bf16.mxu0 0
  %188 = vmatpush1.bf16.msra.mxu0 %v140
  %189 = vmatprep.subr.bf16.mxu0 0
  %190 = vmatpush1.bf16.msra.mxu0 %v141
  %191 = vmatprep.subr.bf16.mxu0 0
  %192 = vmatpush1.bf16.msra.mxu0 %v142
  %193 = vmatprep.subr.bf16.mxu0 0
  %194 = vmatpush1.bf16.msra.mxu0 %v143
  %195 = vmatprep.subr.bf16.mxu0 0
  %196 = vmatpush1.bf16.msra.mxu0 %v144
  %197 = vmatprep.subr.bf16.mxu0 0
  %198 = vmatpush1.bf16.msra.mxu0 0
  %199 = vmatprep.subr.bf16.mxu0 0
  %200 = vmatpush1.bf16.msra.mxu0 0
  %201 = vmatprep.mubr.bf16.mxu0 %v161
  %202 = vmatmul.mubr.bf16.gmra.mrb[0].mxu0 %v41
  %v203 = vpop.f32.mrb[0].mxu0
  %v204 = vadd.f32 0.0, %v203
  %v205 = vpop.f32.mrb[0].mxu0
  %v206 = vpop.f32.mrb[0].mxu0
  %v207 = vadd.f32 0.0, %v206
  %v208 = vpop.f32.mrb[0].mxu0
  %209 = vmatprep.mubr.bf16.mxu0 %v164
  %210 = vmatmul.mubr.bf16.gmra.mrb[0].mxu0 %v43
  %v211 = vpop.f32.mrb[0].mxu0
  %v212 = vpop.f32.mrb[0].mxu0
  %v213 = vpop.f32.mrb[0].mxu0
  %v214 = vadd.f32 0.0, %v213
  %v215 = vpop.f32.mrb[0].mxu0
  %216 = vmatprep.mubr.bf16.mxu0 %v167
  %217 = vmatmul.mubr.bf16.gmra.mrb[0].mxu0 %v45
  %v218 = vpop.f32.mrb[0].mxu0
  %v219 = vadd.f32 0.0, %v218
  %v220 = vpop.f32.mrb[0].mxu0
  %v221 = vpop.f32.mrb[0].mxu0
  %v222 = vpop.f32.mrb[0].mxu0
  %223 = vdwg.mxu0
  %v224 = vadd.f32 %v28, %v204
  %v225 = vadd.f32 %v28, %v207
  %v226 = vadd.f32 %v28, %v214
  %v227 = vadd.f32 %v28, %v219
  %v228 = vld [vmem:[%s0] sm:$0xfe]
  %v229 = vld [vmem:[%s0 + $0x8] sm:$0xfe]
  %v230 = vld [vmem:[%s0 + $0x50] sm:$0x1f]
  %v231 = vld [vmem:[%s0 + $0x58] sm:$0x1f]
  %v232 = vpack.c.bf16 %v31, %v228
  %v233 = vpack.c.bf16 %v32, %v229
  %v234 = vpack.c.bf16 %v230, %v37
  %v235 = vpack.c.bf16 %v231, %v38
  %s236 = scalar_lea.vmem %s1, 112
  %v237 = vld [vmem:[%s236] sm:$0xf]
  %v238 = vld [vmem:[%s236 + $0x4] sm:$0xf]
  %v239 = vld [vmem:[%s236 + $0x8] sm:$0xf]
  %v240 = vld [vmem:[%s236 + $0xc] sm:$0xf]
  %v241 = vld [vmem:[%s236 + $0x10] sm:$0xf]
  %v242 = vld [vmem:[%s236 + $0x14] sm:$0xf]
  %v243 = vld [vmem:[%s236 + $0x18] sm:$0xf]
  %v244 = vld [vmem:[%s236 + $0x1c] sm:$0xf]
  %v245 = vld [vmem:[%s236 + $0x20] sm:$0xf]
  %v246 = vld [vmem:[%s236 + $0x24] sm:$0xf]
  %v247 = vld [vmem:[%s236 + $0x28] sm:$0xf]
  %v248 = vld [vmem:[%s236 + $0x2c] sm:$0xf]
  %v249 = vld [vmem:[%s236 + $0x30] sm:$0xf]
  %v250 = vld [vmem:[%s236 + $0x34] sm:$0xf]
  %v251 = vld [vmem:[%s236 + $0x38] sm:$0xf]
  %v252 = vld [vmem:[%s236 + $0x3c] sm:$0xf]
  %v253 = vld [vmem:[%s236 + $0x40] sm:$0xf]
  %v254 = vld [vmem:[%s236 + $0x44] sm:$0xf]
  %v255 = vld [vmem:[%s236 + $0x48] sm:$0xf]
  %v256 = vld [vmem:[%s236 + $0x4c] sm:$0xf]
  %v257 = vld [vmem:[%s236 + $0x50] sm:$0xf]
  %v258 = vld [vmem:[%s236 + $0x54] sm:$0xf]
  %v259 = vld [vmem:[%s236 + $0x58] sm:$0xf]
  %v260 = vld [vmem:[%s236 + $0x5c] sm:$0xf]
  %v261 = vld [vmem:[%s236 + $0x60] sm:$0xf]
  %v262 = vld [vmem:[%s236 + $0x64] sm:$0xf]
  %v263 = vld [vmem:[%s236 + $0x68] sm:$0xf]
  %v264 = vld [vmem:[%s236 + $0x6c] sm:$0xf]
  %vm265 = vsmask.f32 7424
  %v267 = vshrl.u32 %v232, 16
  %v269 = vshll.u32 %v232, 16
  %v271 = vrot.slane %v269, 1
  %v272 = vor.u32 %v267, %v271
  %v274 = vshll.u32 %v43, 16
  %v276 = vrot.slane %v274, 1
  %v277 = vsel %vm265, %v272, %v276
  %v279 = vshrl.u32 %v233, 16
  %v281 = vshll.u32 %v233, 16
  %v283 = vrot.slane %v281, 1
  %v284 = vor.u32 %v279, %v283
  %v285 = vshll.u32 %v44, 16
  %v287 = vrot.slane %v285, 1
  %v288 = vsel %vm265, %v284, %v287
  %v289 = vshrl.u32 %v43, 16
  %v291 = vor.u32 %v289, %v276
  %v293 = vshll.u32 %v234, 16
  %v295 = vrot.slane %v293, 1
  %v296 = vsel %vm265, %v291, %v295
  %v297 = vshrl.u32 %v44, 16
  %v299 = vor.u32 %v297, %v287
  %v301 = vshll.u32 %v235, 16
  %v303 = vrot.slane %v301, 1
  %v304 = vsel %vm265, %v299, %v303
  %v305 = vshrl.u32 %v234, 16
  %v307 = vor.u32 %v305, %v295
  %v308 = vshrl.u32 %v235, 16
  %v310 = vor.u32 %v308, %v303
  %v342 = vunpack.c.l.b16 %v237
  %v343 = vunpack.c.l.b16 %v238
  %v344 = vunpack.c.l.b16 %v239
  %v345 = vunpack.c.l.b16 %v240
  %v346 = vunpack.c.l.b16 %v241
  %v347 = vunpack.c.l.b16 %v242
  %v348 = vunpack.c.l.b16 %v243
  %v349 = vunpack.c.l.b16 %v244
  %v350 = vunpack.c.l.b16 %v245
  %v351 = vunpack.c.l.b16 %v246
  %v352 = vunpack.c.l.b16 %v247
  %v353 = vunpack.c.l.b16 %v248
  %v354 = vunpack.c.l.b16 %v249
  %v355 = vunpack.c.l.b16 %v250
  %v356 = vunpack.c.l.b16 %v251
  %v357 = vunpack.c.l.b16 %v252
  %v358 = vunpack.c.l.b16 %v253
  %v359 = vunpack.c.l.b16 %v254
  %v360 = vunpack.c.l.b16 %v255
  %v361 = vunpack.c.l.b16 %v256
  %v362 = vunpack.c.l.b16 %v257
  %v363 = vunpack.c.l.b16 %v258
  %v364 = vunpack.c.l.b16 %v259
  %v365 = vunpack.c.l.b16 %v260
  %v366 = vunpack.c.l.b16 %v261
  %v367 = vunpack.c.l.b16 %v262
  %v368 = vunpack.c.l.b16 %v263
  %v369 = vunpack.c.l.b16 %v264
  %v370 = vpack.c.b16 %v343, %v342
  %v371 = vpack.c.b16 %v345, %v344
  %v372 = vpack.c.b16 %v347, %v346
  %v373 = vpack.c.b16 %v349, %v348
  %v374 = vpack.c.b16 %v351, %v350
  %v375 = vpack.c.b16 %v353, %v352
  %v376 = vpack.c.b16 %v355, %v354
  %v377 = vpack.c.b16 %v357, %v356
  %v378 = vpack.c.b16 %v359, %v358
  %v379 = vpack.c.b16 %v361, %v360
  %v380 = vpack.c.b16 %v363, %v362
  %v381 = vpack.c.b16 %v365, %v364
  %v382 = vpack.c.b16 %v367, %v366
  %v383 = vpack.c.b16 %v369, %v368
  %v399 = vsel %vm159, %v288, 0
  %v402 = vsel %vm159, %v304, 0
  %v405 = vsel %vm159, %v310, 0
  %407 = vmatprep.subr.bf16.mxu0 0
  %408 = vmatpush1.bf16.msra.mxu0 %v370
  %409 = vmatprep.subr.bf16.mxu0 0
  %410 = vmatpush1.bf16.msra.mxu0 %v371
  %411 = vmatprep.subr.bf16.mxu0 0
  %412 = vmatpush1.bf16.msra.mxu0 %v372
  %413 = vmatprep.subr.bf16.mxu0 0
  %414 = vmatpush1.bf16.msra.mxu0 %v373
  %415 = vmatprep.subr.bf16.mxu0 0
  %416 = vmatpush1.bf16.msra.mxu0 %v374
  %417 = vmatprep.subr.bf16.mxu0 0
  %418 = vmatpush1.bf16.msra.mxu0 %v375
  %419 = vmatprep.subr.bf16.mxu0 0
  %420 = vmatpush1.bf16.msra.mxu0 %v376
  %421 = vmatprep.subr.bf16.mxu0 0
  %422 = vmatpush1.bf16.msra.mxu0 %v377
  %423 = vmatprep.subr.bf16.mxu0 0
  %424 = vmatpush1.bf16.msra.mxu0 %v378
  %425 = vmatprep.subr.bf16.mxu0 0
  %426 = vmatpush1.bf16.msra.mxu0 %v379
  %427 = vmatprep.subr.bf16.mxu0 0
  %428 = vmatpush1.bf16.msra.mxu0 %v380
  %429 = vmatprep.subr.bf16.mxu0 0
  %430 = vmatpush1.bf16.msra.mxu0 %v381
  %431 = vmatprep.subr.bf16.mxu0 0
  %432 = vmatpush1.bf16.msra.mxu0 %v382
  %433 = vmatprep.subr.bf16.mxu0 0
  %434 = vmatpush1.bf16.msra.mxu0 %v383
  %435 = vmatprep.subr.bf16.mxu0 0
  %436 = vmatpush1.bf16.msra.mxu0 0
  %437 = vmatprep.subr.bf16.mxu0 0
  %438 = vmatpush1.bf16.msra.mxu0 0
  %439 = vmatprep.mubr.bf16.mxu0 %v399
  %440 = vmatmul.mubr.bf16.gmra.mrb[0].mxu0 %v277
  %v441 = vpop.f32.mrb[0].mxu0
  %v442 = vadd.f32 0.0, %v441
  %v443 = vpop.f32.mrb[0].mxu0
  %v444 = vpop.f32.mrb[0].mxu0
  %v445 = vadd.f32 0.0, %v444
  %v446 = vpop.f32.mrb[0].mxu0
  %447 = vmatprep.mubr.bf16.mxu0 %v402
  %448 = vmatmul.mubr.bf16.gmra.mrb[0].mxu0 %v296
  %v449 = vpop.f32.mrb[0].mxu0
  %v450 = vpop.f32.mrb[0].mxu0
  %v451 = vpop.f32.mrb[0].mxu0
  %v452 = vadd.f32 0.0, %v451
  %v453 = vpop.f32.mrb[0].mxu0
  %454 = vmatprep.mubr.bf16.mxu0 %v405
  %455 = vmatmul.mubr.bf16.gmra.mrb[0].mxu0 %v307
  %v456 = vpop.f32.mrb[0].mxu0
  %v457 = vadd.f32 0.0, %v456
  %v458 = vpop.f32.mrb[0].mxu0
  %v459 = vpop.f32.mrb[0].mxu0
  %v460 = vpop.f32.mrb[0].mxu0
  %461 = vdwg.mxu0
  %v462 = vadd.f32 %v224, %v442
  %v463 = vadd.f32 %v225, %v445
  %v464 = vadd.f32 %v226, %v452
  %v465 = vadd.f32 %v227, %v457
  %v466 = vld [vmem:[%s0] sm:$0xfc]
  %v467 = vld [vmem:[%s0 + $0x8] sm:$0xfc]
  %v468 = vld [vmem:[%s0 + $0x50] sm:$0x3f]
  %v469 = vld [vmem:[%s0 + $0x58] sm:$0x3f]
  %v470 = vpack.c.bf16 %v31, %v466
  %v471 = vpack.c.bf16 %v32, %v467
  %v472 = vpack.c.bf16 %v468, %v37
  %v473 = vpack.c.bf16 %v469, %v38
  %s474 = scalar_lea.vmem %s1, 224
  %v475 = vld [vmem:[%s474] sm:$0xf]
  %v476 = vld [vmem:[%s474 + $0x4] sm:$0xf]
  %v477 = vld [vmem:[%s474 + $0x8] sm:$0xf]
  %v478 = vld [vmem:[%s474 + $0xc] sm:$0xf]
  %v479 = vld [vmem:[%s474 + $0x10] sm:$0xf]
  %v480 = vld [vmem:[%s474 + $0x14] sm:$0xf]
  %v481 = vld [vmem:[%s474 + $0x18] sm:$0xf]
  %v482 = vld [vmem:[%s474 + $0x1c] sm:$0xf]
  %v483 = vld [vmem:[%s474 + $0x20] sm:$0xf]
  %v484 = vld [vmem:[%s474 + $0x24] sm:$0xf]
  %v485 = vld [vmem:[%s474 + $0x28] sm:$0xf]
  %v486 = vld [vmem:[%s474 + $0x2c] sm:$0xf]
  %v487 = vld [vmem:[%s474 + $0x30] sm:$0xf]
  %v488 = vld [vmem:[%s474 + $0x34] sm:$0xf]
  %v489 = vld [vmem:[%s474 + $0x38] sm:$0xf]
  %v490 = vld [vmem:[%s474 + $0x3c] sm:$0xf]
  %v491 = vld [vmem:[%s474 + $0x40] sm:$0xf]
  %v492 = vld [vmem:[%s474 + $0x44] sm:$0xf]
  %v493 = vld [vmem:[%s474 + $0x48] sm:$0xf]
  %v494 = vld [vmem:[%s474 + $0x4c] sm:$0xf]
  %v495 = vld [vmem:[%s474 + $0x50] sm:$0xf]
  %v496 = vld [vmem:[%s474 + $0x54] sm:$0xf]
  %v497 = vld [vmem:[%s474 + $0x58] sm:$0xf]
  %v498 = vld [vmem:[%s474 + $0x5c] sm:$0xf]
  %v499 = vld [vmem:[%s474 + $0x60] sm:$0xf]
  %v500 = vld [vmem:[%s474 + $0x64] sm:$0xf]
  %v501 = vld [vmem:[%s474 + $0x68] sm:$0xf]
  %v502 = vld [vmem:[%s474 + $0x6c] sm:$0xf]
  %vm509 = vcmask 1046528
  %v510 = vrot.slane %v470, 1
  %v511 = vrot.slane %v43, 1
  %v512 = vsel %vm509, %v510, %v511
  %v513 = vrot.slane %v471, 1
  %v514 = vrot.slane %v44, 1
  %v515 = vsel %vm509, %v513, %v514
  %v516 = vrot.slane %v472, 1
  %v517 = vsel %vm509, %v511, %v516
  %v518 = vrot.slane %v473, 1
  %v519 = vsel %vm509, %v514, %v518
  %v551 = vunpack.c.l.b16 %v475
  %v552 = vunpack.c.l.b16 %v476
  %v553 = vunpack.c.l.b16 %v477
  %v554 = vunpack.c.l.b16 %v478
  %v555 = vunpack.c.l.b16 %v479
  %v556 = vunpack.c.l.b16 %v480
  %v557 = vunpack.c.l.b16 %v481
  %v558 = vunpack.c.l.b16 %v482
  %v559 = vunpack.c.l.b16 %v483
  %v560 = vunpack.c.l.b16 %v484
  %v561 = vunpack.c.l.b16 %v485
  %v562 = vunpack.c.l.b16 %v486
  %v563 = vunpack.c.l.b16 %v487
  %v564 = vunpack.c.l.b16 %v488
  %v565 = vunpack.c.l.b16 %v489
  %v566 = vunpack.c.l.b16 %v490
  %v567 = vunpack.c.l.b16 %v491
  %v568 = vunpack.c.l.b16 %v492
  %v569 = vunpack.c.l.b16 %v493
  %v570 = vunpack.c.l.b16 %v494
  %v571 = vunpack.c.l.b16 %v495
  %v572 = vunpack.c.l.b16 %v496
  %v573 = vunpack.c.l.b16 %v497
  %v574 = vunpack.c.l.b16 %v498
  %v575 = vunpack.c.l.b16 %v499
  %v576 = vunpack.c.l.b16 %v500
  %v577 = vunpack.c.l.b16 %v501
  %v578 = vunpack.c.l.b16 %v502
  %v579 = vpack.c.b16 %v552, %v551
  %v580 = vpack.c.b16 %v554, %v553
  %v581 = vpack.c.b16 %v556, %v555
  %v582 = vpack.c.b16 %v558, %v557
  %v583 = vpack.c.b16 %v560, %v559
  %v584 = vpack.c.b16 %v562, %v561
  %v585 = vpack.c.b16 %v564, %v563
  %v586 = vpack.c.b16 %v566, %v565
  %v587 = vpack.c.b16 %v568, %v567
  %v588 = vpack.c.b16 %v570, %v569
  %v589 = vpack.c.b16 %v572, %v571
  %v590 = vpack.c.b16 %v574, %v573
  %v591 = vpack.c.b16 %v576, %v575
  %v592 = vpack.c.b16 %v578, %v577
  %v608 = vsel %vm159, %v515, 0
  %v611 = vsel %vm159, %v519, 0
  %v614 = vsel %vm159, %v518, 0
  %616 = vmatprep.subr.bf16.mxu0 0
  %617 = vmatpush1.bf16.msra.mxu0 %v579
  %618 = vmatprep.subr.bf16.mxu0 0
  %619 = vmatpush1.bf16.msra.mxu0 %v580
  %620 = vmatprep.subr.bf16.mxu0 0
  %621 = vmatpush1.bf16.msra.mxu0 %v581
  %622 = vmatprep.subr.bf16.mxu0 0
  %623 = vmatpush1.bf16.msra.mxu0 %v582
  %624 = vmatprep.subr.bf16.mxu0 0
  %625 = vmatpush1.bf16.msra.mxu0 %v583
  %626 = vmatprep.subr.bf16.mxu0 0
  %627 = vmatpush1.bf16.msra.mxu0 %v584
  %628 = vmatprep.subr.bf16.mxu0 0
  %629 = vmatpush1.bf16.msra.mxu0 %v585
  %630 = vmatprep.subr.bf16.mxu0 0
  %631 = vmatpush1.bf16.msra.mxu0 %v586
  %632 = vmatprep.subr.bf16.mxu0 0
  %633 = vmatpush1.bf16.msra.mxu0 %v587
  %634 = vmatprep.subr.bf16.mxu0 0
  %635 = vmatpush1.bf16.msra.mxu0 %v588
  %636 = vmatprep.subr.bf16.mxu0 0
  %637 = vmatpush1.bf16.msra.mxu0 %v589
  %638 = vmatprep.subr.bf16.mxu0 0
  %639 = vmatpush1.bf16.msra.mxu0 %v590
  %640 = vmatprep.subr.bf16.mxu0 0
  %641 = vmatpush1.bf16.msra.mxu0 %v591
  %642 = vmatprep.subr.bf16.mxu0 0
  %643 = vmatpush1.bf16.msra.mxu0 %v592
  %644 = vmatprep.subr.bf16.mxu0 0
  %645 = vmatpush1.bf16.msra.mxu0 0
  %646 = vmatprep.subr.bf16.mxu0 0
  %647 = vmatpush1.bf16.msra.mxu0 0
  %648 = vmatprep.mubr.bf16.mxu0 %v608
  %649 = vmatmul.mubr.bf16.gmra.mrb[0].mxu0 %v512
  %v650 = vpop.f32.mrb[0].mxu0
  %v651 = vadd.f32 0.0, %v650
  %v652 = vpop.f32.mrb[0].mxu0
  %v653 = vpop.f32.mrb[0].mxu0
  %v654 = vadd.f32 0.0, %v653
  %v655 = vpop.f32.mrb[0].mxu0
  %656 = vmatprep.mubr.bf16.mxu0 %v611
  %657 = vmatmul.mubr.bf16.gmra.mrb[0].mxu0 %v517
  %v658 = vpop.f32.mrb[0].mxu0
  %v659 = vpop.f32.mrb[0].mxu0
  %v660 = vpop.f32.mrb[0].mxu0
  %v661 = vadd.f32 0.0, %v660
  %v662 = vpop.f32.mrb[0].mxu0
  %663 = vmatprep.mubr.bf16.mxu0 %v614
  %664 = vmatmul.mubr.bf16.gmra.mrb[0].mxu0 %v516
  %v665 = vpop.f32.mrb[0].mxu0
  %v666 = vadd.f32 0.0, %v665
  %v667 = vpop.f32.mrb[0].mxu0
  %v668 = vpop.f32.mrb[0].mxu0
  %v669 = vpop.f32.mrb[0].mxu0
  %670 = vdwg.mxu0
  %v671 = vadd.f32 %v462, %v651
  %v672 = vadd.f32 %v463, %v654
  %v673 = vadd.f32 %v464, %v661
  %v674 = vadd.f32 %v465, %v666
  %v675 = vld [vmem:[%s0] sm:$0xf8]
  %v676 = vld [vmem:[%s0 + $0x8] sm:$0xf8]
  %v677 = vld [vmem:[%s0 + $0x50] sm:$0x7f]
  %v678 = vld [vmem:[%s0 + $0x58] sm:$0x7f]
  %v679 = vpack.c.bf16 %v31, %v675
  %v680 = vpack.c.bf16 %v32, %v676
  %v681 = vpack.c.bf16 %v677, %v37
  %v682 = vpack.c.bf16 %v678, %v38
  %s683 = scalar_lea.vmem %s1, 336
  %v684 = vld [vmem:[%s683] sm:$0xf]
  %v685 = vld [vmem:[%s683 + $0x4] sm:$0xf]
  %v686 = vld [vmem:[%s683 + $0x8] sm:$0xf]
  %v687 = vld [vmem:[%s683 + $0xc] sm:$0xf]
  %v688 = vld [vmem:[%s683 + $0x10] sm:$0xf]
  %v689 = vld [vmem:[%s683 + $0x14] sm:$0xf]
  %v690 = vld [vmem:[%s683 + $0x18] sm:$0xf]
  %v691 = vld [vmem:[%s683 + $0x1c] sm:$0xf]
  %v692 = vld [vmem:[%s683 + $0x20] sm:$0xf]
  %v693 = vld [vmem:[%s683 + $0x24] sm:$0xf]
  %v694 = vld [vmem:[%s683 + $0x28] sm:$0xf]
  %v695 = vld [vmem:[%s683 + $0x2c] sm:$0xf]
  %v696 = vld [vmem:[%s683 + $0x30] sm:$0xf]
  %v697 = vld [vmem:[%s683 + $0x34] sm:$0xf]
  %v698 = vld [vmem:[%s683 + $0x38] sm:$0xf]
  %v699 = vld [vmem:[%s683 + $0x3c] sm:$0xf]
  %v700 = vld [vmem:[%s683 + $0x40] sm:$0xf]
  %v701 = vld [vmem:[%s683 + $0x44] sm:$0xf]
  %v702 = vld [vmem:[%s683 + $0x48] sm:$0xf]
  %v703 = vld [vmem:[%s683 + $0x4c] sm:$0xf]
  %v704 = vld [vmem:[%s683 + $0x50] sm:$0xf]
  %v705 = vld [vmem:[%s683 + $0x54] sm:$0xf]
  %v706 = vld [vmem:[%s683 + $0x58] sm:$0xf]
  %v707 = vld [vmem:[%s683 + $0x5c] sm:$0xf]
  %v708 = vld [vmem:[%s683 + $0x60] sm:$0xf]
  %v709 = vld [vmem:[%s683 + $0x64] sm:$0xf]
  %v710 = vld [vmem:[%s683 + $0x68] sm:$0xf]
  %v711 = vld [vmem:[%s683 + $0x6c] sm:$0xf]
  %vm712 = vsmask.f32 6400
  %v714 = vshrl.u32 %v679, 16
  %v716 = vrot.slane %v714, 1
  %v717 = vshll.u32 %v679, 16
  %v719 = vrot.slane %v717, 2
  %v720 = vor.u32 %v716, %v719
  %v721 = vrot.slane %v289, 1
  %v722 = vrot.slane %v274, 2
  %v723 = vor.u32 %v721, %v722
  %v724 = vsel %vm712, %v720, %v723
  %v726 = vshrl.u32 %v680, 16
  %v728 = vrot.slane %v726, 1
  %v729 = vshll.u32 %v680, 16
  %v731 = vrot.slane %v729, 2
  %v732 = vor.u32 %v728, %v731
  %v733 = vrot.slane %v297, 1
  %v734 = vrot.slane %v285, 2
  %v735 = vor.u32 %v733, %v734
  %v736 = vsel %vm712, %v732, %v735
  %v738 = vshrl.u32 %v681, 16
  %v740 = vrot.slane %v738, 1
  %v741 = vshll.u32 %v681, 16
  %v743 = vrot.slane %v741, 2
  %v744 = vor.u32 %v740, %v743
  %v745 = vsel %vm712, %v723, %v744
  %v747 = vshrl.u32 %v682, 16
  %v749 = vrot.slane %v747, 1
  %v750 = vshll.u32 %v682, 16
  %v752 = vrot.slane %v750, 2
  %v753 = vor.u32 %v749, %v752
  %v754 = vsel %vm712, %v735, %v753
  %v786 = vunpack.c.l.b16 %v684
  %v787 = vunpack.c.l.b16 %v685
  %v788 = vunpack.c.l.b16 %v686
  %v789 = vunpack.c.l.b16 %v687
  %v790 = vunpack.c.l.b16 %v688
  %v791 = vunpack.c.l.b16 %v689
  %v792 = vunpack.c.l.b16 %v690
  %v793 = vunpack.c.l.b16 %v691
  %v794 = vunpack.c.l.b16 %v692
  %v795 = vunpack.c.l.b16 %v693
  %v796 = vunpack.c.l.b16 %v694
  %v797 = vunpack.c.l.b16 %v695
  %v798 = vunpack.c.l.b16 %v696
  %v799 = vunpack.c.l.b16 %v697
  %v800 = vunpack.c.l.b16 %v698
  %v801 = vunpack.c.l.b16 %v699
  %v802 = vunpack.c.l.b16 %v700
  %v803 = vunpack.c.l.b16 %v701
  %v804 = vunpack.c.l.b16 %v702
  %v805 = vunpack.c.l.b16 %v703
  %v806 = vunpack.c.l.b16 %v704
  %v807 = vunpack.c.l.b16 %v705
  %v808 = vunpack.c.l.b16 %v706
  %v809 = vunpack.c.l.b16 %v707
  %v810 = vunpack.c.l.b16 %v708
  %v811 = vunpack.c.l.b16 %v709
  %v812 = vunpack.c.l.b16 %v710
  %v813 = vunpack.c.l.b16 %v711
  %v814 = vpack.c.b16 %v787, %v786
  %v815 = vpack.c.b16 %v789, %v788
  %v816 = vpack.c.b16 %v791, %v790
  %v817 = vpack.c.b16 %v793, %v792
  %v818 = vpack.c.b16 %v795, %v794
  %v819 = vpack.c.b16 %v797, %v796
  %v820 = vpack.c.b16 %v799, %v798
  %v821 = vpack.c.b16 %v801, %v800
  %v822 = vpack.c.b16 %v803, %v802
  %v823 = vpack.c.b16 %v805, %v804
  %v824 = vpack.c.b16 %v807, %v806
  %v825 = vpack.c.b16 %v809, %v808
  %v826 = vpack.c.b16 %v811, %v810
  %v827 = vpack.c.b16 %v813, %v812
  %v843 = vsel %vm159, %v736, 0
  %v846 = vsel %vm159, %v754, 0
  %v849 = vsel %vm159, %v753, 0
  %851 = vmatprep.subr.bf16.mxu0 0
  %852 = vmatpush1.bf16.msra.mxu0 %v814
  %853 = vmatprep.subr.bf16.mxu0 0
  %854 = vmatpush1.bf16.msra.mxu0 %v815
  %855 = vmatprep.subr.bf16.mxu0 0
  %856 = vmatpush1.bf16.msra.mxu0 %v816
  %857 = vmatprep.subr.bf16.mxu0 0
  %858 = vmatpush1.bf16.msra.mxu0 %v817
  %859 = vmatprep.subr.bf16.mxu0 0
  %860 = vmatpush1.bf16.msra.mxu0 %v818
  %861 = vmatprep.subr.bf16.mxu0 0
  %862 = vmatpush1.bf16.msra.mxu0 %v819
  %863 = vmatprep.subr.bf16.mxu0 0
  %864 = vmatpush1.bf16.msra.mxu0 %v820
  %865 = vmatprep.subr.bf16.mxu0 0
  %866 = vmatpush1.bf16.msra.mxu0 %v821
  %867 = vmatprep.subr.bf16.mxu0 0
  %868 = vmatpush1.bf16.msra.mxu0 %v822
  %869 = vmatprep.subr.bf16.mxu0 0
  %870 = vmatpush1.bf16.msra.mxu0 %v823
  %871 = vmatprep.subr.bf16.mxu0 0
  %872 = vmatpush1.bf16.msra.mxu0 %v824
  %873 = vmatprep.subr.bf16.mxu0 0
  %874 = vmatpush1.bf16.msra.mxu0 %v825
  %875 = vmatprep.subr.bf16.mxu0 0
  %876 = vmatpush1.bf16.msra.mxu0 %v826
  %877 = vmatprep.subr.bf16.mxu0 0
  %878 = vmatpush1.bf16.msra.mxu0 %v827
  %879 = vmatprep.subr.bf16.mxu0 0
  %880 = vmatpush1.bf16.msra.mxu0 0
  %881 = vmatprep.subr.bf16.mxu0 0
  %882 = vmatpush1.bf16.msra.mxu0 0
  %883 = vmatprep.mubr.bf16.mxu0 %v843
  %884 = vmatmul.mubr.bf16.gmra.mrb[0].mxu0 %v724
  %v885 = vpop.f32.mrb[0].mxu0
  %v886 = vadd.f32 0.0, %v885
  %v887 = vpop.f32.mrb[0].mxu0
  %v888 = vpop.f32.mrb[0].mxu0
  %v889 = vadd.f32 0.0, %v888
  %v890 = vpop.f32.mrb[0].mxu0
  %891 = vmatprep.mubr.bf16.mxu0 %v846
  %892 = vmatmul.mubr.bf16.gmra.mrb[0].mxu0 %v745
  %v893 = vpop.f32.mrb[0].mxu0
  %v894 = vpop.f32.mrb[0].mxu0
  %v895 = vpop.f32.mrb[0].mxu0
  %v896 = vadd.f32 0.0, %v895
  %v897 = vpop.f32.mrb[0].mxu0
  %898 = vmatprep.mubr.bf16.mxu0 %v849
  %899 = vmatmul.mubr.bf16.gmra.mrb[0].mxu0 %v744
  %v900 = vpop.f32.mrb[0].mxu0
  %v901 = vadd.f32 0.0, %v900
  %v902 = vpop.f32.mrb[0].mxu0
  %v903 = vpop.f32.mrb[0].mxu0
  %v904 = vpop.f32.mrb[0].mxu0
  %905 = vdwg.mxu0
  %v906 = vadd.f32 %v671, %v886
  %v907 = vadd.f32 %v672, %v889
  %v908 = vadd.f32 %v673, %v896
  %v909 = vadd.f32 %v674, %v901
  %v910 = vld [vmem:[%s0] sm:$0xf0]
  %v911 = vld [vmem:[%s0 + $0x8] sm:$0xf0]
  %v912 = vld [vmem:[%s0 + $0x50] sm:$0xff]
  %v913 = vld [vmem:[%s0 + $0x58] sm:$0xff]
  %v914 = vpack.c.bf16 %v31, %v910
  %v915 = vpack.c.bf16 %v32, %v911
  %v916 = vpack.c.bf16 %v912, %v37
  %v917 = vpack.c.bf16 %v913, %v38
  %s918 = scalar_lea.vmem %s1, 448
  %v919 = vld [vmem:[%s918] sm:$0xf]
  %v920 = vld [vmem:[%s918 + $0x4] sm:$0xf]
  %v921 = vld [vmem:[%s918 + $0x8] sm:$0xf]
  %v922 = vld [vmem:[%s918 + $0xc] sm:$0xf]
  %v923 = vld [vmem:[%s918 + $0x10] sm:$0xf]
  %v924 = vld [vmem:[%s918 + $0x14] sm:$0xf]
  %v925 = vld [vmem:[%s918 + $0x18] sm:$0xf]
  %v926 = vld [vmem:[%s918 + $0x1c] sm:$0xf]
  %v927 = vld [vmem:[%s918 + $0x20] sm:$0xf]
  %v928 = vld [vmem:[%s918 + $0x24] sm:$0xf]
  %v929 = vld [vmem:[%s918 + $0x28] sm:$0xf]
  %v930 = vld [vmem:[%s918 + $0x2c] sm:$0xf]
  %v931 = vld [vmem:[%s918 + $0x30] sm:$0xf]
  %v932 = vld [vmem:[%s918 + $0x34] sm:$0xf]
  %v933 = vld [vmem:[%s918 + $0x38] sm:$0xf]
  %v934 = vld [vmem:[%s918 + $0x3c] sm:$0xf]
  %v935 = vld [vmem:[%s918 + $0x40] sm:$0xf]
  %v936 = vld [vmem:[%s918 + $0x44] sm:$0xf]
  %v937 = vld [vmem:[%s918 + $0x48] sm:$0xf]
  %v938 = vld [vmem:[%s918 + $0x4c] sm:$0xf]
  %v939 = vld [vmem:[%s918 + $0x50] sm:$0xf]
  %v940 = vld [vmem:[%s918 + $0x54] sm:$0xf]
  %v941 = vld [vmem:[%s918 + $0x58] sm:$0xf]
  %v942 = vld [vmem:[%s918 + $0x5c] sm:$0xf]
  %v943 = vld [vmem:[%s918 + $0x60] sm:$0xf]
  %v944 = vld [vmem:[%s918 + $0x64] sm:$0xf]
  %v945 = vld [vmem:[%s918 + $0x68] sm:$0xf]
  %v946 = vld [vmem:[%s918 + $0x6c] sm:$0xf]
  %vm951 = vcmask 1045504
  %v952 = vrot.slane %v914, 2
  %v953 = vrot.slane %v43, 2
  %v954 = vsel %vm951, %v952, %v953
  %v955 = vrot.slane %v915, 2
  %v956 = vrot.slane %v44, 2
  %v957 = vsel %vm951, %v955, %v956
  %v958 = vrot.slane %v916, 2
  %v959 = vsel %vm951, %v953, %v958
  %v960 = vrot.slane %v917, 2
  %v961 = vsel %vm951, %v956, %v960
  %v993 = vunpack.c.l.b16 %v919
  %v994 = vunpack.c.l.b16 %v920
  %v995 = vunpack.c.l.b16 %v921
  %v996 = vunpack.c.l.b16 %v922
  %v997 = vunpack.c.l.b16 %v923
  %v998 = vunpack.c.l.b16 %v924
  %v999 = vunpack.c.l.b16 %v925
  %v1000 = vunpack.c.l.b16 %v926
  %v1001 = vunpack.c.l.b16 %v927
  %v1002 = vunpack.c.l.b16 %v928
  %v1003 = vunpack.c.l.b16 %v929
  %v1004 = vunpack.c.l.b16 %v930
  %v1005 = vunpack.c.l.b16 %v931
  %v1006 = vunpack.c.l.b16 %v932
  %v1007 = vunpack.c.l.b16 %v933
  %v1008 = vunpack.c.l.b16 %v934
  %v1009 = vunpack.c.l.b16 %v935
  %v1010 = vunpack.c.l.b16 %v936
  %v1011 = vunpack.c.l.b16 %v937
  %v1012 = vunpack.c.l.b16 %v938
  %v1013 = vunpack.c.l.b16 %v939
  %v1014 = vunpack.c.l.b16 %v940
  %v1015 = vunpack.c.l.b16 %v941
  %v1016 = vunpack.c.l.b16 %v942
  %v1017 = vunpack.c.l.b16 %v943
  %v1018 = vunpack.c.l.b16 %v944
  %v1019 = vunpack.c.l.b16 %v945
  %v1020 = vunpack.c.l.b16 %v946
  %v1021 = vpack.c.b16 %v994, %v993
  %v1022 = vpack.c.b16 %v996, %v995
  %v1023 = vpack.c.b16 %v998, %v997
  %v1024 = vpack.c.b16 %v1000, %v999
  %v1025 = vpack.c.b16 %v1002, %v1001
  %v1026 = vpack.c.b16 %v1004, %v1003
  %v1027 = vpack.c.b16 %v1006, %v1005
  %v1028 = vpack.c.b16 %v1008, %v1007
  %v1029 = vpack.c.b16 %v1010, %v1009
  %v1030 = vpack.c.b16 %v1012, %v1011
  %v1031 = vpack.c.b16 %v1014, %v1013
  %v1032 = vpack.c.b16 %v1016, %v1015
  %v1033 = vpack.c.b16 %v1018, %v1017
  %v1034 = vpack.c.b16 %v1020, %v1019
  %v1050 = vsel %vm159, %v957, 0
  %v1053 = vsel %vm159, %v961, 0
  %v1056 = vsel %vm159, %v960, 0
  %1058 = vmatprep.subr.bf16.mxu0 0
  %1059 = vmatpush1.bf16.msra.mxu0 %v1021
  %1060 = vmatprep.subr.bf16.mxu0 0
  %1061 = vmatpush1.bf16.msra.mxu0 %v1022
  %1062 = vmatprep.subr.bf16.mxu0 0
  %1063 = vmatpush1.bf16.msra.mxu0 %v1023
  %1064 = vmatprep.subr.bf16.mxu0 0
  %1065 = vmatpush1.bf16.msra.mxu0 %v1024
  %1066 = vmatprep.subr.bf16.mxu0 0
  %1067 = vmatpush1.bf16.msra.mxu0 %v1025
  %1068 = vmatprep.subr.bf16.mxu0 0
  %1069 = vmatpush1.bf16.msra.mxu0 %v1026
  %1070 = vmatprep.subr.bf16.mxu0 0
  %1071 = vmatpush1.bf16.msra.mxu0 %v1027
  %1072 = vmatprep.subr.bf16.mxu0 0
  %1073 = vmatpush1.bf16.msra.mxu0 %v1028
  %1074 = vmatprep.subr.bf16.mxu0 0
  %1075 = vmatpush1.bf16.msra.mxu0 %v1029
  %1076 = vmatprep.subr.bf16.mxu0 0
  %1077 = vmatpush1.bf16.msra.mxu0 %v1030
  %1078 = vmatprep.subr.bf16.mxu0 0
  %1079 = vmatpush1.bf16.msra.mxu0 %v1031
  %1080 = vmatprep.subr.bf16.mxu0 0
  %1081 = vmatpush1.bf16.msra.mxu0 %v1032
  %1082 = vmatprep.subr.bf16.mxu0 0
  %1083 = vmatpush1.bf16.msra.mxu0 %v1033
  %1084 = vmatprep.subr.bf16.mxu0 0
  %1085 = vmatpush1.bf16.msra.mxu0 %v1034
  %1086 = vmatprep.subr.bf16.mxu0 0
  %1087 = vmatpush1.bf16.msra.mxu0 0
  %1088 = vmatprep.subr.bf16.mxu0 0
  %1089 = vmatpush1.bf16.msra.mxu0 0
  %1090 = vmatprep.mubr.bf16.mxu0 %v1050
  %1091 = vmatmul.mubr.bf16.gmra.mrb[0].mxu0 %v954
  %v1092 = vpop.f32.mrb[0].mxu0
  %v1093 = vadd.f32 0.0, %v1092
  %v1094 = vpop.f32.mrb[0].mxu0
  %v1095 = vpop.f32.mrb[0].mxu0
  %v1096 = vadd.f32 0.0, %v1095
  %v1097 = vpop.f32.mrb[0].mxu0
  %1098 = vmatprep.mubr.bf16.mxu0 %v1053
  %1099 = vmatmul.mubr.bf16.gmra.mrb[0].mxu0 %v959
  %v1100 = vpop.f32.mrb[0].mxu0
  %v1101 = vpop.f32.mrb[0].mxu0
  %v1102 = vpop.f32.mrb[0].mxu0
  %v1103 = vadd.f32 0.0, %v1102
  %v1104 = vpop.f32.mrb[0].mxu0
  %1105 = vmatprep.mubr.bf16.mxu0 %v1056
  %1106 = vmatmul.mubr.bf16.gmra.mrb[0].mxu0 %v958
  %v1107 = vpop.f32.mrb[0].mxu0
  %v1108 = vadd.f32 0.0, %v1107
  %v1109 = vpop.f32.mrb[0].mxu0
  %v1110 = vpop.f32.mrb[0].mxu0
  %v1111 = vpop.f32.mrb[0].mxu0
  %1112 = vdwg.mxu0
  %v1113 = vadd.f32 %v906, %v1093
  %v1114 = vadd.f32 %v907, %v1096
  %v1115 = vadd.f32 %v908, %v1103
  %v1116 = vadd.f32 %v909, %v1108
  %1117 = vst [vmem:[#allocation2] sm:$0xff] 0.0
  %1118 = vst [vmem:[#allocation2 + $0x8] sm:$0xff] 0.0
  %1119 = vst [vmem:[#allocation2 + $0x10] sm:$0xff] 0.0
  %1120 = vst [vmem:[#allocation2 + $0x18] sm:$0xff] 0.0
  %v1123 = vcombine.high %v1113, %v1113
  %v1125 = vunpack.c.l.s4 1983009808
  %v1126 = vunpack.c.0.s8 %v1125
  %v1127 = vlaneseq
  %v1128 = vshrl.u32 %v1127, 7
  %v1129 = vsub.s32 %v1126, %v1128
  %v1130 = vrot.slane %v1113, %v1129
  %v1132 = vunpack.c.l.s4 1983009808
  %v1133 = vunpack.c.0.s8 %v1132
  %v1134 = vlaneseq
  %v1135 = vshrl.u32 %v1134, 7
  %v1136 = vsub.s32 %v1133, %v1135
  %v1137 = vrot.slane %v1123, %v1136
  %v1138 = vcombine.high %v1130, %v1130
  %v1139 = vcombine.high %v1137, %v1137
  %v1140 = vcombine.high %v1114, %v1114
  %v1142 = vunpack.c.l.s4 1983009808
  %v1143 = vunpack.c.0.s8 %v1142
  %v1144 = vlaneseq
  %v1145 = vshrl.u32 %v1144, 7
  %v1146 = vsub.s32 %v1143, %v1145
  %v1147 = vrot.slane %v1114, %v1146
  %v1149 = vunpack.c.l.s4 1983009808
  %v1150 = vunpack.c.0.s8 %v1149
  %v1151 = vlaneseq
  %v1152 = vshrl.u32 %v1151, 7
  %v1153 = vsub.s32 %v1150, %v1152
  %v1154 = vrot.slane %v1140, %v1153
  %v1155 = vcombine.high %v1147, %v1147
  %v1156 = vcombine.high %v1154, %v1154
  %vm1165 = vcmask 1041408
  %v1166 = vsel %vm1165, %v1130, -inf
  %v1167 = vrot.slane %v1166, 4
  %v1168 = vmax.f32 %v1166, %v1167
  %v1169 = vrot.slane %v1168, 2
  %v1170 = vmax.f32 %v1168, %v1169
  %v1171 = vrot.slane %v1170, 1
  %v1172 = vmax.f32 %v1170, %v1171
  %v1173 = vsel %vm1165, %v1138, -inf
  %v1174 = vrot.slane %v1173, 4
  %v1175 = vmax.f32 %v1173, %v1174
  %v1176 = vrot.slane %v1175, 2
  %v1177 = vmax.f32 %v1175, %v1176
  %v1178 = vrot.slane %v1177, 1
  %v1179 = vmax.f32 %v1177, %v1178
  %v1180 = vsel %vm1165, %v1137, -inf
  %v1181 = vrot.slane %v1180, 4
  %v1182 = vmax.f32 %v1180, %v1181
  %v1183 = vrot.slane %v1182, 2
  %v1184 = vmax.f32 %v1182, %v1183
  %v1185 = vrot.slane %v1184, 1
  %v1186 = vmax.f32 %v1184, %v1185
  %v1187 = vsel %vm1165, %v1139, -inf
  %v1188 = vrot.slane %v1187, 4
  %v1189 = vmax.f32 %v1187, %v1188
  %v1190 = vrot.slane %v1189, 2
  %v1191 = vmax.f32 %v1189, %v1190
  %v1192 = vrot.slane %v1191, 1
  %v1193 = vmax.f32 %v1191, %v1192
  %v1194 = vsel %vm1165, %v1147, -inf
  %v1195 = vrot.slane %v1194, 4
  %v1196 = vmax.f32 %v1194, %v1195
  %v1197 = vrot.slane %v1196, 2
  %v1198 = vmax.f32 %v1196, %v1197
  %v1199 = vrot.slane %v1198, 1
  %v1200 = vmax.f32 %v1198, %v1199
  %v1201 = vsel %vm1165, %v1155, -inf
  %v1202 = vrot.slane %v1201, 4
  %v1203 = vmax.f32 %v1201, %v1202
  %v1204 = vrot.slane %v1203, 2
  %v1205 = vmax.f32 %v1203, %v1204
  %v1206 = vrot.slane %v1205, 1
  %v1207 = vmax.f32 %v1205, %v1206
  %v1208 = vsel %vm1165, %v1154, -inf
  %v1209 = vrot.slane %v1208, 4
  %v1210 = vmax.f32 %v1208, %v1209
  %v1211 = vrot.slane %v1210, 2
  %v1212 = vmax.f32 %v1210, %v1211
  %v1213 = vrot.slane %v1212, 1
  %v1214 = vmax.f32 %v1212, %v1213
  %v1215 = vsel %vm1165, %v1156, -inf
  %v1216 = vrot.slane %v1215, 4
  %v1217 = vmax.f32 %v1215, %v1216
  %v1218 = vrot.slane %v1217, 2
  %v1219 = vmax.f32 %v1217, %v1218
  %v1220 = vrot.slane %v1219, 1
  %v1221 = vmax.f32 %v1219, %v1220
  %v1222 = vmax.f32 %v1172, 0.0
  %v1223 = vmax.f32 %v1179, 0.0
  %v1224 = vmax.f32 %v1186, 0.0
  %v1225 = vmax.f32 %v1193, 0.0
  %v1226 = vmax.f32 %v1200, 0.0
  %v1227 = vmax.f32 %v1207, 0.0
  %v1228 = vmax.f32 %v1214, 0.0
  %v1229 = vmax.f32 %v1221, 0.0
  %vm1238 = vcmask 1041409
  %v1239 = vsel %vm1238, %v1223, %v1222
  %vm1240 = vcmask 1042434
  %v1241 = vsel %vm1240, %v1224, %v1239
  %vm1242 = vcmask 1043459
  %v1243 = vsel %vm1242, %v1225, %v1241
  %vm1244 = vcmask 1044484
  %v1245 = vsel %vm1244, %v1226, %v1243
  %vm1246 = vcmask 1045509
  %v1247 = vsel %vm1246, %v1227, %v1245
  %vm1248 = vcmask 1046534
  %v1249 = vsel %vm1248, %v1228, %v1247
  %vm1250 = vcmask 1047559
  %v1251 = vsel %vm1250, %v1229, %v1249
  %1253 = vst [vmem:[#allocation2 + $0x2] sm:$0xff] %v1251
  %v1256 = vcombine.high %v1115, %v1115
  %v1258 = vunpack.c.l.s4 1983009808
  %v1259 = vunpack.c.0.s8 %v1258
  %v1260 = vlaneseq
  %v1261 = vshrl.u32 %v1260, 7
  %v1262 = vsub.s32 %v1259, %v1261
  %v1263 = vrot.slane %v1115, %v1262
  %v1265 = vunpack.c.l.s4 1983009808
  %v1266 = vunpack.c.0.s8 %v1265
  %v1267 = vlaneseq
  %v1268 = vshrl.u32 %v1267, 7
  %v1269 = vsub.s32 %v1266, %v1268
  %v1270 = vrot.slane %v1256, %v1269
  %v1271 = vcombine.high %v1263, %v1263
  %v1272 = vcombine.high %v1270, %v1270
  %v1273 = vcombine.high %v1116, %v1116
  %v1275 = vunpack.c.l.s4 1983009808
  %v1276 = vunpack.c.0.s8 %v1275
  %v1277 = vlaneseq
  %v1278 = vshrl.u32 %v1277, 7
  %v1279 = vsub.s32 %v1276, %v1278
  %v1280 = vrot.slane %v1116, %v1279
  %v1282 = vunpack.c.l.s4 1983009808
  %v1283 = vunpack.c.0.s8 %v1282
  %v1284 = vlaneseq
  %v1285 = vshrl.u32 %v1284, 7
  %v1286 = vsub.s32 %v1283, %v1285
  %v1287 = vrot.slane %v1273, %v1286
  %v1288 = vcombine.high %v1280, %v1280
  %v1289 = vcombine.high %v1287, %v1287
  %v1298 = vsel %vm1165, %v1263, -inf
  %v1299 = vrot.slane %v1298, 4
  %v1300 = vmax.f32 %v1298, %v1299
  %v1301 = vrot.slane %v1300, 2
  %v1302 = vmax.f32 %v1300, %v1301
  %v1303 = vrot.slane %v1302, 1
  %v1304 = vmax.f32 %v1302, %v1303
  %v1305 = vsel %vm1165, %v1271, -inf
  %v1306 = vrot.slane %v1305, 4
  %v1307 = vmax.f32 %v1305, %v1306
  %v1308 = vrot.slane %v1307, 2
  %v1309 = vmax.f32 %v1307, %v1308
  %v1310 = vrot.slane %v1309, 1
  %v1311 = vmax.f32 %v1309, %v1310
  %v1312 = vsel %vm1165, %v1270, -inf
  %v1313 = vrot.slane %v1312, 4
  %v1314 = vmax.f32 %v1312, %v1313
  %v1315 = vrot.slane %v1314, 2
  %v1316 = vmax.f32 %v1314, %v1315
  %v1317 = vrot.slane %v1316, 1
  %v1318 = vmax.f32 %v1316, %v1317
  %v1319 = vsel %vm1165, %v1272, -inf
  %v1320 = vrot.slane %v1319, 4
  %v1321 = vmax.f32 %v1319, %v1320
  %v1322 = vrot.slane %v1321, 2
  %v1323 = vmax.f32 %v1321, %v1322
  %v1324 = vrot.slane %v1323, 1
  %v1325 = vmax.f32 %v1323, %v1324
  %v1326 = vsel %vm1165, %v1280, -inf
  %v1327 = vrot.slane %v1326, 4
  %v1328 = vmax.f32 %v1326, %v1327
  %v1329 = vrot.slane %v1328, 2
  %v1330 = vmax.f32 %v1328, %v1329
  %v1331 = vrot.slane %v1330, 1
  %v1332 = vmax.f32 %v1330, %v1331
  %v1333 = vsel %vm1165, %v1288, -inf
  %v1334 = vrot.slane %v1333, 4
  %v1335 = vmax.f32 %v1333, %v1334
  %v1336 = vrot.slane %v1335, 2
  %v1337 = vmax.f32 %v1335, %v1336
  %v1338 = vrot.slane %v1337, 1
  %v1339 = vmax.f32 %v1337, %v1338
  %v1340 = vsel %vm1165, %v1287, -inf
  %v1341 = vrot.slane %v1340, 4
  %v1342 = vmax.f32 %v1340, %v1341
  %v1343 = vrot.slane %v1342, 2
  %v1344 = vmax.f32 %v1342, %v1343
  %v1345 = vrot.slane %v1344, 1
  %v1346 = vmax.f32 %v1344, %v1345
  %v1347 = vsel %vm1165, %v1289, -inf
  %v1348 = vrot.slane %v1347, 4
  %v1349 = vmax.f32 %v1347, %v1348
  %v1350 = vrot.slane %v1349, 2
  %v1351 = vmax.f32 %v1349, %v1350
  %v1352 = vrot.slane %v1351, 1
  %v1353 = vmax.f32 %v1351, %v1352
  %v1354 = vmax.f32 %v1304, 0.0
  %v1355 = vmax.f32 %v1311, 0.0
  %v1356 = vmax.f32 %v1318, 0.0
  %v1357 = vmax.f32 %v1325, 0.0
  %v1358 = vmax.f32 %v1332, 0.0
  %v1359 = vmax.f32 %v1339, 0.0
  %v1360 = vmax.f32 %v1346, 0.0
  %v1361 = vmax.f32 %v1353, 0.0
  %v1370 = vsel %vm1238, %v1355, %v1354
  %v1371 = vsel %vm1240, %v1356, %v1370
  %v1372 = vsel %vm1242, %v1357, %v1371
  %v1373 = vsel %vm1244, %v1358, %v1372
  %v1374 = vsel %vm1246, %v1359, %v1373
  %v1375 = vsel %vm1248, %v1360, %v1374
  %v1376 = vsel %vm1250, %v1361, %v1375
  %1378 = vst [vmem:[#allocation2 + $0x12] sm:$0xff] %v1376
  %v1379 = vld [vmem:[%s4] sm:$0x1]
  %v1381 = vlaneseq
  %v1382 = vshrl.u32 %v1381, 7
  %v1383 = vsub.s32 0, %v1382
  %v1384 = vrot.slane %v1379, %v1383
  %v1386 = vadd.f32 %v1384, 0.0
  %v1387 = vld [vmem:[#allocation2] sm:$0xff]
  %v1388 = vld [vmem:[#allocation2 + $0x8] sm:$0xff]
  %v1389 = vld [vmem:[#allocation2 + $0x10] sm:$0xff]
  %v1390 = vld [vmem:[#allocation2 + $0x18] sm:$0xf]
  %v1391 = vpack.c.bf16 %v1388, %v1387
  %v1392 = vpack.c.bf16 %v1390, %v1389
  %v1393 = vld [vmem:[%s3] sm:$0xf]
  %v1394 = vld [vmem:[%s3 + $0x4] sm:$0xf]
  %v1395 = vld [vmem:[%s3 + $0x8] sm:$0xf]
  %v1396 = vld [vmem:[%s3 + $0xc] sm:$0xf]
  %v1397 = vld [vmem:[%s3 + $0x10] sm:$0xf]
  %v1398 = vld [vmem:[%s3 + $0x14] sm:$0xf]
  %v1399 = vld [vmem:[%s3 + $0x18] sm:$0xf]
  %v1400 = vld [vmem:[%s3 + $0x1c] sm:$0xf]
  %v1401 = vld [vmem:[%s3 + $0x20] sm:$0xf]
  %v1402 = vld [vmem:[%s3 + $0x24] sm:$0xf]
  %v1403 = vld [vmem:[%s3 + $0x28] sm:$0xf]
  %v1404 = vld [vmem:[%s3 + $0x2c] sm:$0xf]
  %v1405 = vld [vmem:[%s3 + $0x30] sm:$0xf]
  %v1406 = vld [vmem:[%s3 + $0x34] sm:$0xf]
  %v1407 = vld [vmem:[%s3 + $0x38] sm:$0xf]
  %v1408 = vld [vmem:[%s3 + $0x3c] sm:$0xf]
  %v1425 = vunpack.c.l.b16 %v1393
  %v1426 = vunpack.c.l.b16 %v1394
  %v1427 = vunpack.c.l.b16 %v1395
  %v1428 = vunpack.c.l.b16 %v1396
  %v1429 = vunpack.c.l.b16 %v1397
  %v1430 = vunpack.c.l.b16 %v1398
  %v1431 = vunpack.c.l.b16 %v1399
  %v1432 = vunpack.c.l.b16 %v1400
  %v1433 = vunpack.c.l.b16 %v1401
  %v1434 = vunpack.c.l.b16 %v1402
  %v1435 = vunpack.c.l.b16 %v1403
  %v1436 = vunpack.c.l.b16 %v1404
  %v1437 = vunpack.c.l.b16 %v1405
  %v1438 = vunpack.c.l.b16 %v1406
  %v1439 = vunpack.c.l.b16 %v1407
  %v1440 = vunpack.c.l.b16 %v1408
  %v1441 = vpack.c.b16 %v1426, %v1425
  %v1442 = vpack.c.b16 %v1428, %v1427
  %v1443 = vpack.c.b16 %v1430, %v1429
  %v1444 = vpack.c.b16 %v1432, %v1431
  %v1445 = vpack.c.b16 %v1434, %v1433
  %v1446 = vpack.c.b16 %v1436, %v1435
  %v1447 = vpack.c.b16 %v1438, %v1437
  %v1448 = vpack.c.b16 %v1440, %v1439
  %1457 = vmatprep.subr.bf16.mxu0 0
  %1458 = vmatpush1.bf16.msra.mxu0 %v1441
  %1459 = vmatprep.subr.bf16.mxu0 0
  %1460 = vmatpush1.bf16.msra.mxu0 %v1442
  %1461 = vmatprep.subr.bf16.mxu0 0
  %1462 = vmatpush1.bf16.msra.mxu0 %v1443
  %1463 = vmatprep.subr.bf16.mxu0 0
  %1464 = vmatpush1.bf16.msra.mxu0 %v1444
  %1465 = vmatprep.subr.bf16.mxu0 0
  %1466 = vmatpush1.bf16.msra.mxu0 %v1445
  %1467 = vmatprep.subr.bf16.mxu0 0
  %1468 = vmatpush1.bf16.msra.mxu0 %v1446
  %1469 = vmatprep.subr.bf16.mxu0 0
  %1470 = vmatpush1.bf16.msra.mxu0 %v1447
  %1471 = vmatprep.subr.bf16.mxu0 0
  %1472 = vmatpush1.bf16.msra.mxu0 %v1448
  %1473 = vmatprep.subr.bf16.mxu0 0
  %1474 = vmatpush1.bf16.msra.mxu0 0
  %1475 = vmatprep.subr.bf16.mxu0 0
  %1476 = vmatpush1.bf16.msra.mxu0 0
  %1477 = vmatprep.subr.bf16.mxu0 0
  %1478 = vmatpush1.bf16.msra.mxu0 0
  %1479 = vmatprep.subr.bf16.mxu0 0
  %1480 = vmatpush1.bf16.msra.mxu0 0
  %1481 = vmatprep.subr.bf16.mxu0 0
  %1482 = vmatpush1.bf16.msra.mxu0 0
  %1483 = vmatprep.subr.bf16.mxu0 0
  %1484 = vmatpush1.bf16.msra.mxu0 0
  %1485 = vmatprep.subr.bf16.mxu0 0
  %1486 = vmatpush1.bf16.msra.mxu0 0
  %1487 = vmatprep.subr.bf16.mxu0 0
  %1488 = vmatpush1.bf16.msra.mxu0 0
  %1489 = vmatprep.mubr.bf16.mxu0 0
  %1490 = vmatmul.mubr.bf16.gmra.mrb[0].mxu0 %v1391
  %v1491 = vpop.f32.mrb[0].mxu0
  %v1492 = vadd.f32 0.0, %v1491
  %v1493 = vpop.f32.mrb[0].mxu0
  %v1494 = vpop.f32.mrb[0].mxu0
  %v1495 = vpop.f32.mrb[0].mxu0
  %1496 = vmatprep.mubr.bf16.mxu0 0
  %1497 = vmatmul.mubr.bf16.gmra.mrb[0].mxu0 %v1392
  %v1498 = vpop.f32.mrb[0].mxu0
  %v1499 = vadd.f32 0.0, %v1498
  %v1500 = vpop.f32.mrb[0].mxu0
  %v1501 = vpop.f32.mrb[0].mxu0
  %v1502 = vpop.f32.mrb[0].mxu0
  %1503 = vdwg.mxu0
  %v1504 = vadd.f32 %v1386, %v1492
  %v1505 = vadd.f32 %v1386, %v1499
  %v1506 = vld [vmem:[#allocation2 + $0x1] sm:$0xff]
  %v1507 = vld [vmem:[#allocation2 + $0x9] sm:$0xff]
  %v1508 = vld [vmem:[#allocation2 + $0x11] sm:$0xff]
  %v1509 = vld [vmem:[#allocation2 + $0x19] sm:$0xf]
  %v1510 = vpack.c.bf16 %v1507, %v1506
  %v1511 = vpack.c.bf16 %v1509, %v1508
  %s1512 = scalar_lea.vmem %s3, 64
  %v1513 = vld [vmem:[%s1512] sm:$0xf]
  %v1514 = vld [vmem:[%s1512 + $0x4] sm:$0xf]
  %v1515 = vld [vmem:[%s1512 + $0x8] sm:$0xf]
  %v1516 = vld [vmem:[%s1512 + $0xc] sm:$0xf]
  %v1517 = vld [vmem:[%s1512 + $0x10] sm:$0xf]
  %v1518 = vld [vmem:[%s1512 + $0x14] sm:$0xf]
  %v1519 = vld [vmem:[%s1512 + $0x18] sm:$0xf]
  %v1520 = vld [vmem:[%s1512 + $0x1c] sm:$0xf]
  %v1521 = vld [vmem:[%s1512 + $0x20] sm:$0xf]
  %v1522 = vld [vmem:[%s1512 + $0x24] sm:$0xf]
  %v1523 = vld [vmem:[%s1512 + $0x28] sm:$0xf]
  %v1524 = vld [vmem:[%s1512 + $0x2c] sm:$0xf]
  %v1525 = vld [vmem:[%s1512 + $0x30] sm:$0xf]
  %v1526 = vld [vmem:[%s1512 + $0x34] sm:$0xf]
  %v1527 = vld [vmem:[%s1512 + $0x38] sm:$0xf]
  %v1528 = vld [vmem:[%s1512 + $0x3c] sm:$0xf]
  %v1545 = vunpack.c.l.b16 %v1513
  %v1546 = vunpack.c.l.b16 %v1514
  %v1547 = vunpack.c.l.b16 %v1515
  %v1548 = vunpack.c.l.b16 %v1516
  %v1549 = vunpack.c.l.b16 %v1517
  %v1550 = vunpack.c.l.b16 %v1518
  %v1551 = vunpack.c.l.b16 %v1519
  %v1552 = vunpack.c.l.b16 %v1520
  %v1553 = vunpack.c.l.b16 %v1521
  %v1554 = vunpack.c.l.b16 %v1522
  %v1555 = vunpack.c.l.b16 %v1523
  %v1556 = vunpack.c.l.b16 %v1524
  %v1557 = vunpack.c.l.b16 %v1525
  %v1558 = vunpack.c.l.b16 %v1526
  %v1559 = vunpack.c.l.b16 %v1527
  %v1560 = vunpack.c.l.b16 %v1528
  %v1561 = vpack.c.b16 %v1546, %v1545
  %v1562 = vpack.c.b16 %v1548, %v1547
  %v1563 = vpack.c.b16 %v1550, %v1549
  %v1564 = vpack.c.b16 %v1552, %v1551
  %v1565 = vpack.c.b16 %v1554, %v1553
  %v1566 = vpack.c.b16 %v1556, %v1555
  %v1567 = vpack.c.b16 %v1558, %v1557
  %v1568 = vpack.c.b16 %v1560, %v1559
  %1577 = vmatprep.subr.bf16.mxu0 0
  %1578 = vmatpush1.bf16.msra.mxu0 %v1561
  %1579 = vmatprep.subr.bf16.mxu0 0
  %1580 = vmatpush1.bf16.msra.mxu0 %v1562
  %1581 = vmatprep.subr.bf16.mxu0 0
  %1582 = vmatpush1.bf16.msra.mxu0 %v1563
  %1583 = vmatprep.subr.bf16.mxu0 0
  %1584 = vmatpush1.bf16.msra.mxu0 %v1564
  %1585 = vmatprep.subr.bf16.mxu0 0
  %1586 = vmatpush1.bf16.msra.mxu0 %v1565
  %1587 = vmatprep.subr.bf16.mxu0 0
  %1588 = vmatpush1.bf16.msra.mxu0 %v1566
  %1589 = vmatprep.subr.bf16.mxu0 0
  %1590 = vmatpush1.bf16.msra.mxu0 %v1567
  %1591 = vmatprep.subr.bf16.mxu0 0
  %1592 = vmatpush1.bf16.msra.mxu0 %v1568
  %1593 = vmatprep.subr.bf16.mxu0 0
  %1594 = vmatpush1.bf16.msra.mxu0 0
  %1595 = vmatprep.subr.bf16.mxu0 0
  %1596 = vmatpush1.bf16.msra.mxu0 0
  %1597 = vmatprep.subr.bf16.mxu0 0
  %1598 = vmatpush1.bf16.msra.mxu0 0
  %1599 = vmatprep.subr.bf16.mxu0 0
  %1600 = vmatpush1.bf16.msra.mxu0 0
  %1601 = vmatprep.subr.bf16.mxu0 0
  %1602 = vmatpush1.bf16.msra.mxu0 0
  %1603 = vmatprep.subr.bf16.mxu0 0
  %1604 = vmatpush1.bf16.msra.mxu0 0
  %1605 = vmatprep.subr.bf16.mxu0 0
  %1606 = vmatpush1.bf16.msra.mxu0 0
  %1607 = vmatprep.subr.bf16.mxu0 0
  %1608 = vmatpush1.bf16.msra.mxu0 0
  %1609 = vmatprep.mubr.bf16.mxu0 0
  %1610 = vmatmul.mubr.bf16.gmra.mrb[0].mxu0 %v1510
  %v1611 = vpop.f32.mrb[0].mxu0
  %v1612 = vadd.f32 0.0, %v1611
  %v1613 = vpop.f32.mrb[0].mxu0
  %v1614 = vpop.f32.mrb[0].mxu0
  %v1615 = vpop.f32.mrb[0].mxu0
  %1616 = vmatprep.mubr.bf16.mxu0 0
  %1617 = vmatmul.mubr.bf16.gmra.mrb[0].mxu0 %v1511
  %v1618 = vpop.f32.mrb[0].mxu0
  %v1619 = vadd.f32 0.0, %v1618
  %v1620 = vpop.f32.mrb[0].mxu0
  %v1621 = vpop.f32.mrb[0].mxu0
  %v1622 = vpop.f32.mrb[0].mxu0
  %1623 = vdwg.mxu0
  %v1624 = vadd.f32 %v1504, %v1612
  %v1625 = vadd.f32 %v1505, %v1619
  %v1626 = vld [vmem:[#allocation2 + $0x2] sm:$0xff]
  %v1627 = vld [vmem:[#allocation2 + $0xa] sm:$0xff]
  %v1628 = vld [vmem:[#allocation2 + $0x12] sm:$0xff]
  %v1629 = vld [vmem:[#allocation2 + $0x1a] sm:$0xf]
  %v1630 = vpack.c.bf16 %v1627, %v1626
  %v1631 = vpack.c.bf16 %v1629, %v1628
  %s1632 = scalar_lea.vmem %s3, 128
  %v1633 = vld [vmem:[%s1632] sm:$0xf]
  %v1634 = vld [vmem:[%s1632 + $0x4] sm:$0xf]
  %v1635 = vld [vmem:[%s1632 + $0x8] sm:$0xf]
  %v1636 = vld [vmem:[%s1632 + $0xc] sm:$0xf]
  %v1637 = vld [vmem:[%s1632 + $0x10] sm:$0xf]
  %v1638 = vld [vmem:[%s1632 + $0x14] sm:$0xf]
  %v1639 = vld [vmem:[%s1632 + $0x18] sm:$0xf]
  %v1640 = vld [vmem:[%s1632 + $0x1c] sm:$0xf]
  %v1641 = vld [vmem:[%s1632 + $0x20] sm:$0xf]
  %v1642 = vld [vmem:[%s1632 + $0x24] sm:$0xf]
  %v1643 = vld [vmem:[%s1632 + $0x28] sm:$0xf]
  %v1644 = vld [vmem:[%s1632 + $0x2c] sm:$0xf]
  %v1645 = vld [vmem:[%s1632 + $0x30] sm:$0xf]
  %v1646 = vld [vmem:[%s1632 + $0x34] sm:$0xf]
  %v1647 = vld [vmem:[%s1632 + $0x38] sm:$0xf]
  %v1648 = vld [vmem:[%s1632 + $0x3c] sm:$0xf]
  %v1665 = vunpack.c.l.b16 %v1633
  %v1666 = vunpack.c.l.b16 %v1634
  %v1667 = vunpack.c.l.b16 %v1635
  %v1668 = vunpack.c.l.b16 %v1636
  %v1669 = vunpack.c.l.b16 %v1637
  %v1670 = vunpack.c.l.b16 %v1638
  %v1671 = vunpack.c.l.b16 %v1639
  %v1672 = vunpack.c.l.b16 %v1640
  %v1673 = vunpack.c.l.b16 %v1641
  %v1674 = vunpack.c.l.b16 %v1642
  %v1675 = vunpack.c.l.b16 %v1643
  %v1676 = vunpack.c.l.b16 %v1644
  %v1677 = vunpack.c.l.b16 %v1645
  %v1678 = vunpack.c.l.b16 %v1646
  %v1679 = vunpack.c.l.b16 %v1647
  %v1680 = vunpack.c.l.b16 %v1648
  %v1681 = vpack.c.b16 %v1666, %v1665
  %v1682 = vpack.c.b16 %v1668, %v1667
  %v1683 = vpack.c.b16 %v1670, %v1669
  %v1684 = vpack.c.b16 %v1672, %v1671
  %v1685 = vpack.c.b16 %v1674, %v1673
  %v1686 = vpack.c.b16 %v1676, %v1675
  %v1687 = vpack.c.b16 %v1678, %v1677
  %v1688 = vpack.c.b16 %v1680, %v1679
  %1697 = vmatprep.subr.bf16.mxu0 0
  %1698 = vmatpush1.bf16.msra.mxu0 %v1681
  %1699 = vmatprep.subr.bf16.mxu0 0
  %1700 = vmatpush1.bf16.msra.mxu0 %v1682
  %1701 = vmatprep.subr.bf16.mxu0 0
  %1702 = vmatpush1.bf16.msra.mxu0 %v1683
  %1703 = vmatprep.subr.bf16.mxu0 0
  %1704 = vmatpush1.bf16.msra.mxu0 %v1684
  %1705 = vmatprep.subr.bf16.mxu0 0
  %1706 = vmatpush1.bf16.msra.mxu0 %v1685
  %1707 = vmatprep.subr.bf16.mxu0 0
  %1708 = vmatpush1.bf16.msra.mxu0 %v1686
  %1709 = vmatprep.subr.bf16.mxu0 0
  %1710 = vmatpush1.bf16.msra.mxu0 %v1687
  %1711 = vmatprep.subr.bf16.mxu0 0
  %1712 = vmatpush1.bf16.msra.mxu0 %v1688
  %1713 = vmatprep.subr.bf16.mxu0 0
  %1714 = vmatpush1.bf16.msra.mxu0 0
  %1715 = vmatprep.subr.bf16.mxu0 0
  %1716 = vmatpush1.bf16.msra.mxu0 0
  %1717 = vmatprep.subr.bf16.mxu0 0
  %1718 = vmatpush1.bf16.msra.mxu0 0
  %1719 = vmatprep.subr.bf16.mxu0 0
  %1720 = vmatpush1.bf16.msra.mxu0 0
  %1721 = vmatprep.subr.bf16.mxu0 0
  %1722 = vmatpush1.bf16.msra.mxu0 0
  %1723 = vmatprep.subr.bf16.mxu0 0
  %1724 = vmatpush1.bf16.msra.mxu0 0
  %1725 = vmatprep.subr.bf16.mxu0 0
  %1726 = vmatpush1.bf16.msra.mxu0 0
  %1727 = vmatprep.subr.bf16.mxu0 0
  %1728 = vmatpush1.bf16.msra.mxu0 0
  %1729 = vmatprep.mubr.bf16.mxu0 0
  %1730 = vmatmul.mubr.bf16.gmra.mrb[0].mxu0 %v1630
  %v1731 = vpop.f32.mrb[0].mxu0
  %v1732 = vadd.f32 0.0, %v1731
  %v1733 = vpop.f32.mrb[0].mxu0
  %v1734 = vpop.f32.mrb[0].mxu0
  %v1735 = vpop.f32.mrb[0].mxu0
  %1736 = vmatprep.mubr.bf16.mxu0 0
  %1737 = vmatmul.mubr.bf16.gmra.mrb[0].mxu0 %v1631
  %v1738 = vpop.f32.mrb[0].mxu0
  %v1739 = vadd.f32 0.0, %v1738
  %v1740 = vpop.f32.mrb[0].mxu0
  %v1741 = vpop.f32.mrb[0].mxu0
  %v1742 = vpop.f32.mrb[0].mxu0
  %1743 = vdwg.mxu0
  %v1744 = vadd.f32 %v1624, %v1732
  %v1745 = vadd.f32 %v1625, %v1739
  %v1746 = vld [vmem:[#allocation2 + $0x3] sm:$0xff]
  %v1747 = vld [vmem:[#allocation2 + $0xb] sm:$0xff]
  %v1748 = vld [vmem:[#allocation2 + $0x13] sm:$0xff]
  %v1749 = vld [vmem:[#allocation2 + $0x1b] sm:$0xf]
  %v1750 = vpack.c.bf16 %v1747, %v1746
  %v1751 = vpack.c.bf16 %v1749, %v1748
  %s1752 = scalar_lea.vmem %s3, 192
  %v1753 = vld [vmem:[%s1752] sm:$0xf]
  %v1754 = vld [vmem:[%s1752 + $0x4] sm:$0xf]
  %v1755 = vld [vmem:[%s1752 + $0x8] sm:$0xf]
  %v1756 = vld [vmem:[%s1752 + $0xc] sm:$0xf]
  %v1757 = vld [vmem:[%s1752 + $0x10] sm:$0xf]
  %v1758 = vld [vmem:[%s1752 + $0x14] sm:$0xf]
  %v1759 = vld [vmem:[%s1752 + $0x18] sm:$0xf]
  %v1760 = vld [vmem:[%s1752 + $0x1c] sm:$0xf]
  %v1761 = vld [vmem:[%s1752 + $0x20] sm:$0xf]
  %v1762 = vld [vmem:[%s1752 + $0x24] sm:$0xf]
  %v1763 = vld [vmem:[%s1752 + $0x28] sm:$0xf]
  %v1764 = vld [vmem:[%s1752 + $0x2c] sm:$0xf]
  %v1765 = vld [vmem:[%s1752 + $0x30] sm:$0xf]
  %v1766 = vld [vmem:[%s1752 + $0x34] sm:$0xf]
  %v1767 = vld [vmem:[%s1752 + $0x38] sm:$0xf]
  %v1768 = vld [vmem:[%s1752 + $0x3c] sm:$0xf]
  %v1785 = vunpack.c.l.b16 %v1753
  %v1786 = vunpack.c.l.b16 %v1754
  %v1787 = vunpack.c.l.b16 %v1755
  %v1788 = vunpack.c.l.b16 %v1756
  %v1789 = vunpack.c.l.b16 %v1757
  %v1790 = vunpack.c.l.b16 %v1758
  %v1791 = vunpack.c.l.b16 %v1759
  %v1792 = vunpack.c.l.b16 %v1760
  %v1793 = vunpack.c.l.b16 %v1761
  %v1794 = vunpack.c.l.b16 %v1762
  %v1795 = vunpack.c.l.b16 %v1763
  %v1796 = vunpack.c.l.b16 %v1764
  %v1797 = vunpack.c.l.b16 %v1765
  %v1798 = vunpack.c.l.b16 %v1766
  %v1799 = vunpack.c.l.b16 %v1767
  %v1800 = vunpack.c.l.b16 %v1768
  %v1801 = vpack.c.b16 %v1786, %v1785
  %v1802 = vpack.c.b16 %v1788, %v1787
  %v1803 = vpack.c.b16 %v1790, %v1789
  %v1804 = vpack.c.b16 %v1792, %v1791
  %v1805 = vpack.c.b16 %v1794, %v1793
  %v1806 = vpack.c.b16 %v1796, %v1795
  %v1807 = vpack.c.b16 %v1798, %v1797
  %v1808 = vpack.c.b16 %v1800, %v1799
  %1817 = vmatprep.subr.bf16.mxu0 0
  %1818 = vmatpush1.bf16.msra.mxu0 %v1801
  %1819 = vmatprep.subr.bf16.mxu0 0
  %1820 = vmatpush1.bf16.msra.mxu0 %v1802
  %1821 = vmatprep.subr.bf16.mxu0 0
  %1822 = vmatpush1.bf16.msra.mxu0 %v1803
  %1823 = vmatprep.subr.bf16.mxu0 0
  %1824 = vmatpush1.bf16.msra.mxu0 %v1804
  %1825 = vmatprep.subr.bf16.mxu0 0
  %1826 = vmatpush1.bf16.msra.mxu0 %v1805
  %1827 = vmatprep.subr.bf16.mxu0 0
  %1828 = vmatpush1.bf16.msra.mxu0 %v1806
  %1829 = vmatprep.subr.bf16.mxu0 0
  %1830 = vmatpush1.bf16.msra.mxu0 %v1807
  %1831 = vmatprep.subr.bf16.mxu0 0
  %1832 = vmatpush1.bf16.msra.mxu0 %v1808
  %1833 = vmatprep.subr.bf16.mxu0 0
  %1834 = vmatpush1.bf16.msra.mxu0 0
  %1835 = vmatprep.subr.bf16.mxu0 0
  %1836 = vmatpush1.bf16.msra.mxu0 0
  %1837 = vmatprep.subr.bf16.mxu0 0
  %1838 = vmatpush1.bf16.msra.mxu0 0
  %1839 = vmatprep.subr.bf16.mxu0 0
  %1840 = vmatpush1.bf16.msra.mxu0 0
  %1841 = vmatprep.subr.bf16.mxu0 0
  %1842 = vmatpush1.bf16.msra.mxu0 0
  %1843 = vmatprep.subr.bf16.mxu0 0
  %1844 = vmatpush1.bf16.msra.mxu0 0
  %1845 = vmatprep.subr.bf16.mxu0 0
  %1846 = vmatpush1.bf16.msra.mxu0 0
  %1847 = vmatprep.subr.bf16.mxu0 0
  %1848 = vmatpush1.bf16.msra.mxu0 0
  %1849 = vmatprep.mubr.bf16.mxu0 0
  %1850 = vmatmul.mubr.bf16.gmra.mrb[0].mxu0 %v1750
  %v1851 = vpop.f32.mrb[0].mxu0
  %v1852 = vadd.f32 0.0, %v1851
  %v1853 = vpop.f32.mrb[0].mxu0
  %v1854 = vpop.f32.mrb[0].mxu0
  %v1855 = vpop.f32.mrb[0].mxu0
  %1856 = vmatprep.mubr.bf16.mxu0 0
  %1857 = vmatmul.mubr.bf16.gmra.mrb[0].mxu0 %v1751
  %v1858 = vpop.f32.mrb[0].mxu0
  %v1859 = vadd.f32 0.0, %v1858
  %v1860 = vpop.f32.mrb[0].mxu0
  %v1861 = vpop.f32.mrb[0].mxu0
  %v1862 = vpop.f32.mrb[0].mxu0
  %1863 = vdwg.mxu0
  %v1864 = vadd.f32 %v1744, %v1852
  %v1865 = vadd.f32 %v1745, %v1859
  %v1866 = vld [vmem:[#allocation2 + $0x4] sm:$0xff]
  %v1867 = vld [vmem:[#allocation2 + $0xc] sm:$0xff]
  %v1868 = vld [vmem:[#allocation2 + $0x14] sm:$0xff]
  %v1869 = vld [vmem:[#allocation2 + $0x1c] sm:$0xf]
  %v1870 = vpack.c.bf16 %v1867, %v1866
  %v1871 = vpack.c.bf16 %v1869, %v1868
  %s1872 = scalar_lea.vmem %s3, 256
  %v1873 = vld [vmem:[%s1872] sm:$0xf]
  %v1874 = vld [vmem:[%s1872 + $0x4] sm:$0xf]
  %v1875 = vld [vmem:[%s1872 + $0x8] sm:$0xf]
  %v1876 = vld [vmem:[%s1872 + $0xc] sm:$0xf]
  %v1877 = vld [vmem:[%s1872 + $0x10] sm:$0xf]
  %v1878 = vld [vmem:[%s1872 + $0x14] sm:$0xf]
  %v1879 = vld [vmem:[%s1872 + $0x18] sm:$0xf]
  %v1880 = vld [vmem:[%s1872 + $0x1c] sm:$0xf]
  %v1881 = vld [vmem:[%s1872 + $0x20] sm:$0xf]
  %v1882 = vld [vmem:[%s1872 + $0x24] sm:$0xf]
  %v1883 = vld [vmem:[%s1872 + $0x28] sm:$0xf]
  %v1884 = vld [vmem:[%s1872 + $0x2c] sm:$0xf]
  %v1885 = vld [vmem:[%s1872 + $0x30] sm:$0xf]
  %v1886 = vld [vmem:[%s1872 + $0x34] sm:$0xf]
  %v1887 = vld [vmem:[%s1872 + $0x38] sm:$0xf]
  %v1888 = vld [vmem:[%s1872 + $0x3c] sm:$0xf]
  %v1905 = vunpack.c.l.b16 %v1873
  %v1906 = vunpack.c.l.b16 %v1874
  %v1907 = vunpack.c.l.b16 %v1875
  %v1908 = vunpack.c.l.b16 %v1876
  %v1909 = vunpack.c.l.b16 %v1877
  %v1910 = vunpack.c.l.b16 %v1878
  %v1911 = vunpack.c.l.b16 %v1879
  %v1912 = vunpack.c.l.b16 %v1880
  %v1913 = vunpack.c.l.b16 %v1881
  %v1914 = vunpack.c.l.b16 %v1882
  %v1915 = vunpack.c.l.b16 %v1883
  %v1916 = vunpack.c.l.b16 %v1884
  %v1917 = vunpack.c.l.b16 %v1885
  %v1918 = vunpack.c.l.b16 %v1886
  %v1919 = vunpack.c.l.b16 %v1887
  %v1920 = vunpack.c.l.b16 %v1888
  %v1921 = vpack.c.b16 %v1906, %v1905
  %v1922 = vpack.c.b16 %v1908, %v1907
  %v1923 = vpack.c.b16 %v1910, %v1909
  %v1924 = vpack.c.b16 %v1912, %v1911
  %v1925 = vpack.c.b16 %v1914, %v1913
  %v1926 = vpack.c.b16 %v1916, %v1915
  %v1927 = vpack.c.b16 %v1918, %v1917
  %v1928 = vpack.c.b16 %v1920, %v1919
  %1937 = vmatprep.subr.bf16.mxu0 0
  %1938 = vmatpush1.bf16.msra.mxu0 %v1921
  %1939 = vmatprep.subr.bf16.mxu0 0
  %1940 = vmatpush1.bf16.msra.mxu0 %v1922
  %1941 = vmatprep.subr.bf16.mxu0 0
  %1942 = vmatpush1.bf16.msra.mxu0 %v1923
  %1943 = vmatprep.subr.bf16.mxu0 0
  %1944 = vmatpush1.bf16.msra.mxu0 %v1924
  %1945 = vmatprep.subr.bf16.mxu0 0
  %1946 = vmatpush1.bf16.msra.mxu0 %v1925
  %1947 = vmatprep.subr.bf16.mxu0 0
  %1948 = vmatpush1.bf16.msra.mxu0 %v1926
  %1949 = vmatprep.subr.bf16.mxu0 0
  %1950 = vmatpush1.bf16.msra.mxu0 %v1927
  %1951 = vmatprep.subr.bf16.mxu0 0
  %1952 = vmatpush1.bf16.msra.mxu0 %v1928
  %1953 = vmatprep.subr.bf16.mxu0 0
  %1954 = vmatpush1.bf16.msra.mxu0 0
  %1955 = vmatprep.subr.bf16.mxu0 0
  %1956 = vmatpush1.bf16.msra.mxu0 0
  %1957 = vmatprep.subr.bf16.mxu0 0
  %1958 = vmatpush1.bf16.msra.mxu0 0
  %1959 = vmatprep.subr.bf16.mxu0 0
  %1960 = vmatpush1.bf16.msra.mxu0 0
  %1961 = vmatprep.subr.bf16.mxu0 0
  %1962 = vmatpush1.bf16.msra.mxu0 0
  %1963 = vmatprep.subr.bf16.mxu0 0
  %1964 = vmatpush1.bf16.msra.mxu0 0
  %1965 = vmatprep.subr.bf16.mxu0 0
  %1966 = vmatpush1.bf16.msra.mxu0 0
  %1967 = vmatprep.subr.bf16.mxu0 0
  %1968 = vmatpush1.bf16.msra.mxu0 0
  %1969 = vmatprep.mubr.bf16.mxu0 0
  %1970 = vmatmul.mubr.bf16.gmra.mrb[0].mxu0 %v1870
  %v1971 = vpop.f32.mrb[0].mxu0
  %v1972 = vadd.f32 0.0, %v1971
  %v1973 = vpop.f32.mrb[0].mxu0
  %v1974 = vpop.f32.mrb[0].mxu0
  %v1975 = vpop.f32.mrb[0].mxu0
  %1976 = vmatprep.mubr.bf16.mxu0 0
  %1977 = vmatmul.mubr.bf16.gmra.mrb[0].mxu0 %v1871
  %v1978 = vpop.f32.mrb[0].mxu0
  %v1979 = vadd.f32 0.0, %v1978
  %v1980 = vpop.f32.mrb[0].mxu0
  %v1981 = vpop.f32.mrb[0].mxu0
  %v1982 = vpop.f32.mrb[0].mxu0
  %1983 = vdwg.mxu0
  %v1984 = vadd.f32 %v1864, %v1972
  %v1985 = vadd.f32 %v1865, %v1979
  %v1986 = vmax.f32 %v1984, 0.0
  %v1987 = vmax.f32 %v1985, 0.0
  %1988 = vst [vmem:[%s5] sm:$0xff] %v1986
  %s1989 = scalar_lea.vmem %s5, 8
  %1990 = vst [vmem:[%s1989] sm:$0xff] %v1987
  // Predicated region
  $region22: #{conv1dlstm_forward.2} parent=0 // pred_check
    _
  $region23: #{conv1dlstm_forward.2} parent=0 // pred_check_branch
    %1992 = sbr.rel (0) target = $region25
  $region24: #{conv1dlstm_forward.2} parent=0 // pred_region
    _
  $region25: #{conv1dlstm_forward.2} parent=0 // pred_fallthru
    _
  // Predicated region
  $region26: #{conv1dlstm_forward.2} parent=0 // pred_check
    _
  $region27: #{conv1dlstm_forward.2} parent=0 // pred_check_branch
    %1994 = sbr.rel (0) target = $region29
  $region28: #{conv1dlstm_forward.2} parent=0 // pred_region
    _
  $region29: #{conv1dlstm_forward.2} parent=0 // pred_fallthru
    _

</llo_original>
